<compile_context>
chip_gen: v6e
topology: v6e:2x2x1
jax: 0.10.0
libtpu: 0.0.40
codegen_flags: <defaults>
</compile_context>

<pallas_src>
import functools
import math

import jax
import jax.numpy as jnp
from jax import lax
from jax.experimental import pallas as pl
from jax.experimental.pallas import tpu as pltpu


# Set to jnp.bfloat16 to double MXU throughput / halve VMEM traffic on v6e/v7x
# (accumulation stays f32).  Kept f32 here so numerics match the PyTorch module.
MXU_INPUT_DTYPE = jnp.float32

# Tile caps: 256-wide M/N and 512-deep K suit v6e/v7x's 256x256 MXU and fit the
# v7x 64 MiB VMEM budget (v5e would prefer 128-wide M/N but 256 still fits).
_TM_CAP, _TN_CAP, _TK_CAP = 256, 256, 512
_VMEM_LIMIT = 48 * 1024 * 1024  # leave headroom below v7x's 64 MiB physical VMEM


def _pick_tile(dim, cap, align=128):
    """Largest tile <= cap that exactly divides `dim` (prefer lane-aligned)."""
    if dim <= cap:
        return dim
    for t in range(cap, align - 1, -align):
        if dim % t == 0:
            return t
    for t in range(cap, 0, -1):          # fallback: any exact divisor
        if dim % t == 0:
            return t
    return dim


# ----------------------------- in-kernel helpers -----------------------------
def _erf(x):
    # Abramowitz & Stegun 7.1.26 (abs err < 1.5e-7) -> matches torch.nn.GELU()
    # (exact/erf form) to ~1e-7; only uses exp so it lowers cleanly in Mosaic.
    a1, a2, a3, a4, a5 = 0.254829592, -0.284496736, 1.421413741, -1.453152027, 1.061405429
    p = 0.3275911
    s = jnp.where(x >= 0.0, 1.0, -1.0)
    ax = jnp.abs(x)
    t = 1.0 / (1.0 + p * ax)
    poly = ((((a5 * t + a4) * t + a3) * t + a2) * t + a1) * t
    return s * (1.0 - poly * jnp.exp(-ax * ax))


def _gelu(x):
    return 0.5 * x * (1.0 + _erf(x * (1.0 / math.sqrt(2.0))))


def _act(y, act):
    if act == "relu":
        return jnp.maximum(y, 0.0)
    if act == "gelu":
        return _gelu(y)
    return y


def _mxu_dot(x, w):
    return jnp.dot(x.astype(MXU_INPUT_DTYPE), w.astype(MXU_INPUT_DTYPE),
                   preferred_element_type=jnp.float32)


# ------------------------- tiled linear (+bias, +act) -------------------------
def _linear_kernel(x_ref, w_ref, b_ref, o_ref, acc_ref, *, act):
    k = pl.program_id(2)

    @pl.when(k == 0)
    def _init():
        acc_ref[...] = jnp.zeros_like(acc_ref)

    acc_ref[...] += _mxu_dot(x_ref[...], w_ref[...])

    @pl.when(k == pl.num_programs(2) - 1)
    def _finish():
        y = _act(acc_ref[...] + b_ref[...], act)
        o_ref[...] = y.astype(o_ref.dtype)


def pallas_linear(x, w, b, act="none"):
    M, K = x.shape
    N = w.shape[1]
    tm, tn, tk = _pick_tile(M, _TM_CAP), _pick_tile(N, _TN_CAP), _pick_tile(K, _TK_CAP)
    grid = (M // tm, N // tn, K // tk)
    return pl.pallas_call(
        functools.partial(_linear_kernel, act=act),
        out_shape=jax.ShapeDtypeStruct((M, N), x.dtype),
        grid=grid,
        in_specs=[
            pl.BlockSpec((tm, tk), lambda i, j, k: (i, k)),
            pl.BlockSpec((tk, tn), lambda i, j, k: (k, j)),
            pl.BlockSpec((1, tn), lambda i, j, k: (0, j)),
        ],
        out_specs=pl.BlockSpec((tm, tn), lambda i, j, k: (i, j)),
        scratch_shapes=[pltpu.VMEM((tm, tn), jnp.float32)],
        compiler_params=pltpu.CompilerParams(
            dimension_semantics=("parallel", "parallel", "arbitrary"),
            vmem_limit_bytes=_VMEM_LIMIT,
        ),
    )(x, w, b)


# ------------- tiled linear with fused bias/act/residual/LayerNorm ------------
def _linear_ln_kernel(*refs, act, eps, has_residual):
    if has_residual:
        x_ref, w_ref, b_ref, res_ref, g_ref, beta_ref, o_ref, acc_ref = refs
    else:
        x_ref, w_ref, b_ref, g_ref, beta_ref, o_ref, acc_ref = refs
        res_ref = None
    k = pl.program_id(1)

    @pl.when(k == 0)
    def _init():
        acc_ref[...] = jnp.zeros_like(acc_ref)

    acc_ref[...] += _mxu_dot(x_ref[...], w_ref[...])

    @pl.when(k == pl.num_programs(1) - 1)
    def _finish():
        y = _act(acc_ref[...] + b_ref[...], act)
        if res_ref is not None:
            y = y + res_ref[...]
        mu = jnp.mean(y, axis=-1, keepdims=True)
        yc = y - mu
        var = jnp.mean(yc * yc, axis=-1, keepdims=True)
        inv = lax.rsqrt(var + eps)
        o_ref[...] = (yc * inv * g_ref[...] + beta_ref[...]).astype(o_ref.dtype)


def pallas_linear_ln(x, w, b, gamma, beta, residual=None, act="none", eps=1e-5):
    """y = LayerNorm(act(x @ w + b) [+ residual]); full Dout kept per tile so the
    LN reduction stays local to the epilogue (fine for d_model-sized outputs)."""
    M, K = x.shape
    N = w.shape[1]
    tm, tk = _pick_tile(M, _TM_CAP), _pick_tile(K, _TK_CAP)
    grid = (M // tm, K // tk)
    has_res = residual is not None

    in_specs = [
        pl.BlockSpec((tm, tk), lambda i, k: (i, k)),
        pl.BlockSpec((tk, N), lambda i, k: (k, 0)),
        pl.BlockSpec((1, N), lambda i, k: (0, 0)),
    ]
    args = [x, w, b]
    if has_res:
        in_specs.append(pl.BlockSpec((tm, N), lambda i, k: (i, 0)))
        args.append(residual)
    in_specs += [pl.BlockSpec((1, N), lambda i, k: (0, 0)),
                 pl.BlockSpec((1, N), lambda i, k: (0, 0))]
    args += [gamma, beta]

    return pl.pallas_call(
        functools.partial(_linear_ln_kernel, act=act, eps=eps, has_residual=has_res),
        out_shape=jax.ShapeDtypeStruct((M, N), x.dtype),
        grid=grid,
        in_specs=in_specs,
        out_specs=pl.BlockSpec((tm, N), lambda i, k: (i, 0)),
        scratch_shapes=[pltpu.VMEM((tm, N), jnp.float32)],
        compiler_params=pltpu.CompilerParams(
            dimension_semantics=("parallel", "arbitrary"),
            vmem_limit_bytes=_VMEM_LIMIT,
        ),
    )(*args)


# ------------------------ multi-head attention (fused) ------------------------
def _attn_kernel(qkv_ref, o_ref, *, n_heads, d_head, scale):
    D = n_heads * d_head
    qkv = qkv_ref[0]                                   # (S, 3*D) packed [q|k|v]
    for h in range(n_heads):                           # static unroll over heads
        q = qkv[:, h * d_head:(h + 1) * d_head]
        k = qkv[:, D + h * d_head:D + (h + 1) * d_head]
        v = qkv[:, 2 * D + h * d_head:2 * D + (h + 1) * d_head]
        # contract last dims of q and k directly (no .T / XLU transpose)
        s = lax.dot_general(q.astype(MXU_INPUT_DTYPE), k.astype(MXU_INPUT_DTYPE),
                            (((1,), (1,)), ((), ())),
                            preferred_element_type=jnp.float32) * scale
        m = jnp.max(s, axis=-1, keepdims=True)
        p = jnp.exp(s - m)
        denom = jnp.sum(p, axis=-1, keepdims=True)
        p = p * pl.reciprocal(denom, approx=True)      # divide on the EUP slot
        out_h = jnp.dot(p.astype(MXU_INPUT_DTYPE), v.astype(MXU_INPUT_DTYPE),
                        preferred_element_type=jnp.float32)
        o_ref[0, :, h * d_head:(h + 1) * d_head] = out_h.astype(o_ref.dtype)
    # TODO(synk): for long sequences, tile the KV axis (flash-style online
    # softmax) instead of materializing the full (S, S) score matrix.


def pallas_mha(qkv, n_heads):
    # qkv: (B, S, 3*D); all H heads of one batch handled per grid step so the
    # HBM writeback tile is the full lane-dense (1, S, D) block.
    B, S, threeD = qkv.shape
    D = threeD // 3
    d_head = D // n_heads
    return pl.pallas_call(
        functools.partial(_attn_kernel, n_heads=n_heads, d_head=d_head,
                          scale=1.0 / math.sqrt(d_head)),
        out_shape=jax.ShapeDtypeStruct((B, S, D), qkv.dtype),
        grid=(B,),
        in_specs=[pl.BlockSpec((1, S, threeD), lambda b: (b, 0, 0))],
        out_specs=pl.BlockSpec((1, S, D), lambda b: (b, 0, 0)),
        compiler_params=pltpu.CompilerParams(
            dimension_semantics=("parallel",),
            vmem_limit_bytes=_VMEM_LIMIT,
        ),
    )(qkv)


# ------------------------------ parameter setup -------------------------------
def sinusoidal_pe(max_len, d_model):
    pos = jnp.arange(max_len, dtype=jnp.float32)[:, None]
    i = jnp.arange(0, d_model, 2, dtype=jnp.float32)
    div = jnp.exp(-i * (math.log(10000.0) / d_model))
    pe = jnp.zeros((max_len, d_model), jnp.float32)
    pe = pe.at[:, 0::2].set(jnp.sin(pos * div))
    pe = pe.at[:, 1::2].set(jnp.cos(pos * div))
    return pe


def init_params(key, cfg):
    def nrm(key, shape, scale=0.02):
        return scale * jax.random.normal(key, shape, jnp.float32)

    D, V, FF, L = cfg["d_model"], cfg["vocab_size"], cfg["feed_forward"], cfg["n_layers"]
    keys = jax.random.split(key, 4 + 6 * L)
    ki = iter(keys)

    tok_emb = nrm(next(ki), (V, D))
    tok_emb = tok_emb.at[cfg["pad_idx"]].set(0.0)  # nn.Embedding zeroes the pad row

    layers = []
    for _ in range(L):
        layers.append(dict(
            # Q/K/V projections fused into one (D, 3D) weight / (1, 3D) bias
            w_qkv=jnp.concatenate([nrm(next(ki), (D, D)) for _ in range(3)], axis=1),
            b_qkv=jnp.zeros((1, 3 * D)),
            wo=nrm(next(ki), (D, D)), bo=jnp.zeros((1, D)),
            ln1_g=jnp.ones((1, D)), ln1_b=jnp.zeros((1, D)),
            w1=nrm(next(ki), (D, FF)), b1=jnp.zeros((1, FF)),
            w2=nrm(next(ki), (FF, D)), b2=jnp.zeros((1, D)),
            ln2_g=jnp.ones((1, D)), ln2_b=jnp.zeros((1, D)),
        ))

    return dict(
        tok_emb=tok_emb,
        pe=sinusoidal_pe(cfg["window_size"], D),
        layers=layers,
        lc_w=nrm(next(ki), (D, D)), lc_b=jnp.zeros((1, D)),
        norm_g=jnp.ones((1, D)), norm_b=jnp.zeros((1, D)),
        out_w=nrm(next(ki), (D, V)), out_b=jnp.zeros((1, V)),
    )


# --------------------------------- forward ------------------------------------
def bert_forward(params, tokens, cfg):
    B, S = tokens.shape
    D = cfg["d_model"]
    H = cfg["n_heads"]

    # Embedding gather + positional-encoding add stay in plain JAX so XLA fuses
    # them (no standalone memory-bound pallas_call).
    # TODO(synk): segment / strain embeddings omitted (forward is called with
    # None); dropout is identity in eval; scale_grad_by_freq is training-only.
    x = jnp.take(params["tok_emb"], tokens, axis=0) + params["pe"][None, :S, :]

    x2 = x.reshape(B * S, D)
    for layer in params["layers"]:
        # --- self attention (post-LN encoder layer, relu FFN) ---
        qkv = pallas_linear(x2, layer["w_qkv"], layer["b_qkv"])          # (B*S, 3D)
        a = pallas_mha(qkv.reshape(B, S, 3 * D), H).reshape(B * S, D)
        # TODO(synk): no attention padding mask — original forward passes none.
        # out-proj + bias + residual + LayerNorm fused into one epilogue
        x2 = pallas_linear_ln(a, layer["wo"], layer["bo"],
                              layer["ln1_g"], layer["ln1_b"], residual=x2)
        # --- feed forward ---
        f = pallas_linear(x2, layer["w1"], layer["b1"], act="relu")
        x2 = pallas_linear_ln(f, layer["w2"], layer["b2"],
                              layer["ln2_g"], layer["ln2_b"], residual=x2)

    src = x2.reshape(B, S, D)

    # logits_te = out(norm(gelu(lc(src)))) — lc + GELU + LayerNorm fused,
    # no-residual path (no zeros tensor); vocab projection tiled over V.
    h = pallas_linear_ln(x2, params["lc_w"], params["lc_b"],
                         params["norm_g"], params["norm_b"], act="gelu")
    logits = pallas_linear(h, params["out_w"], params["out_b"])
    logits = logits.reshape(B, S, cfg["vocab_size"])
    return logits, src


# ----------------------------------- main --------------------------------------
if __name__ == "__main__":
    cfg = dict(vocab_size=64, d_model=32, n_layers=2, n_heads=4,
               feed_forward=64, window_size=8, pad_idx=1)
    B, S = 2, cfg["window_size"]

    key = jax.random.PRNGKey(0)
    kp, kt = jax.random.split(key)
    params = init_params(kp, cfg)
    tokens = jax.random.randint(kt, (B, S), 0, cfg["vocab_size"], dtype=jnp.int32)

    fwd = jax.jit(functools.partial(bert_forward, cfg=cfg))
    logits_te, src = fwd(params, tokens)
    jax.block_until_ready((logits_te, src))

    assert logits_te.shape == (B, S, cfg["vocab_size"])
    assert src.shape == (B, S, cfg["d_model"])
    assert jnp.all(jnp.isfinite(logits_te)) and jnp.all(jnp.isfinite(src))
    print("KERNEL_OK")
</pallas_src>

<mosaic_0001>
module attributes {stable_mosaic.version = 11 : i64} {
  func.func @_linear_kernel(%arg0: i32, %arg1: i32, %arg2: i32, %arg3: memref<16x32xf32, #tpu.memory_space<vmem>>, %arg4: memref<32x96xf32, #tpu.memory_space<vmem>>, %arg5: memref<1x96xf32, #tpu.memory_space<vmem>>, %arg6: memref<16x96xf32, #tpu.memory_space<vmem>>, %arg7: memref<16x96xf32, #tpu.memory_space<vmem>>) attributes {dimension_semantics = [#tpu.dimension_semantics<parallel>, #tpu.dimension_semantics<parallel>, #tpu.dimension_semantics<arbitrary>], iteration_bounds = array<i64: 1, 1, 1>, scalar_prefetch = 0 : i64, scratch_operands = 1 : i64, tpu.core_type = #tpu.core_type<tc>, window_params = [{transform_indices = @transform_0, window_bounds = array<i64: 16, 32>}, {transform_indices = @transform_1, window_bounds = array<i64: 32, 96>}, {transform_indices = @transform_2, window_bounds = array<i64: 1, 96>}, {transform_indices = @transform_3, window_bounds = array<i64: 16, 96>}]} {
    %c0_i32 = arith.constant 0 : i32
    %0 = arith.cmpi eq, %arg2, %c0_i32 : i32
    %1 = arith.extui %0 : i1 to i32
    %c0_i32_0 = arith.constant 0 : i32
    %2 = arith.cmpi ne, %1, %c0_i32_0 : i32
    scf.if %2 {
      %cst_10 = arith.constant 0.000000e+00 : f32
      %12 = vector.broadcast %cst_10 : f32 to vector<16x96xf32>
      %c0_11 = arith.constant 0 : index
      %c0_12 = arith.constant 0 : index
      %13 = vector.load %arg7[%c0_11, %c0_12] : memref<16x96xf32, #tpu.memory_space<vmem>>, vector<16x96xf32>
      tpu.vector_store %arg7[%c0_11, %c0_12], %12 {strides = array<i32>} : memref<16x96xf32, #tpu.memory_space<vmem>>, vector<16x96xf32>,
    } else {
    }
    %c0 = arith.constant 0 : index
    %c0_1 = arith.constant 0 : index
    %3 = vector.load %arg7[%c0, %c0_1] : memref<16x96xf32, #tpu.memory_space<vmem>>, vector<16x96xf32>
    %c0_2 = arith.constant 0 : index
    %c0_3 = arith.constant 0 : index
    %4 = vector.load %arg3[%c0_2, %c0_3] : memref<16x32xf32, #tpu.memory_space<vmem>>, vector<16x32xf32>
    %c0_4 = arith.constant 0 : index
    %c0_5 = arith.constant 0 : index
    %5 = vector.load %arg4[%c0_4, %c0_5] : memref<32x96xf32, #tpu.memory_space<vmem>>, vector<32x96xf32>
    %cst = arith.constant dense<0.000000e+00> : vector<16x96xf32>
    %6 = tpu.matmul %4, %5, %cst {dimension_numbers = #tpu.dot_dimension_numbers<[1], [0], [0], [1], [0, 0, 1, 1], [], []>} : vector<16x32xf32>, vector<32x96xf32>, vector<16x96xf32> -> vector<16x96xf32>
    %7 = arith.addf %3, %6 : vector<16x96xf32>
    %c0_6 = arith.constant 0 : index
    %c0_7 = arith.constant 0 : index
    %8 = vector.load %arg7[%c0_6, %c0_7] : memref<16x96xf32, #tpu.memory_space<vmem>>, vector<16x96xf32>
    tpu.vector_store %arg7[%c0_6, %c0_7], %7 {strides = array<i32>} : memref<16x96xf32, #tpu.memory_space<vmem>>, vector<16x96xf32>,
    %c0_i32_8 = arith.constant 0 : i32
    %9 = arith.cmpi eq, %arg2, %c0_i32_8 : i32
    %10 = arith.extui %9 : i1 to i32
    %c0_i32_9 = arith.constant 0 : i32
    %11 = arith.cmpi ne, %10, %c0_i32_9 : i32
    scf.if %11 {
      %c0_10 = arith.constant 0 : index
      %c0_11 = arith.constant 0 : index
      %12 = vector.load %arg7[%c0_10, %c0_11] : memref<16x96xf32, #tpu.memory_space<vmem>>, vector<16x96xf32>
      %c0_12 = arith.constant 0 : index
      %c0_13 = arith.constant 0 : index
      %13 = vector.load %arg5[%c0_12, %c0_13] : memref<1x96xf32, #tpu.memory_space<vmem>>, vector<1x96xf32>
      %14 = vector.broadcast %13 : vector<1x96xf32> to vector<16x96xf32>
      %15 = arith.addf %12, %14 : vector<16x96xf32>
      %c0_14 = arith.constant 0 : index
      %c0_15 = arith.constant 0 : index
      %16 = vector.load %arg6[%c0_14, %c0_15] : memref<16x96xf32, #tpu.memory_space<vmem>>, vector<16x96xf32>
      tpu.vector_store %arg6[%c0_14, %c0_15], %15 {strides = array<i32>} : memref<16x96xf32, #tpu.memory_space<vmem>>, vector<16x96xf32>,
    } else {
    }
    return
  }
  func.func @transform_0(%arg0: i32, %arg1: i32, %arg2: i32) -> (i32, i32) {
    %c0_i32 = arith.constant 0 : i32
    return %arg0, %arg2 : i32, i32
  }
  func.func @transform_1(%arg0: i32, %arg1: i32, %arg2: i32) -> (i32, i32) {
    %c0_i32 = arith.constant 0 : i32
    return %arg2, %arg1 : i32, i32
  }
  func.func @transform_2(%arg0: i32, %arg1: i32, %arg2: i32) -> (i32, i32) {
    %c0_i32 = arith.constant 0 : i32
    %c0_i32_0 = arith.constant 0 : i32
    return %c0_i32, %arg1 : i32, i32
  }
  func.func @transform_3(%arg0: i32, %arg1: i32, %arg2: i32) -> (i32, i32) {
    %c0_i32 = arith.constant 0 : i32
    return %arg0, %arg1 : i32, i32
  }
}

module attributes {stable_mosaic.version = 11 : i64} {
  func.func @_linear_kernel(%arg0: i32, %arg1: i32, %arg2: i32, %arg3: memref<16x32xf32, #tpu.memory_space<vmem>>, %arg4: memref<32x64xf32, #tpu.memory_space<vmem>>, %arg5: memref<1x64xf32, #tpu.memory_space<vmem>>, %arg6: memref<16x64xf32, #tpu.memory_space<vmem>>, %arg7: memref<16x64xf32, #tpu.memory_space<vmem>>) attributes {dimension_semantics = [#tpu.dimension_semantics<parallel>, #tpu.dimension_semantics<parallel>, #tpu.dimension_semantics<arbitrary>], iteration_bounds = array<i64: 1, 1, 1>, scalar_prefetch = 0 : i64, scratch_operands = 1 : i64, tpu.core_type = #tpu.core_type<tc>, window_params = [{transform_indices = @transform_0, window_bounds = array<i64: 16, 32>}, {transform_indices = @transform_1, window_bounds = array<i64: 32, 64>}, {transform_indices = @transform_2, window_bounds = array<i64: 1, 64>}, {transform_indices = @transform_3, window_bounds = array<i64: 16, 64>}]} {
    %c0_i32 = arith.constant 0 : i32
    %0 = arith.cmpi eq, %arg2, %c0_i32 : i32
    %1 = arith.extui %0 : i1 to i32
    %c0_i32_0 = arith.constant 0 : i32
    %2 = arith.cmpi ne, %1, %c0_i32_0 : i32
    scf.if %2 {
      %cst_10 = arith.constant 0.000000e+00 : f32
      %12 = vector.broadcast %cst_10 : f32 to vector<16x64xf32>
      %c0_11 = arith.constant 0 : index
      %c0_12 = arith.constant 0 : index
      %13 = vector.load %arg7[%c0_11, %c0_12] : memref<16x64xf32, #tpu.memory_space<vmem>>, vector<16x64xf32>
      tpu.vector_store %arg7[%c0_11, %c0_12], %12 {strides = array<i32>} : memref<16x64xf32, #tpu.memory_space<vmem>>, vector<16x64xf32>,
    } else {
    }
    %c0 = arith.constant 0 : index
    %c0_1 = arith.constant 0 : index
    %3 = vector.load %arg7[%c0, %c0_1] : memref<16x64xf32, #tpu.memory_space<vmem>>, vector<16x64xf32>
    %c0_2 = arith.constant 0 : index
    %c0_3 = arith.constant 0 : index
    %4 = vector.load %arg3[%c0_2, %c0_3] : memref<16x32xf32, #tpu.memory_space<vmem>>, vector<16x32xf32>
    %c0_4 = arith.constant 0 : index
    %c0_5 = arith.constant 0 : index
    %5 = vector.load %arg4[%c0_4, %c0_5] : memref<32x64xf32, #tpu.memory_space<vmem>>, vector<32x64xf32>
    %cst = arith.constant dense<0.000000e+00> : vector<16x64xf32>
    %6 = tpu.matmul %4, %5, %cst {dimension_numbers = #tpu.dot_dimension_numbers<[1], [0], [0], [1], [0, 0, 1, 1], [], []>} : vector<16x32xf32>, vector<32x64xf32>, vector<16x64xf32> -> vector<16x64xf32>
    %7 = arith.addf %3, %6 : vector<16x64xf32>
    %c0_6 = arith.constant 0 : index
    %c0_7 = arith.constant 0 : index
    %8 = vector.load %arg7[%c0_6, %c0_7] : memref<16x64xf32, #tpu.memory_space<vmem>>, vector<16x64xf32>
    tpu.vector_store %arg7[%c0_6, %c0_7], %7 {strides = array<i32>} : memref<16x64xf32, #tpu.memory_space<vmem>>, vector<16x64xf32>,
    %c0_i32_8 = arith.constant 0 : i32
    %9 = arith.cmpi eq, %arg2, %c0_i32_8 : i32
    %10 = arith.extui %9 : i1 to i32
    %c0_i32_9 = arith.constant 0 : i32
    %11 = arith.cmpi ne, %10, %c0_i32_9 : i32
    scf.if %11 {
      %c0_10 = arith.constant 0 : index
      %c0_11 = arith.constant 0 : index
      %12 = vector.load %arg7[%c0_10, %c0_11] : memref<16x64xf32, #tpu.memory_space<vmem>>, vector<16x64xf32>
      %c0_12 = arith.constant 0 : index
      %c0_13 = arith.constant 0 : index
      %13 = vector.load %arg5[%c0_12, %c0_13] : memref<1x64xf32, #tpu.memory_space<vmem>>, vector<1x64xf32>
      %14 = vector.broadcast %13 : vector<1x64xf32> to vector<16x64xf32>
      %15 = arith.addf %12, %14 : vector<16x64xf32>
      %cst_14 = arith.constant 0.000000e+00 : f32
      %16 = vector.broadcast %cst_14 : f32 to vector<16x64xf32>
      %17 = arith.maximumf %15, %16 : vector<16x64xf32>
      %c0_15 = arith.constant 0 : index
      %c0_16 = arith.constant 0 : index
      %18 = vector.load %arg6[%c0_15, %c0_16] : memref<16x64xf32, #tpu.memory_space<vmem>>, vector<16x64xf32>
      tpu.vector_store %arg6[%c0_15, %c0_16], %17 {strides = array<i32>} : memref<16x64xf32, #tpu.memory_space<vmem>>, vector<16x64xf32>,
    } else {
    }
    return
  }
  func.func @transform_0(%arg0: i32, %arg1: i32, %arg2: i32) -> (i32, i32) {
    %c0_i32 = arith.constant 0 : i32
    return %arg0, %arg2 : i32, i32
  }
  func.func @transform_1(%arg0: i32, %arg1: i32, %arg2: i32) -> (i32, i32) {
    %c0_i32 = arith.constant 0 : i32
    return %arg2, %arg1 : i32, i32
  }
  func.func @transform_2(%arg0: i32, %arg1: i32, %arg2: i32) -> (i32, i32) {
    %c0_i32 = arith.constant 0 : i32
    %c0_i32_0 = arith.constant 0 : i32
    return %c0_i32, %arg1 : i32, i32
  }
  func.func @transform_3(%arg0: i32, %arg1: i32, %arg2: i32) -> (i32, i32) {
    %c0_i32 = arith.constant 0 : i32
    return %arg0, %arg1 : i32, i32
  }
}

module attributes {stable_mosaic.version = 11 : i64} {
  func.func @_linear_ln_kernel(%arg0: i32, %arg1: i32, %arg2: memref<16x32xf32, #tpu.memory_space<vmem>>, %arg3: memref<32x32xf32, #tpu.memory_space<vmem>>, %arg4: memref<1x32xf32, #tpu.memory_space<vmem>>, %arg5: memref<16x32xf32, #tpu.memory_space<vmem>>, %arg6: memref<1x32xf32, #tpu.memory_space<vmem>>, %arg7: memref<1x32xf32, #tpu.memory_space<vmem>>, %arg8: memref<16x32xf32, #tpu.memory_space<vmem>>, %arg9: memref<16x32xf32, #tpu.memory_space<vmem>>) attributes {dimension_semantics = [#tpu.dimension_semantics<parallel>, #tpu.dimension_semantics<arbitrary>], iteration_bounds = array<i64: 1, 1>, scalar_prefetch = 0 : i64, scratch_operands = 1 : i64, tpu.core_type = #tpu.core_type<tc>, window_params = [{transform_indices = @transform_0, window_bounds = array<i64: 16, 32>}, {transform_indices = @transform_1, window_bounds = array<i64: 32, 32>}, {pipeline_mode = #tpu.pipeline_mode<synchronous>, transform_indices = @transform_2, window_bounds = array<i64: 1, 32>}, {transform_indices = @transform_3, window_bounds = array<i64: 16, 32>}, {pipeline_mode = #tpu.pipeline_mode<synchronous>, transform_indices = @transform_4, window_bounds = array<i64: 1, 32>}, {pipeline_mode = #tpu.pipeline_mode<synchronous>, transform_indices = @transform_5, window_bounds = array<i64: 1, 32>}, {transform_indices = @transform_6, window_bounds = array<i64: 16, 32>}]} {
    %c0_i32 = arith.constant 0 : i32
    %0 = arith.cmpi eq, %arg1, %c0_i32 : i32
    %1 = arith.extui %0 : i1 to i32
    %c0_i32_0 = arith.constant 0 : i32
    %2 = arith.cmpi ne, %1, %c0_i32_0 : i32
    scf.if %2 {
      %cst_10 = arith.constant 0.000000e+00 : f32
      %12 = vector.broadcast %cst_10 : f32 to vector<16x32xf32>
      %c0_11 = arith.constant 0 : index
      %c0_12 = arith.constant 0 : index
      %13 = vector.load %arg9[%c0_11, %c0_12] : memref<16x32xf32, #tpu.memory_space<vmem>>, vector<16x32xf32>
      tpu.vector_store %arg9[%c0_11, %c0_12], %12 {strides = array<i32>} : memref<16x32xf32, #tpu.memory_space<vmem>>, vector<16x32xf32>,
    } else {
    }
    %c0 = arith.constant 0 : index
    %c0_1 = arith.constant 0 : index
    %3 = vector.load %arg9[%c0, %c0_1] : memref<16x32xf32, #tpu.memory_space<vmem>>, vector<16x32xf32>
    %c0_2 = arith.constant 0 : index
    %c0_3 = arith.constant 0 : index
    %4 = vector.load %arg2[%c0_2, %c0_3] : memref<16x32xf32, #tpu.memory_space<vmem>>, vector<16x32xf32>
    %c0_4 = arith.constant 0 : index
    %c0_5 = arith.constant 0 : index
    %5 = vector.load %arg3[%c0_4, %c0_5] : memref<32x32xf32, #tpu.memory_space<vmem>>, vector<32x32xf32>
    %cst = arith.constant dense<0.000000e+00> : vector<16x32xf32>
    %6 = tpu.matmul %4, %5, %cst {dimension_numbers = #tpu.dot_dimension_numbers<[1], [0], [0], [1], [0, 0, 1, 1], [], []>} : vector<16x32xf32>, vector<32x32xf32>, vector<16x32xf32> -> vector<16x32xf32>
    %7 = arith.addf %3, %6 : vector<16x32xf32>
    %c0_6 = arith.constant 0 : index
    %c0_7 = arith.constant 0 : index
    %8 = vector.load %arg9[%c0_6, %c0_7] : memref<16x32xf32, #tpu.memory_space<vmem>>, vector<16x32xf32>
    tpu.vector_store %arg9[%c0_6, %c0_7], %7 {strides = array<i32>} : memref<16x32xf32, #tpu.memory_space<vmem>>, vector<16x32xf32>,
    %c0_i32_8 = arith.constant 0 : i32
    %9 = arith.cmpi eq, %arg1, %c0_i32_8 : i32
    %10 = arith.extui %9 : i1 to i32
    %c0_i32_9 = arith.constant 0 : i32
    %11 = arith.cmpi ne, %10, %c0_i32_9 : i32
    scf.if %11 {
      %c0_10 = arith.constant 0 : index
      %c0_11 = arith.constant 0 : index
      %12 = vector.load %arg9[%c0_10, %c0_11] : memref<16x32xf32, #tpu.memory_space<vmem>>, vector<16x32xf32>
      %c0_12 = arith.constant 0 : index
      %c0_13 = arith.constant 0 : index
      %13 = vector.load %arg4[%c0_12, %c0_13] : memref<1x32xf32, #tpu.memory_space<vmem>>, vector<1x32xf32>
      %14 = vector.broadcast %13 : vector<1x32xf32> to vector<16x32xf32>
      %15 = arith.addf %12, %14 : vector<16x32xf32>
      %c0_14 = arith.constant 0 : index
      %c0_15 = arith.constant 0 : index
      %16 = vector.load %arg5[%c0_14, %c0_15] : memref<16x32xf32, #tpu.memory_space<vmem>>, vector<16x32xf32>
      %17 = arith.addf %15, %16 : vector<16x32xf32>
      %cst_16 = arith.constant dense<0.000000e+00> : vector<16xf32>
      %18 = vector.multi_reduction <add>, %17, %cst_16 [1] : vector<16x32xf32> to vector<16xf32>
      %19 = vector.shape_cast %18 : vector<16xf32> to vector<16x1xf32>
      %cst_17 = arith.constant 3.200000e+01 : f32
      %20 = vector.broadcast %cst_17 : f32 to vector<16x1xf32>
      %21 = arith.divf %19, %20 : vector<16x1xf32>
      %22 = vector.broadcast %21 : vector<16x1xf32> to vector<16x32xf32>
      %23 = arith.subf %17, %22 : vector<16x32xf32>
      %24 = arith.mulf %23, %23 : vector<16x32xf32>
      %cst_18 = arith.constant dense<0.000000e+00> : vector<16xf32>
      %25 = vector.multi_reduction <add>, %24, %cst_18 [1] : vector<16x32xf32> to vector<16xf32>
      %26 = vector.shape_cast %25 : vector<16xf32> to vector<16x1xf32>
      %cst_19 = arith.constant 3.200000e+01 : f32
      %27 = vector.broadcast %cst_19 : f32 to vector<16x1xf32>
      %28 = arith.divf %26, %27 : vector<16x1xf32>
      %cst_20 = arith.constant 9.99999974E-6 : f32
      %29 = vector.broadcast %cst_20 : f32 to vector<16x1xf32>
      %30 = arith.addf %28, %29 : vector<16x1xf32>
      %31 = math.rsqrt %30 : vector<16x1xf32>
      %32 = vector.broadcast %31 : vector<16x1xf32> to vector<16x32xf32>
      %33 = arith.mulf %23, %32 : vector<16x32xf32>
      %c0_21 = arith.constant 0 : index
      %c0_22 = arith.constant 0 : index
      %34 = vector.load %arg6[%c0_21, %c0_22] : memref<1x32xf32, #tpu.memory_space<vmem>>, vector<1x32xf32>
      %35 = vector.broadcast %34 : vector<1x32xf32> to vector<16x32xf32>
      %36 = arith.mulf %33, %35 : vector<16x32xf32>
      %c0_23 = arith.constant 0 : index
      %c0_24 = arith.constant 0 : index
      %37 = vector.load %arg7[%c0_23, %c0_24] : memref<1x32xf32, #tpu.memory_space<vmem>>, vector<1x32xf32>
      %38 = vector.broadcast %37 : vector<1x32xf32> to vector<16x32xf32>
      %39 = arith.addf %36, %38 : vector<16x32xf32>
      %c0_25 = arith.constant 0 : index
      %c0_26 = arith.constant 0 : index
      %40 = vector.load %arg8[%c0_25, %c0_26] : memref<16x32xf32, #tpu.memory_space<vmem>>, vector<16x32xf32>
      tpu.vector_store %arg8[%c0_25, %c0_26], %39 {strides = array<i32>} : memref<16x32xf32, #tpu.memory_space<vmem>>, vector<16x32xf32>,
    } else {
    }
    return
  }
  func.func @transform_0(%arg0: i32, %arg1: i32) -> (i32, i32) {
    %c0_i32 = arith.constant 0 : i32
    return %arg0, %arg1 : i32, i32
  }
  func.func @transform_1(%arg0: i32, %arg1: i32) -> (i32, i32) {
    %c0_i32 = arith.constant 0 : i32
    %c0_i32_0 = arith.constant 0 : i32
    return %arg1, %c0_i32 : i32, i32
  }
  func.func @transform_2(%arg0: i32, %arg1: i32) -> (i32, i32) {
    %c0_i32 = arith.constant 0 : i32
    %c0_i32_0 = arith.constant 0 : i32
    %c0_i32_1 = arith.constant 0 : i32
    return %c0_i32, %c0_i32_0 : i32, i32
  }
  func.func @transform_3(%arg0: i32, %arg1: i32) -> (i32, i32) {
    %c0_i32 = arith.constant 0 : i32
    %c0_i32_0 = arith.constant 0 : i32
    return %arg0, %c0_i32 : i32, i32
  }
  func.func @transform_4(%arg0: i32, %arg1: i32) -> (i32, i32) {
    %c0_i32 = arith.constant 0 : i32
    %c0_i32_0 = arith.constant 0 : i32
    %c0_i32_1 = arith.constant 0 : i32
    return %c0_i32, %c0_i32_0 : i32, i32
  }
  func.func @transform_5(%arg0: i32, %arg1: i32) -> (i32, i32) {
    %c0_i32 = arith.constant 0 : i32
    %c0_i32_0 = arith.constant 0 : i32
    %c0_i32_1 = arith.constant 0 : i32
    return %c0_i32, %c0_i32_0 : i32, i32
  }
  func.func @transform_6(%arg0: i32, %arg1: i32) -> (i32, i32) {
    %c0_i32 = arith.constant 0 : i32
    %c0_i32_0 = arith.constant 0 : i32
    return %arg0, %c0_i32 : i32, i32
  }
}

module attributes {stable_mosaic.version = 11 : i64} {
  func.func @_attn_kernel(%arg0: i32, %arg1: memref<1x8x96xf32, #tpu.memory_space<vmem>>, %arg2: memref<1x8x32xf32, #tpu.memory_space<vmem>>) attributes {dimension_semantics = [#tpu.dimension_semantics<parallel>], iteration_bounds = array<i64: 2>, scalar_prefetch = 0 : i64, scratch_operands = 0 : i64, tpu.core_type = #tpu.core_type<tc>, window_params = [{transform_indices = @transform_0, window_bounds = array<i64: 1, 8, 96>}, {transform_indices = @transform_1, window_bounds = array<i64: 1, 8, 32>}]} {
    %c0 = arith.constant 0 : index
    %c0_0 = arith.constant 0 : index
    %c0_1 = arith.constant 0 : index
    %0 = vector.load %arg1[%c0, %c0_0, %c0_1] : memref<1x8x96xf32, #tpu.memory_space<vmem>>, vector<1x8x96xf32>
    %1 = vector.shape_cast %0 : vector<1x8x96xf32> to vector<8x96xf32>
    %2 = vector.extract_strided_slice %1 {offsets = [0, 0], sizes = [8, 8], strides = [1, 1]} : vector<8x96xf32> to vector<8x8xf32>
    %3 = vector.extract_strided_slice %1 {offsets = [0, 32], sizes = [8, 8], strides = [1, 1]} : vector<8x96xf32> to vector<8x8xf32>
    %4 = vector.extract_strided_slice %1 {offsets = [0, 64], sizes = [8, 8], strides = [1, 1]} : vector<8x96xf32> to vector<8x8xf32>
    %cst = arith.constant dense<0.000000e+00> : vector<8x8xf32>
    %5 = tpu.matmul %2, %3, %cst {dimension_numbers = #tpu.dot_dimension_numbers<[1], [1], [0], [0], [0, 0, 1, 0], [], []>} : vector<8x8xf32>, vector<8x8xf32>, vector<8x8xf32> -> vector<8x8xf32>
    %cst_2 = arith.constant 0.353553385 : f32
    %6 = vector.broadcast %cst_2 : f32 to vector<8x8xf32>
    %7 = arith.mulf %5, %6 : vector<8x8xf32>
    %cst_3 = arith.constant dense<0xFF800000> : vector<8xf32>
    %8 = vector.multi_reduction <maximumf>, %7, %cst_3 [1] : vector<8x8xf32> to vector<8xf32>
    %9 = vector.shape_cast %8 : vector<8xf32> to vector<8x1xf32>
    %10 = vector.broadcast %9 : vector<8x1xf32> to vector<8x8xf32>
    %11 = arith.subf %7, %10 : vector<8x8xf32>
    %12 = math.exp %11 : vector<8x8xf32>
    %cst_4 = arith.constant dense<0.000000e+00> : vector<8xf32>
    %13 = vector.multi_reduction <add>, %12, %cst_4 [1] : vector<8x8xf32> to vector<8xf32>
    %14 = vector.shape_cast %13 : vector<8xf32> to vector<8x1xf32>
    %15 = tpu.reciprocal %14 {approx = true} : vector<8x1xf32> -> vector<8x1xf32>
    %16 = vector.broadcast %15 : vector<8x1xf32> to vector<8x8xf32>
    %17 = arith.mulf %12, %16 : vector<8x8xf32>
    %cst_5 = arith.constant dense<0.000000e+00> : vector<8x8xf32>
    %18 = tpu.matmul %17, %4, %cst_5 {dimension_numbers = #tpu.dot_dimension_numbers<[1], [0], [0], [1], [0, 0, 1, 1], [], []>} : vector<8x8xf32>, vector<8x8xf32>, vector<8x8xf32> -> vector<8x8xf32>
    %c0_6 = arith.constant 0 : index
    %c0_7 = arith.constant 0 : index
    %c0_8 = arith.constant 0 : index
    %19 = vector.load %arg2[%c0_6, %c0_7, %c0_8] : memref<1x8x32xf32, #tpu.memory_space<vmem>>, vector<1x8x8xf32>
    %20 = vector.shape_cast %19 : vector<1x8x8xf32> to vector<8x8xf32>
    %21 = vector.shape_cast %18 : vector<8x8xf32> to vector<1x8x8xf32>
    tpu.vector_store %arg2[%c0_6, %c0_7, %c0_8], %21 {strides = array<i32>} : memref<1x8x32xf32, #tpu.memory_space<vmem>>, vector<1x8x8xf32>,
    %22 = vector.extract_strided_slice %1 {offsets = [0, 8], sizes = [8, 8], strides = [1, 1]} : vector<8x96xf32> to vector<8x8xf32>
    %23 = vector.extract_strided_slice %1 {offsets = [0, 40], sizes = [8, 8], strides = [1, 1]} : vector<8x96xf32> to vector<8x8xf32>
    %24 = vector.extract_strided_slice %1 {offsets = [0, 72], sizes = [8, 8], strides = [1, 1]} : vector<8x96xf32> to vector<8x8xf32>
    %cst_9 = arith.constant dense<0.000000e+00> : vector<8x8xf32>
    %25 = tpu.matmul %22, %23, %cst_9 {dimension_numbers = #tpu.dot_dimension_numbers<[1], [1], [0], [0], [0, 0, 1, 0], [], []>} : vector<8x8xf32>, vector<8x8xf32>, vector<8x8xf32> -> vector<8x8xf32>
    %cst_10 = arith.constant 0.353553385 : f32
    %26 = vector.broadcast %cst_10 : f32 to vector<8x8xf32>
    %27 = arith.mulf %25, %26 : vector<8x8xf32>
    %cst_11 = arith.constant dense<0xFF800000> : vector<8xf32>
    %28 = vector.multi_reduction <maximumf>, %27, %cst_11 [1] : vector<8x8xf32> to vector<8xf32>
    %29 = vector.shape_cast %28 : vector<8xf32> to vector<8x1xf32>
    %30 = vector.broadcast %29 : vector<8x1xf32> to vector<8x8xf32>
    %31 = arith.subf %27, %30 : vector<8x8xf32>
    %32 = math.exp %31 : vector<8x8xf32>
    %cst_12 = arith.constant dense<0.000000e+00> : vector<8xf32>
    %33 = vector.multi_reduction <add>, %32, %cst_12 [1] : vector<8x8xf32> to vector<8xf32>
    %34 = vector.shape_cast %33 : vector<8xf32> to vector<8x1xf32>
    %35 = tpu.reciprocal %34 {approx = true} : vector<8x1xf32> -> vector<8x1xf32>
    %36 = vector.broadcast %35 : vector<8x1xf32> to vector<8x8xf32>
    %37 = arith.mulf %32, %36 : vector<8x8xf32>
    %cst_13 = arith.constant dense<0.000000e+00> : vector<8x8xf32>
    %38 = tpu.matmul %37, %24, %cst_13 {dimension_numbers = #tpu.dot_dimension_numbers<[1], [0], [0], [1], [0, 0, 1, 1], [], []>} : vector<8x8xf32>, vector<8x8xf32>, vector<8x8xf32> -> vector<8x8xf32>
    %c0_14 = arith.constant 0 : index
    %c0_15 = arith.constant 0 : index
    %c8 = arith.constant 8 : index
    %39 = vector.load %arg2[%c0_14, %c0_15, %c8] : memref<1x8x32xf32, #tpu.memory_space<vmem>>, vector<1x8x8xf32>
    %40 = vector.shape_cast %39 : vector<1x8x8xf32> to vector<8x8xf32>
    %41 = vector.shape_cast %38 : vector<8x8xf32> to vector<1x8x8xf32>
    tpu.vector_store %arg2[%c0_14, %c0_15, %c8], %41 {strides = array<i32>} : memref<1x8x32xf32, #tpu.memory_space<vmem>>, vector<1x8x8xf32>,
    %42 = vector.extract_strided_slice %1 {offsets = [0, 16], sizes = [8, 8], strides = [1, 1]} : vector<8x96xf32> to vector<8x8xf32>
    %43 = vector.extract_strided_slice %1 {offsets = [0, 48], sizes = [8, 8], strides = [1, 1]} : vector<8x96xf32> to vector<8x8xf32>
    %44 = vector.extract_strided_slice %1 {offsets = [0, 80], sizes = [8, 8], strides = [1, 1]} : vector<8x96xf32> to vector<8x8xf32>
    %cst_16 = arith.constant dense<0.000000e+00> : vector<8x8xf32>
    %45 = tpu.matmul %42, %43, %cst_16 {dimension_numbers = #tpu.dot_dimension_numbers<[1], [1], [0], [0], [0, 0, 1, 0], [], []>} : vector<8x8xf32>, vector<8x8xf32>, vector<8x8xf32> -> vector<8x8xf32>
    %cst_17 = arith.constant 0.353553385 : f32
    %46 = vector.broadcast %cst_17 : f32 to vector<8x8xf32>
    %47 = arith.mulf %45, %46 : vector<8x8xf32>
    %cst_18 = arith.constant dense<0xFF800000> : vector<8xf32>
    %48 = vector.multi_reduction <maximumf>, %47, %cst_18 [1] : vector<8x8xf32> to vector<8xf32>
    %49 = vector.shape_cast %48 : vector<8xf32> to vector<8x1xf32>
    %50 = vector.broadcast %49 : vector<8x1xf32> to vector<8x8xf32>
    %51 = arith.subf %47, %50 : vector<8x8xf32>
    %52 = math.exp %51 : vector<8x8xf32>
    %cst_19 = arith.constant dense<0.000000e+00> : vector<8xf32>
    %53 = vector.multi_reduction <add>, %52, %cst_19 [1] : vector<8x8xf32> to vector<8xf32>
    %54 = vector.shape_cast %53 : vector<8xf32> to vector<8x1xf32>
    %55 = tpu.reciprocal %54 {approx = true} : vector<8x1xf32> -> vector<8x1xf32>
    %56 = vector.broadcast %55 : vector<8x1xf32> to vector<8x8xf32>
    %57 = arith.mulf %52, %56 : vector<8x8xf32>
    %cst_20 = arith.constant dense<0.000000e+00> : vector<8x8xf32>
    %58 = tpu.matmul %57, %44, %cst_20 {dimension_numbers = #tpu.dot_dimension_numbers<[1], [0], [0], [1], [0, 0, 1, 1], [], []>} : vector<8x8xf32>, vector<8x8xf32>, vector<8x8xf32> -> vector<8x8xf32>
    %c0_21 = arith.constant 0 : index
    %c0_22 = arith.constant 0 : index
    %c16 = arith.constant 16 : index
    %59 = vector.load %arg2[%c0_21, %c0_22, %c16] : memref<1x8x32xf32, #tpu.memory_space<vmem>>, vector<1x8x8xf32>
    %60 = vector.shape_cast %59 : vector<1x8x8xf32> to vector<8x8xf32>
    %61 = vector.shape_cast %58 : vector<8x8xf32> to vector<1x8x8xf32>
    tpu.vector_store %arg2[%c0_21, %c0_22, %c16], %61 {strides = array<i32>} : memref<1x8x32xf32, #tpu.memory_space<vmem>>, vector<1x8x8xf32>,
    %62 = vector.extract_strided_slice %1 {offsets = [0, 24], sizes = [8, 8], strides = [1, 1]} : vector<8x96xf32> to vector<8x8xf32>
    %63 = vector.extract_strided_slice %1 {offsets = [0, 56], sizes = [8, 8], strides = [1, 1]} : vector<8x96xf32> to vector<8x8xf32>
    %64 = vector.extract_strided_slice %1 {offsets = [0, 88], sizes = [8, 8], strides = [1, 1]} : vector<8x96xf32> to vector<8x8xf32>
    %cst_23 = arith.constant dense<0.000000e+00> : vector<8x8xf32>
    %65 = tpu.matmul %62, %63, %cst_23 {dimension_numbers = #tpu.dot_dimension_numbers<[1], [1], [0], [0], [0, 0, 1, 0], [], []>} : vector<8x8xf32>, vector<8x8xf32>, vector<8x8xf32> -> vector<8x8xf32>
    %cst_24 = arith.constant 0.353553385 : f32
    %66 = vector.broadcast %cst_24 : f32 to vector<8x8xf32>
    %67 = arith.mulf %65, %66 : vector<8x8xf32>
    %cst_25 = arith.constant dense<0xFF800000> : vector<8xf32>
    %68 = vector.multi_reduction <maximumf>, %67, %cst_25 [1] : vector<8x8xf32> to vector<8xf32>
    %69 = vector.shape_cast %68 : vector<8xf32> to vector<8x1xf32>
    %70 = vector.broadcast %69 : vector<8x1xf32> to vector<8x8xf32>
    %71 = arith.subf %67, %70 : vector<8x8xf32>
    %72 = math.exp %71 : vector<8x8xf32>
    %cst_26 = arith.constant dense<0.000000e+00> : vector<8xf32>
    %73 = vector.multi_reduction <add>, %72, %cst_26 [1] : vector<8x8xf32> to vector<8xf32>
    %74 = vector.shape_cast %73 : vector<8xf32> to vector<8x1xf32>
    %75 = tpu.reciprocal %74 {approx = true} : vector<8x1xf32> -> vector<8x1xf32>
    %76 = vector.broadcast %75 : vector<8x1xf32> to vector<8x8xf32>
    %77 = arith.mulf %72, %76 : vector<8x8xf32>
    %cst_27 = arith.constant dense<0.000000e+00> : vector<8x8xf32>
    %78 = tpu.matmul %77, %64, %cst_27 {dimension_numbers = #tpu.dot_dimension_numbers<[1], [0], [0], [1], [0, 0, 1, 1], [], []>} : vector<8x8xf32>, vector<8x8xf32>, vector<8x8xf32> -> vector<8x8xf32>
    %c0_28 = arith.constant 0 : index
    %c0_29 = arith.constant 0 : index
    %c24 = arith.constant 24 : index
    %79 = vector.load %arg2[%c0_28, %c0_29, %c24] : memref<1x8x32xf32, #tpu.memory_space<vmem>>, vector<1x8x8xf32>
    %80 = vector.shape_cast %79 : vector<1x8x8xf32> to vector<8x8xf32>
    %81 = vector.shape_cast %78 : vector<8x8xf32> to vector<1x8x8xf32>
    tpu.vector_store %arg2[%c0_28, %c0_29, %c24], %81 {strides = array<i32>} : memref<1x8x32xf32, #tpu.memory_space<vmem>>, vector<1x8x8xf32>,
    return
  }
  func.func @transform_0(%arg0: i32) -> (i32, i32, i32) {
    %c0_i32 = arith.constant 0 : i32
    %c0_i32_0 = arith.constant 0 : i32
    %c0_i32_1 = arith.constant 0 : i32
    return %arg0, %c0_i32, %c0_i32_0 : i32, i32, i32
  }
  func.func @transform_1(%arg0: i32) -> (i32, i32, i32) {
    %c0_i32 = arith.constant 0 : i32
    %c0_i32_0 = arith.constant 0 : i32
    %c0_i32_1 = arith.constant 0 : i32
    return %arg0, %c0_i32, %c0_i32_0 : i32, i32, i32
  }
}

module attributes {stable_mosaic.version = 11 : i64} {
  func.func @_linear_ln_kernel(%arg0: i32, %arg1: i32, %arg2: memref<16x64xf32, #tpu.memory_space<vmem>>, %arg3: memref<64x32xf32, #tpu.memory_space<vmem>>, %arg4: memref<1x32xf32, #tpu.memory_space<vmem>>, %arg5: memref<16x32xf32, #tpu.memory_space<vmem>>, %arg6: memref<1x32xf32, #tpu.memory_space<vmem>>, %arg7: memref<1x32xf32, #tpu.memory_space<vmem>>, %arg8: memref<16x32xf32, #tpu.memory_space<vmem>>, %arg9: memref<16x32xf32, #tpu.memory_space<vmem>>) attributes {dimension_semantics = [#tpu.dimension_semantics<parallel>, #tpu.dimension_semantics<arbitrary>], iteration_bounds = array<i64: 1, 1>, scalar_prefetch = 0 : i64, scratch_operands = 1 : i64, tpu.core_type = #tpu.core_type<tc>, window_params = [{transform_indices = @transform_0, window_bounds = array<i64: 16, 64>}, {transform_indices = @transform_1, window_bounds = array<i64: 64, 32>}, {pipeline_mode = #tpu.pipeline_mode<synchronous>, transform_indices = @transform_2, window_bounds = array<i64: 1, 32>}, {transform_indices = @transform_3, window_bounds = array<i64: 16, 32>}, {pipeline_mode = #tpu.pipeline_mode<synchronous>, transform_indices = @transform_4, window_bounds = array<i64: 1, 32>}, {pipeline_mode = #tpu.pipeline_mode<synchronous>, transform_indices = @transform_5, window_bounds = array<i64: 1, 32>}, {transform_indices = @transform_6, window_bounds = array<i64: 16, 32>}]} {
    %c0_i32 = arith.constant 0 : i32
    %0 = arith.cmpi eq, %arg1, %c0_i32 : i32
    %1 = arith.extui %0 : i1 to i32
    %c0_i32_0 = arith.constant 0 : i32
    %2 = arith.cmpi ne, %1, %c0_i32_0 : i32
    scf.if %2 {
      %cst_10 = arith.constant 0.000000e+00 : f32
      %12 = vector.broadcast %cst_10 : f32 to vector<16x32xf32>
      %c0_11 = arith.constant 0 : index
      %c0_12 = arith.constant 0 : index
      %13 = vector.load %arg9[%c0_11, %c0_12] : memref<16x32xf32, #tpu.memory_space<vmem>>, vector<16x32xf32>
      tpu.vector_store %arg9[%c0_11, %c0_12], %12 {strides = array<i32>} : memref<16x32xf32, #tpu.memory_space<vmem>>, vector<16x32xf32>,
    } else {
    }
    %c0 = arith.constant 0 : index
    %c0_1 = arith.constant 0 : index
    %3 = vector.load %arg9[%c0, %c0_1] : memref<16x32xf32, #tpu.memory_space<vmem>>, vector<16x32xf32>
    %c0_2 = arith.constant 0 : index
    %c0_3 = arith.constant 0 : index
    %4 = vector.load %arg2[%c0_2, %c0_3] : memref<16x64xf32, #tpu.memory_space<vmem>>, vector<16x64xf32>
    %c0_4 = arith.constant 0 : index
    %c0_5 = arith.constant 0 : index
    %5 = vector.load %arg3[%c0_4, %c0_5] : memref<64x32xf32, #tpu.memory_space<vmem>>, vector<64x32xf32>
    %cst = arith.constant dense<0.000000e+00> : vector<16x32xf32>
    %6 = tpu.matmul %4, %5, %cst {dimension_numbers = #tpu.dot_dimension_numbers<[1], [0], [0], [1], [0, 0, 1, 1], [], []>} : vector<16x64xf32>, vector<64x32xf32>, vector<16x32xf32> -> vector<16x32xf32>
    %7 = arith.addf %3, %6 : vector<16x32xf32>
    %c0_6 = arith.constant 0 : index
    %c0_7 = arith.constant 0 : index
    %8 = vector.load %arg9[%c0_6, %c0_7] : memref<16x32xf32, #tpu.memory_space<vmem>>, vector<16x32xf32>
    tpu.vector_store %arg9[%c0_6, %c0_7], %7 {strides = array<i32>} : memref<16x32xf32, #tpu.memory_space<vmem>>, vector<16x32xf32>,
    %c0_i32_8 = arith.constant 0 : i32
    %9 = arith.cmpi eq, %arg1, %c0_i32_8 : i32
    %10 = arith.extui %9 : i1 to i32
    %c0_i32_9 = arith.constant 0 : i32
    %11 = arith.cmpi ne, %10, %c0_i32_9 : i32
    scf.if %11 {
      %c0_10 = arith.constant 0 : index
      %c0_11 = arith.constant 0 : index
      %12 = vector.load %arg9[%c0_10, %c0_11] : memref<16x32xf32, #tpu.memory_space<vmem>>, vector<16x32xf32>
      %c0_12 = arith.constant 0 : index
      %c0_13 = arith.constant 0 : index
      %13 = vector.load %arg4[%c0_12, %c0_13] : memref<1x32xf32, #tpu.memory_space<vmem>>, vector<1x32xf32>
      %14 = vector.broadcast %13 : vector<1x32xf32> to vector<16x32xf32>
      %15 = arith.addf %12, %14 : vector<16x32xf32>
      %c0_14 = arith.constant 0 : index
      %c0_15 = arith.constant 0 : index
      %16 = vector.load %arg5[%c0_14, %c0_15] : memref<16x32xf32, #tpu.memory_space<vmem>>, vector<16x32xf32>
      %17 = arith.addf %15, %16 : vector<16x32xf32>
      %cst_16 = arith.constant dense<0.000000e+00> : vector<16xf32>
      %18 = vector.multi_reduction <add>, %17, %cst_16 [1] : vector<16x32xf32> to vector<16xf32>
      %19 = vector.shape_cast %18 : vector<16xf32> to vector<16x1xf32>
      %cst_17 = arith.constant 3.200000e+01 : f32
      %20 = vector.broadcast %cst_17 : f32 to vector<16x1xf32>
      %21 = arith.divf %19, %20 : vector<16x1xf32>
      %22 = vector.broadcast %21 : vector<16x1xf32> to vector<16x32xf32>
      %23 = arith.subf %17, %22 : vector<16x32xf32>
      %24 = arith.mulf %23, %23 : vector<16x32xf32>
      %cst_18 = arith.constant dense<0.000000e+00> : vector<16xf32>
      %25 = vector.multi_reduction <add>, %24, %cst_18 [1] : vector<16x32xf32> to vector<16xf32>
      %26 = vector.shape_cast %25 : vector<16xf32> to vector<16x1xf32>
      %cst_19 = arith.constant 3.200000e+01 : f32
      %27 = vector.broadcast %cst_19 : f32 to vector<16x1xf32>
      %28 = arith.divf %26, %27 : vector<16x1xf32>
      %cst_20 = arith.constant 9.99999974E-6 : f32
      %29 = vector.broadcast %cst_20 : f32 to vector<16x1xf32>
      %30 = arith.addf %28, %29 : vector<16x1xf32>
      %31 = math.rsqrt %30 : vector<16x1xf32>
      %32 = vector.broadcast %31 : vector<16x1xf32> to vector<16x32xf32>
      %33 = arith.mulf %23, %32 : vector<16x32xf32>
      %c0_21 = arith.constant 0 : index
      %c0_22 = arith.constant 0 : index
      %34 = vector.load %arg6[%c0_21, %c0_22] : memref<1x32xf32, #tpu.memory_space<vmem>>, vector<1x32xf32>
      %35 = vector.broadcast %34 : vector<1x32xf32> to vector<16x32xf32>
      %36 = arith.mulf %33, %35 : vector<16x32xf32>
      %c0_23 = arith.constant 0 : index
      %c0_24 = arith.constant 0 : index
      %37 = vector.load %arg7[%c0_23, %c0_24] : memref<1x32xf32, #tpu.memory_space<vmem>>, vector<1x32xf32>
      %38 = vector.broadcast %37 : vector<1x32xf32> to vector<16x32xf32>
      %39 = arith.addf %36, %38 : vector<16x32xf32>
      %c0_25 = arith.constant 0 : index
      %c0_26 = arith.constant 0 : index
      %40 = vector.load %arg8[%c0_25, %c0_26] : memref<16x32xf32, #tpu.memory_space<vmem>>, vector<16x32xf32>
      tpu.vector_store %arg8[%c0_25, %c0_26], %39 {strides = array<i32>} : memref<16x32xf32, #tpu.memory_space<vmem>>, vector<16x32xf32>,
    } else {
    }
    return
  }
  func.func @transform_0(%arg0: i32, %arg1: i32) -> (i32, i32) {
    %c0_i32 = arith.constant 0 : i32
    return %arg0, %arg1 : i32, i32
  }
  func.func @transform_1(%arg0: i32, %arg1: i32) -> (i32, i32) {
    %c0_i32 = arith.constant 0 : i32
    %c0_i32_0 = arith.constant 0 : i32
    return %arg1, %c0_i32 : i32, i32
  }
  func.func @transform_2(%arg0: i32, %arg1: i32) -> (i32, i32) {
    %c0_i32 = arith.constant 0 : i32
    %c0_i32_0 = arith.constant 0 : i32
    %c0_i32_1 = arith.constant 0 : i32
    return %c0_i32, %c0_i32_0 : i32, i32
  }
  func.func @transform_3(%arg0: i32, %arg1: i32) -> (i32, i32) {
    %c0_i32 = arith.constant 0 : i32
    %c0_i32_0 = arith.constant 0 : i32
    return %arg0, %c0_i32 : i32, i32
  }
  func.func @transform_4(%arg0: i32, %arg1: i32) -> (i32, i32) {
    %c0_i32 = arith.constant 0 : i32
    %c0_i32_0 = arith.constant 0 : i32
    %c0_i32_1 = arith.constant 0 : i32
    return %c0_i32, %c0_i32_0 : i32, i32
  }
  func.func @transform_5(%arg0: i32, %arg1: i32) -> (i32, i32) {
    %c0_i32 = arith.constant 0 : i32
    %c0_i32_0 = arith.constant 0 : i32
    %c0_i32_1 = arith.constant 0 : i32
    return %c0_i32, %c0_i32_0 : i32, i32
  }
  func.func @transform_6(%arg0: i32, %arg1: i32) -> (i32, i32) {
    %c0_i32 = arith.constant 0 : i32
    %c0_i32_0 = arith.constant 0 : i32
    return %arg0, %c0_i32 : i32, i32
  }
}

module attributes {stable_mosaic.version = 11 : i64} {
  func.func @_linear_kernel(%arg0: i32, %arg1: i32, %arg2: i32, %arg3: memref<16x32xf32, #tpu.memory_space<vmem>>, %arg4: memref<32x64xf32, #tpu.memory_space<vmem>>, %arg5: memref<1x64xf32, #tpu.memory_space<vmem>>, %arg6: memref<16x64xf32, #tpu.memory_space<vmem>>, %arg7: memref<16x64xf32, #tpu.memory_space<vmem>>) attributes {dimension_semantics = [#tpu.dimension_semantics<parallel>, #tpu.dimension_semantics<parallel>, #tpu.dimension_semantics<arbitrary>], iteration_bounds = array<i64: 1, 1, 1>, scalar_prefetch = 0 : i64, scratch_operands = 1 : i64, tpu.core_type = #tpu.core_type<tc>, window_params = [{transform_indices = @transform_0, window_bounds = array<i64: 16, 32>}, {transform_indices = @transform_1, window_bounds = array<i64: 32, 64>}, {transform_indices = @transform_2, window_bounds = array<i64: 1, 64>}, {transform_indices = @transform_3, window_bounds = array<i64: 16, 64>}]} {
    %c0_i32 = arith.constant 0 : i32
    %0 = arith.cmpi eq, %arg2, %c0_i32 : i32
    %1 = arith.extui %0 : i1 to i32
    %c0_i32_0 = arith.constant 0 : i32
    %2 = arith.cmpi ne, %1, %c0_i32_0 : i32
    scf.if %2 {
      %cst_10 = arith.constant 0.000000e+00 : f32
      %12 = vector.broadcast %cst_10 : f32 to vector<16x64xf32>
      %c0_11 = arith.constant 0 : index
      %c0_12 = arith.constant 0 : index
      %13 = vector.load %arg7[%c0_11, %c0_12] : memref<16x64xf32, #tpu.memory_space<vmem>>, vector<16x64xf32>
      tpu.vector_store %arg7[%c0_11, %c0_12], %12 {strides = array<i32>} : memref<16x64xf32, #tpu.memory_space<vmem>>, vector<16x64xf32>,
    } else {
    }
    %c0 = arith.constant 0 : index
    %c0_1 = arith.constant 0 : index
    %3 = vector.load %arg7[%c0, %c0_1] : memref<16x64xf32, #tpu.memory_space<vmem>>, vector<16x64xf32>
    %c0_2 = arith.constant 0 : index
    %c0_3 = arith.constant 0 : index
    %4 = vector.load %arg3[%c0_2, %c0_3] : memref<16x32xf32, #tpu.memory_space<vmem>>, vector<16x32xf32>
    %c0_4 = arith.constant 0 : index
    %c0_5 = arith.constant 0 : index
    %5 = vector.load %arg4[%c0_4, %c0_5] : memref<32x64xf32, #tpu.memory_space<vmem>>, vector<32x64xf32>
    %cst = arith.constant dense<0.000000e+00> : vector<16x64xf32>
    %6 = tpu.matmul %4, %5, %cst {dimension_numbers = #tpu.dot_dimension_numbers<[1], [0], [0], [1], [0, 0, 1, 1], [], []>} : vector<16x32xf32>, vector<32x64xf32>, vector<16x64xf32> -> vector<16x64xf32>
    %7 = arith.addf %3, %6 : vector<16x64xf32>
    %c0_6 = arith.constant 0 : index
    %c0_7 = arith.constant 0 : index
    %8 = vector.load %arg7[%c0_6, %c0_7] : memref<16x64xf32, #tpu.memory_space<vmem>>, vector<16x64xf32>
    tpu.vector_store %arg7[%c0_6, %c0_7], %7 {strides = array<i32>} : memref<16x64xf32, #tpu.memory_space<vmem>>, vector<16x64xf32>,
    %c0_i32_8 = arith.constant 0 : i32
    %9 = arith.cmpi eq, %arg2, %c0_i32_8 : i32
    %10 = arith.extui %9 : i1 to i32
    %c0_i32_9 = arith.constant 0 : i32
    %11 = arith.cmpi ne, %10, %c0_i32_9 : i32
    scf.if %11 {
      %c0_10 = arith.constant 0 : index
      %c0_11 = arith.constant 0 : index
      %12 = vector.load %arg7[%c0_10, %c0_11] : memref<16x64xf32, #tpu.memory_space<vmem>>, vector<16x64xf32>
      %c0_12 = arith.constant 0 : index
      %c0_13 = arith.constant 0 : index
      %13 = vector.load %arg5[%c0_12, %c0_13] : memref<1x64xf32, #tpu.memory_space<vmem>>, vector<1x64xf32>
      %14 = vector.broadcast %13 : vector<1x64xf32> to vector<16x64xf32>
      %15 = arith.addf %12, %14 : vector<16x64xf32>
      %c0_14 = arith.constant 0 : index
      %c0_15 = arith.constant 0 : index
      %16 = vector.load %arg6[%c0_14, %c0_15] : memref<16x64xf32, #tpu.memory_space<vmem>>, vector<16x64xf32>
      tpu.vector_store %arg6[%c0_14, %c0_15], %15 {strides = array<i32>} : memref<16x64xf32, #tpu.memory_space<vmem>>, vector<16x64xf32>,
    } else {
    }
    return
  }
  func.func @transform_0(%arg0: i32, %arg1: i32, %arg2: i32) -> (i32, i32) {
    %c0_i32 = arith.constant 0 : i32
    return %arg0, %arg2 : i32, i32
  }
  func.func @transform_1(%arg0: i32, %arg1: i32, %arg2: i32) -> (i32, i32) {
    %c0_i32 = arith.constant 0 : i32
    return %arg2, %arg1 : i32, i32
  }
  func.func @transform_2(%arg0: i32, %arg1: i32, %arg2: i32) -> (i32, i32) {
    %c0_i32 = arith.constant 0 : i32
    %c0_i32_0 = arith.constant 0 : i32
    return %c0_i32, %arg1 : i32, i32
  }
  func.func @transform_3(%arg0: i32, %arg1: i32, %arg2: i32) -> (i32, i32) {
    %c0_i32 = arith.constant 0 : i32
    return %arg0, %arg1 : i32, i32
  }
}

module attributes {stable_mosaic.version = 11 : i64} {
  func.func @_linear_ln_kernel(%arg0: i32, %arg1: i32, %arg2: memref<16x32xf32, #tpu.memory_space<vmem>>, %arg3: memref<32x32xf32, #tpu.memory_space<vmem>>, %arg4: memref<1x32xf32, #tpu.memory_space<vmem>>, %arg5: memref<1x32xf32, #tpu.memory_space<vmem>>, %arg6: memref<1x32xf32, #tpu.memory_space<vmem>>, %arg7: memref<16x32xf32, #tpu.memory_space<vmem>>, %arg8: memref<16x32xf32, #tpu.memory_space<vmem>>) attributes {dimension_semantics = [#tpu.dimension_semantics<parallel>, #tpu.dimension_semantics<arbitrary>], iteration_bounds = array<i64: 1, 1>, scalar_prefetch = 0 : i64, scratch_operands = 1 : i64, tpu.core_type = #tpu.core_type<tc>, window_params = [{transform_indices = @transform_0, window_bounds = array<i64: 16, 32>}, {transform_indices = @transform_1, window_bounds = array<i64: 32, 32>}, {pipeline_mode = #tpu.pipeline_mode<synchronous>, transform_indices = @transform_2, window_bounds = array<i64: 1, 32>}, {pipeline_mode = #tpu.pipeline_mode<synchronous>, transform_indices = @transform_3, window_bounds = array<i64: 1, 32>}, {pipeline_mode = #tpu.pipeline_mode<synchronous>, transform_indices = @transform_4, window_bounds = array<i64: 1, 32>}, {transform_indices = @transform_5, window_bounds = array<i64: 16, 32>}]} {
    %c0_i32 = arith.constant 0 : i32
    %0 = arith.cmpi eq, %arg1, %c0_i32 : i32
    %1 = arith.extui %0 : i1 to i32
    %c0_i32_0 = arith.constant 0 : i32
    %2 = arith.cmpi ne, %1, %c0_i32_0 : i32
    scf.if %2 {
      %cst_10 = arith.constant 0.000000e+00 : f32
      %12 = vector.broadcast %cst_10 : f32 to vector<16x32xf32>
      %c0_11 = arith.constant 0 : index
      %c0_12 = arith.constant 0 : index
      %13 = vector.load %arg8[%c0_11, %c0_12] : memref<16x32xf32, #tpu.memory_space<vmem>>, vector<16x32xf32>
      tpu.vector_store %arg8[%c0_11, %c0_12], %12 {strides = array<i32>} : memref<16x32xf32, #tpu.memory_space<vmem>>, vector<16x32xf32>,
    } else {
    }
    %c0 = arith.constant 0 : index
    %c0_1 = arith.constant 0 : index
    %3 = vector.load %arg8[%c0, %c0_1] : memref<16x32xf32, #tpu.memory_space<vmem>>, vector<16x32xf32>
    %c0_2 = arith.constant 0 : index
    %c0_3 = arith.constant 0 : index
    %4 = vector.load %arg2[%c0_2, %c0_3] : memref<16x32xf32, #tpu.memory_space<vmem>>, vector<16x32xf32>
    %c0_4 = arith.constant 0 : index
    %c0_5 = arith.constant 0 : index
    %5 = vector.load %arg3[%c0_4, %c0_5] : memref<32x32xf32, #tpu.memory_space<vmem>>, vector<32x32xf32>
    %cst = arith.constant dense<0.000000e+00> : vector<16x32xf32>
    %6 = tpu.matmul %4, %5, %cst {dimension_numbers = #tpu.dot_dimension_numbers<[1], [0], [0], [1], [0, 0, 1, 1], [], []>} : vector<16x32xf32>, vector<32x32xf32>, vector<16x32xf32> -> vector<16x32xf32>
    %7 = arith.addf %3, %6 : vector<16x32xf32>
    %c0_6 = arith.constant 0 : index
    %c0_7 = arith.constant 0 : index
    %8 = vector.load %arg8[%c0_6, %c0_7] : memref<16x32xf32, #tpu.memory_space<vmem>>, vector<16x32xf32>
    tpu.vector_store %arg8[%c0_6, %c0_7], %7 {strides = array<i32>} : memref<16x32xf32, #tpu.memory_space<vmem>>, vector<16x32xf32>,
    %c0_i32_8 = arith.constant 0 : i32
    %9 = arith.cmpi eq, %arg1, %c0_i32_8 : i32
    %10 = arith.extui %9 : i1 to i32
    %c0_i32_9 = arith.constant 0 : i32
    %11 = arith.cmpi ne, %10, %c0_i32_9 : i32
    scf.if %11 {
      %c0_10 = arith.constant 0 : index
      %c0_11 = arith.constant 0 : index
      %12 = vector.load %arg8[%c0_10, %c0_11] : memref<16x32xf32, #tpu.memory_space<vmem>>, vector<16x32xf32>
      %c0_12 = arith.constant 0 : index
      %c0_13 = arith.constant 0 : index
      %13 = vector.load %arg4[%c0_12, %c0_13] : memref<1x32xf32, #tpu.memory_space<vmem>>, vector<1x32xf32>
      %14 = vector.broadcast %13 : vector<1x32xf32> to vector<16x32xf32>
      %15 = arith.addf %12, %14 : vector<16x32xf32>
      %cst_14 = arith.constant 5.000000e-01 : f32
      %16 = vector.broadcast %cst_14 : f32 to vector<16x32xf32>
      %17 = arith.mulf %16, %15 : vector<16x32xf32>
      %cst_15 = arith.constant 0.707106769 : f32
      %18 = vector.broadcast %cst_15 : f32 to vector<16x32xf32>
      %19 = arith.mulf %15, %18 : vector<16x32xf32>
      %cst_16 = arith.constant 0.000000e+00 : f32
      %20 = vector.broadcast %cst_16 : f32 to vector<16x32xf32>
      %21 = arith.cmpf oge, %19, %20 : vector<16x32xf32>
      %cst_17 = arith.constant 1.000000e+00 : f32
      %cst_18 = arith.constant -1.000000e+00 : f32
      %22 = vector.broadcast %cst_17 : f32 to vector<16x32xf32>
      %23 = vector.broadcast %cst_18 : f32 to vector<16x32xf32>
      %24 = arith.select %21, %22, %23 : vector<16x32xi1>, vector<16x32xf32>
      %25 = math.absf %19 : vector<16x32xf32>
      %cst_19 = arith.constant 0.327591091 : f32
      %26 = vector.broadcast %cst_19 : f32 to vector<16x32xf32>
      %27 = arith.mulf %26, %25 : vector<16x32xf32>
      %cst_20 = arith.constant 1.000000e+00 : f32
      %28 = vector.broadcast %cst_20 : f32 to vector<16x32xf32>
      %29 = arith.addf %28, %27 : vector<16x32xf32>
      %cst_21 = arith.constant 1.000000e+00 : f32
      %30 = vector.broadcast %cst_21 : f32 to vector<16x32xf32>
      %31 = arith.divf %30, %29 : vector<16x32xf32>
      %cst_22 = arith.constant 1.06140542 : f32
      %32 = vector.broadcast %cst_22 : f32 to vector<16x32xf32>
      %33 = arith.mulf %32, %31 : vector<16x32xf32>
      %cst_23 = arith.constant -1.45315206 : f32
      %34 = vector.broadcast %cst_23 : f32 to vector<16x32xf32>
      %35 = arith.addf %33, %34 : vector<16x32xf32>
      %36 = arith.mulf %35, %31 : vector<16x32xf32>
      %cst_24 = arith.constant 1.42141378 : f32
      %37 = vector.broadcast %cst_24 : f32 to vector<16x32xf32>
      %38 = arith.addf %36, %37 : vector<16x32xf32>
      %39 = arith.mulf %38, %31 : vector<16x32xf32>
      %cst_25 = arith.constant -0.284496725 : f32
      %40 = vector.broadcast %cst_25 : f32 to vector<16x32xf32>
      %41 = arith.addf %39, %40 : vector<16x32xf32>
      %42 = arith.mulf %41, %31 : vector<16x32xf32>
      %cst_26 = arith.constant 0.254829586 : f32
      %43 = vector.broadcast %cst_26 : f32 to vector<16x32xf32>
      %44 = arith.addf %42, %43 : vector<16x32xf32>
      %45 = arith.mulf %44, %31 : vector<16x32xf32>
      %cst_27 = arith.constant 0.000000e+00 : f32
      %46 = vector.broadcast %cst_27 : f32 to vector<16x32xf32>
      %47 = arith.subf %46, %25 : vector<16x32xf32>
      %48 = arith.mulf %47, %25 : vector<16x32xf32>
      %49 = math.exp %48 : vector<16x32xf32>
      %50 = arith.mulf %45, %49 : vector<16x32xf32>
      %cst_28 = arith.constant 1.000000e+00 : f32
      %51 = vector.broadcast %cst_28 : f32 to vector<16x32xf32>
      %52 = arith.subf %51, %50 : vector<16x32xf32>
      %53 = arith.mulf %24, %52 : vector<16x32xf32>
      %cst_29 = arith.constant 1.000000e+00 : f32
      %54 = vector.broadcast %cst_29 : f32 to vector<16x32xf32>
      %55 = arith.addf %54, %53 : vector<16x32xf32>
      %56 = arith.mulf %17, %55 : vector<16x32xf32>
      %cst_30 = arith.constant dense<0.000000e+00> : vector<16xf32>
      %57 = vector.multi_reduction <add>, %56, %cst_30 [1] : vector<16x32xf32> to vector<16xf32>
      %58 = vector.shape_cast %57 : vector<16xf32> to vector<16x1xf32>
      %cst_31 = arith.constant 3.200000e+01 : f32
      %59 = vector.broadcast %cst_31 : f32 to vector<16x1xf32>
      %60 = arith.divf %58, %59 : vector<16x1xf32>
      %61 = vector.broadcast %60 : vector<16x1xf32> to vector<16x32xf32>
      %62 = arith.subf %56, %61 : vector<16x32xf32>
      %63 = arith.mulf %62, %62 : vector<16x32xf32>
      %cst_32 = arith.constant dense<0.000000e+00> : vector<16xf32>
      %64 = vector.multi_reduction <add>, %63, %cst_32 [1] : vector<16x32xf32> to vector<16xf32>
      %65 = vector.shape_cast %64 : vector<16xf32> to vector<16x1xf32>
      %cst_33 = arith.constant 3.200000e+01 : f32
      %66 = vector.broadcast %cst_33 : f32 to vector<16x1xf32>
      %67 = arith.divf %65, %66 : vector<16x1xf32>
      %cst_34 = arith.constant 9.99999974E-6 : f32
      %68 = vector.broadcast %cst_34 : f32 to vector<16x1xf32>
      %69 = arith.addf %67, %68 : vector<16x1xf32>
      %70 = math.rsqrt %69 : vector<16x1xf32>
      %71 = vector.broadcast %70 : vector<16x1xf32> to vector<16x32xf32>
      %72 = arith.mulf %62, %71 : vector<16x32xf32>
      %c0_35 = arith.constant 0 : index
      %c0_36 = arith.constant 0 : index
      %73 = vector.load %arg5[%c0_35, %c0_36] : memref<1x32xf32, #tpu.memory_space<vmem>>, vector<1x32xf32>
      %74 = vector.broadcast %73 : vector<1x32xf32> to vector<16x32xf32>
      %75 = arith.mulf %72, %74 : vector<16x32xf32>
      %c0_37 = arith.constant 0 : index
      %c0_38 = arith.constant 0 : index
      %76 = vector.load %arg6[%c0_37, %c0_38] : memref<1x32xf32, #tpu.memory_space<vmem>>, vector<1x32xf32>
      %77 = vector.broadcast %76 : vector<1x32xf32> to vector<16x32xf32>
      %78 = arith.addf %75, %77 : vector<16x32xf32>
      %c0_39 = arith.constant 0 : index
      %c0_40 = arith.constant 0 : index
      %79 = vector.load %arg7[%c0_39, %c0_40] : memref<16x32xf32, #tpu.memory_space<vmem>>, vector<16x32xf32>
      tpu.vector_store %arg7[%c0_39, %c0_40], %78 {strides = array<i32>} : memref<16x32xf32, #tpu.memory_space<vmem>>, vector<16x32xf32>,
    } else {
    }
    return
  }
  func.func @transform_0(%arg0: i32, %arg1: i32) -> (i32, i32) {
    %c0_i32 = arith.constant 0 : i32
    return %arg0, %arg1 : i32, i32
  }
  func.func @transform_1(%arg0: i32, %arg1: i32) -> (i32, i32) {
    %c0_i32 = arith.constant 0 : i32
    %c0_i32_0 = arith.constant 0 : i32
    return %arg1, %c0_i32 : i32, i32
  }
  func.func @transform_2(%arg0: i32, %arg1: i32) -> (i32, i32) {
    %c0_i32 = arith.constant 0 : i32
    %c0_i32_0 = arith.constant 0 : i32
    %c0_i32_1 = arith.constant 0 : i32
    return %c0_i32, %c0_i32_0 : i32, i32
  }
  func.func @transform_3(%arg0: i32, %arg1: i32) -> (i32, i32) {
    %c0_i32 = arith.constant 0 : i32
    %c0_i32_0 = arith.constant 0 : i32
    %c0_i32_1 = arith.constant 0 : i32
    return %c0_i32, %c0_i32_0 : i32, i32
  }
  func.func @transform_4(%arg0: i32, %arg1: i32) -> (i32, i32) {
    %c0_i32 = arith.constant 0 : i32
    %c0_i32_0 = arith.constant 0 : i32
    %c0_i32_1 = arith.constant 0 : i32
    return %c0_i32, %c0_i32_0 : i32, i32
  }
  func.func @transform_5(%arg0: i32, %arg1: i32) -> (i32, i32) {
    %c0_i32 = arith.constant 0 : i32
    %c0_i32_0 = arith.constant 0 : i32
    return %arg0, %c0_i32 : i32, i32
  }
}

</mosaic_0001>

<llo_original>
// kernel: bert_forward.12
$region0: #{bert_forward.12}
  #allocation0 [shape = 'u32[]', space=smem, size = 0x4, offset = 0x4, fixed_abs, tag = 'smem constant byte address 0x4 - core index']
  #allocation1 [shape = 'u32[144,128]{1,0:T(1,128)}', space=vmem, size = 0x12000, scoped, tag = 'internal scratch']
  #allocation2 [shape = 'f32[16,96]{1,0:T(8,128)}', space=vmem, size = 0x2000, scoped, tag = 'scratch operand']
  %s0 = inlined_call_operand.vmem [shape: f32[16,32], index: 0, kind: input, shape index: {}]
  %s1 = inlined_call_operand.vmem [shape: f32[32,96], index: 1, kind: input, shape index: {}]
  %s2 = inlined_call_operand.vmem [shape: f32[1,96], index: 2, kind: input, shape index: {}]
  %s3 = inlined_call_operand.vmem [shape: f32[16,96], index: 3, kind: output, shape index: {}]
  %s4 = sld [smem:[#allocation0]]
  $region30: #{bert_forward.12} parent=0
    _
  %s6 = ssub.s32 1, %s4
  %s7 = scalar_select 0, %s6, %s4
  // Predicated region
  $region2: #{bert_forward.12} parent=0 // pred_check
    _
  $region3: #{bert_forward.12} parent=0 // pred_check_branch
    %9 = sbr.rel (0) target = $region5
  $region4: #{bert_forward.12} parent=0 // pred_region
    _
  $region5: #{bert_forward.12} parent=0 // pred_fallthru
    _
  // Predicated region
  $region6: #{bert_forward.12} parent=0 // pred_check
    _
  $region7: #{bert_forward.12} parent=0 // pred_check_branch
    %11 = sbr.rel (0) target = $region9
  $region8: #{bert_forward.12} parent=0 // pred_region
    _
  $region9: #{bert_forward.12} parent=0 // pred_fallthru
    _
  // Predicated region
  $region10: #{bert_forward.12} parent=0 // pred_check
    _
  $region11: #{bert_forward.12} parent=0 // pred_check_branch
    %13 = sbr.rel (0) target = $region13
  $region12: #{bert_forward.12} parent=0 // pred_region
    _
  $region13: #{bert_forward.12} parent=0 // pred_fallthru
    _
  %p14 = scmp.eq.s32.totalorder 0, 0
  // Predicated region
  $region14: #{bert_forward.12} parent=0 // pred_check
    %p15 = pneg %p14
  $region15: #{bert_forward.12} parent=0 // pred_check_branch
    %17 = sbr.rel (%p15) target = $region17
  $region16: #{bert_forward.12} parent=0 // pred_region
    %vm18 = vcmask 785408
    %19 = vst.msk [vmem:[#allocation2] sm:$0xff] %vm18, 0.0
    %20 = vst.msk [vmem:[#allocation2 + $0x8] sm:$0xff] %vm18, 0.0
  $region17: #{bert_forward.12} parent=0 // pred_fallthru
    _
  %v21 = vld [vmem:[#allocation2] sm:$0xff]
  %v22 = vld [vmem:[#allocation2 + $0x8] sm:$0xff]
  %v23 = vld [vmem:[%s0] sm:$0xff]
  %v24 = vld [vmem:[%s0 + $0x8] sm:$0xff]
  %v25 = vld [vmem:[%s1] sm:$0xff]
  %v26 = vld [vmem:[%s1 + $0x8] sm:$0xff]
  %v27 = vld [vmem:[%s1 + $0x10] sm:$0xff]
  %v28 = vld [vmem:[%s1 + $0x18] sm:$0xff]
  %vm29 = vcmask 261120
  %v31 = vsel %vm29, %v23, 0
  %v34 = vsel %vm29, %v24, 0
  %36 = vmatprep.subr.mxu0 0.0
  %37 = vmatpush1.msra.mxu0 0.0
  %38 = vmatprep.subr.mxu0 0.0
  %39 = vmatpush1.msra.mxu0 0.0
  %40 = vmatprep.subr.mxu0 0.0
  %41 = vmatpush1.msra.mxu0 0.0
  %42 = vmatprep.subr.mxu0 0.0
  %43 = vmatpush1.msra.mxu0 0.0
  %44 = vmatprep.subr.mxu0 0.0
  %45 = vmatpush1.msra.mxu0 0.0
  %46 = vmatprep.subr.mxu0 0.0
  %47 = vmatpush1.msra.mxu0 0.0
  %48 = vmatprep.subr.mxu0 0.0
  %49 = vmatpush1.msra.mxu0 0.0
  %50 = vmatprep.subr.mxu0 0.0
  %51 = vmatpush1.msra.mxu0 0.0
  %52 = vmatprep.subr.mxu0 0.0
  %53 = vmatpush1.msra.mxu0 0.0
  %54 = vmatprep.subr.mxu0 0.0
  %55 = vmatpush1.msra.mxu0 0.0
  %56 = vmatprep.subr.mxu0 0.0
  %57 = vmatpush1.msra.mxu0 0.0
  %58 = vmatprep.subr.mxu0 0.0
  %59 = vmatpush1.msra.mxu0 0.0
  %60 = vmatprep.subr.mxu0 0.0
  %61 = vmatpush1.msra.mxu0 %v28
  %62 = vmatprep.subr.mxu0 0.0
  %63 = vmatpush1.msra.mxu0 %v27
  %64 = vmatprep.subr.mxu0 0.0
  %65 = vmatpush1.msra.mxu0 %v26
  %66 = vmatprep.subr.mxu0 0.0
  %67 = vmatpush1.msra.mxu0 %v25
  %68 = vmatprep.subr.mxu0 0.0
  %69 = vmatpush2.msra.mxu0 0.0
  %70 = vmatprep.subr.mxu0 0.0
  %71 = vmatpush2.msra.mxu0 0.0
  %72 = vmatprep.subr.mxu0 0.0
  %73 = vmatpush2.msra.mxu0 0.0
  %74 = vmatprep.subr.mxu0 0.0
  %75 = vmatpush2.msra.mxu0 0.0
  %76 = vmatprep.subr.mxu0 0.0
  %77 = vmatpush2.msra.mxu0 0.0
  %78 = vmatprep.subr.mxu0 0.0
  %79 = vmatpush2.msra.mxu0 0.0
  %80 = vmatprep.subr.mxu0 0.0
  %81 = vmatpush2.msra.mxu0 0.0
  %82 = vmatprep.subr.mxu0 0.0
  %83 = vmatpush2.msra.mxu0 0.0
  %84 = vmatprep.subr.mxu0 0.0
  %85 = vmatpush2.msra.mxu0 0.0
  %86 = vmatprep.subr.mxu0 0.0
  %87 = vmatpush2.msra.mxu0 0.0
  %88 = vmatprep.subr.mxu0 0.0
  %89 = vmatpush2.msra.mxu0 0.0
  %90 = vmatprep.subr.mxu0 0.0
  %91 = vmatpush2.msra.mxu0 0.0
  %92 = vmatprep.subr.mxu0 0.0
  %93 = vmatpush2.msra.mxu0 0.0
  %94 = vmatprep.subr.mxu0 0.0
  %95 = vmatpush2.msra.mxu0 0.0
  %96 = vmatprep.subr.mxu0 0.0
  %97 = vmatpush2.msra.mxu0 0.0
  %98 = vmatprep.subr.mxu0 0.0
  %99 = vmatpush2.msra.mxu0 0.0
  %100 = vmatprep.mubr.f32.mxu0 0.0
  %101 = vmatmul.mubr.f32.gmra.mxu0 %v31
  %v102 = vpop.f32.mrf.mxu0
  %v103 = vadd.f32 0.0, %v102
  %v104 = vpop.f32.mrf.mxu0
  %105 = vmatprep.mubr.f32.mxu0 0.0
  %106 = vmatmul.mubr.f32.gmra.mxu0 %v34
  %v107 = vpop.f32.mrf.mxu0
  %v108 = vadd.f32 0.0, %v107
  %v109 = vpop.f32.mrf.mxu0
  %110 = vdwg.mxu0
  %v111 = vadd.f32 %v21, %v103
  %v112 = vadd.f32 %v22, %v108
  %vm113 = vcmask 785408
  %114 = vst.msk [vmem:[#allocation2] sm:$0xff] %vm113, %v111
  %115 = vst.msk [vmem:[#allocation2 + $0x8] sm:$0xff] %vm113, %v112
  // Predicated region
  $region18: #{bert_forward.12} parent=0 // pred_check
    %p116 = pneg %p14
  $region19: #{bert_forward.12} parent=0 // pred_check_branch
    %118 = sbr.rel (%p116) target = $region21
  $region20: #{bert_forward.12} parent=0 // pred_region
    %v119 = vld [vmem:[#allocation2] sm:$0xff]
    %v120 = vld [vmem:[#allocation2 + $0x8] sm:$0xff]
    %v121 = vld [vmem:[%s2] sm:$0x1]
    %v123 = vlaneseq
    %v124 = vshrl.u32 %v123, 7
    %v125 = vsub.s32 0, %v124
    %v126 = vrot.slane %v121, %v125
    %v128 = vadd.f32 %v119, %v126
    %v129 = vadd.f32 %v120, %v126
    %130 = vst.msk [vmem:[%s3] sm:$0xff] %vm113, %v128
    %131 = vst.msk [vmem:[%s3 + $0x8] sm:$0xff] %vm113, %v129
  $region21: #{bert_forward.12} parent=0 // pred_fallthru
    _
  // Predicated region
  $region22: #{bert_forward.12} parent=0 // pred_check
    _
  $region23: #{bert_forward.12} parent=0 // pred_check_branch
    %133 = sbr.rel (0) target = $region25
  $region24: #{bert_forward.12} parent=0 // pred_region
    _
  $region25: #{bert_forward.12} parent=0 // pred_fallthru
    _
  // Predicated region
  $region26: #{bert_forward.12} parent=0 // pred_check
    _
  $region27: #{bert_forward.12} parent=0 // pred_check_branch
    %135 = sbr.rel (0) target = $region29
  $region28: #{bert_forward.12} parent=0 // pred_region
    _
  $region29: #{bert_forward.12} parent=0 // pred_fallthru
    _

// kernel: bert_forward.14
$region0: #{bert_forward.14}
  #allocation0 [shape = 'u32[]', space=smem, size = 0x4, offset = 0x4, fixed_abs, tag = 'smem constant byte address 0x4 - core index']
  #allocation1 [shape = 'u32[144,128]{1,0:T(1,128)}', space=vmem, size = 0x12000, scoped, tag = 'internal scratch']
  #allocation2 [shape = 'f32[16,32]{1,0:T(8,128)}', space=vmem, size = 0x2000, scoped, tag = 'scratch operand']
  %s0 = inlined_call_operand.vmem [shape: f32[16,32], index: 0, kind: input, shape index: {}]
  %s1 = inlined_call_operand.vmem [shape: f32[32,32], index: 1, kind: input, shape index: {}]
  %s2 = inlined_call_operand.vmem [shape: f32[1,32], index: 2, kind: input, shape index: {}]
  %s3 = inlined_call_operand.vmem [shape: f32[16,32], index: 3, kind: input, shape index: {}]
  %s4 = inlined_call_operand.vmem [shape: f32[1,32], index: 4, kind: input, shape index: {}]
  %s5 = inlined_call_operand.vmem [shape: f32[1,32], index: 5, kind: input, shape index: {}]
  %s6 = inlined_call_operand.vmem [shape: f32[16,32], index: 6, kind: output, shape index: {}]
  %s7 = sld [smem:[#allocation0]]
  $region42: #{bert_forward.14} parent=0
    _
  %s9 = ssub.s32 1, %s7
  %s10 = scalar_select 0, %s9, %s7
  // Predicated region
  $region2: #{bert_forward.14} parent=0 // pred_check
    _
  $region3: #{bert_forward.14} parent=0 // pred_check_branch
    %12 = sbr.rel (0) target = $region5
  $region4: #{bert_forward.14} parent=0 // pred_region
    _
  $region5: #{bert_forward.14} parent=0 // pred_fallthru
    _
  // Predicated region
  $region6: #{bert_forward.14} parent=0 // pred_check
    _
  $region7: #{bert_forward.14} parent=0 // pred_check_branch
    %14 = sbr.rel (0) target = $region9
  $region8: #{bert_forward.14} parent=0 // pred_region
    _
  $region9: #{bert_forward.14} parent=0 // pred_fallthru
    _
  // Predicated region
  $region10: #{bert_forward.14} parent=0 // pred_check
    _
  $region11: #{bert_forward.14} parent=0 // pred_check_branch
    %16 = sbr.rel (0) target = $region13
  $region12: #{bert_forward.14} parent=0 // pred_region
    _
  $region13: #{bert_forward.14} parent=0 // pred_fallthru
    _
  // Predicated region
  $region14: #{bert_forward.14} parent=0 // pred_check
    _
  $region15: #{bert_forward.14} parent=0 // pred_check_branch
    %18 = sbr.rel (0) target = $region17
  $region16: #{bert_forward.14} parent=0 // pred_region
    _
  $region17: #{bert_forward.14} parent=0 // pred_fallthru
    _
  // Predicated region
  $region18: #{bert_forward.14} parent=0 // pred_check
    _
  $region19: #{bert_forward.14} parent=0 // pred_check_branch
    %20 = sbr.rel (0) target = $region21
  $region20: #{bert_forward.14} parent=0 // pred_region
    _
  $region21: #{bert_forward.14} parent=0 // pred_fallthru
    _
  // Predicated region
  $region22: #{bert_forward.14} parent=0 // pred_check
    _
  $region23: #{bert_forward.14} parent=0 // pred_check_branch
    %22 = sbr.rel (0) target = $region25
  $region24: #{bert_forward.14} parent=0 // pred_region
    _
  $region25: #{bert_forward.14} parent=0 // pred_fallthru
    _
  %p23 = scmp.eq.s32.totalorder 0, 0
  // Predicated region
  $region26: #{bert_forward.14} parent=0 // pred_check
    %p24 = pneg %p23
  $region27: #{bert_forward.14} parent=0 // pred_check_branch
    %26 = sbr.rel (%p24) target = $region29
  $region28: #{bert_forward.14} parent=0 // pred_region
    %vm27 = vcmask 261120
    %28 = vst.msk [vmem:[#allocation2] sm:$0xff] %vm27, 0.0
    %29 = vst.msk [vmem:[#allocation2 + $0x8] sm:$0xff] %vm27, 0.0
  $region29: #{bert_forward.14} parent=0 // pred_fallthru
    _
  %v30 = vld [vmem:[#allocation2] sm:$0xff]
  %v31 = vld [vmem:[#allocation2 + $0x8] sm:$0xff]
  %v32 = vld [vmem:[%s0] sm:$0xff]
  %v33 = vld [vmem:[%s0 + $0x8] sm:$0xff]
  %v34 = vld [vmem:[%s1] sm:$0xff]
  %v35 = vld [vmem:[%s1 + $0x8] sm:$0xff]
  %v36 = vld [vmem:[%s1 + $0x10] sm:$0xff]
  %v37 = vld [vmem:[%s1 + $0x18] sm:$0xff]
  %vm38 = vcmask 261120
  %v40 = vsel %vm38, %v32, 0
  %v43 = vsel %vm38, %v33, 0
  %45 = vmatprep.subr.mxu0 0.0
  %46 = vmatpush1.msra.mxu0 0.0
  %47 = vmatprep.subr.mxu0 0.0
  %48 = vmatpush1.msra.mxu0 0.0
  %49 = vmatprep.subr.mxu0 0.0
  %50 = vmatpush1.msra.mxu0 0.0
  %51 = vmatprep.subr.mxu0 0.0
  %52 = vmatpush1.msra.mxu0 0.0
  %53 = vmatprep.subr.mxu0 0.0
  %54 = vmatpush1.msra.mxu0 0.0
  %55 = vmatprep.subr.mxu0 0.0
  %56 = vmatpush1.msra.mxu0 0.0
  %57 = vmatprep.subr.mxu0 0.0
  %58 = vmatpush1.msra.mxu0 0.0
  %59 = vmatprep.subr.mxu0 0.0
  %60 = vmatpush1.msra.mxu0 0.0
  %61 = vmatprep.subr.mxu0 0.0
  %62 = vmatpush1.msra.mxu0 0.0
  %63 = vmatprep.subr.mxu0 0.0
  %64 = vmatpush1.msra.mxu0 0.0
  %65 = vmatprep.subr.mxu0 0.0
  %66 = vmatpush1.msra.mxu0 0.0
  %67 = vmatprep.subr.mxu0 0.0
  %68 = vmatpush1.msra.mxu0 0.0
  %69 = vmatprep.subr.mxu0 0.0
  %70 = vmatpush1.msra.mxu0 %v37
  %71 = vmatprep.subr.mxu0 0.0
  %72 = vmatpush1.msra.mxu0 %v36
  %73 = vmatprep.subr.mxu0 0.0
  %74 = vmatpush1.msra.mxu0 %v35
  %75 = vmatprep.subr.mxu0 0.0
  %76 = vmatpush1.msra.mxu0 %v34
  %77 = vmatprep.subr.mxu0 0.0
  %78 = vmatpush2.msra.mxu0 0.0
  %79 = vmatprep.subr.mxu0 0.0
  %80 = vmatpush2.msra.mxu0 0.0
  %81 = vmatprep.subr.mxu0 0.0
  %82 = vmatpush2.msra.mxu0 0.0
  %83 = vmatprep.subr.mxu0 0.0
  %84 = vmatpush2.msra.mxu0 0.0
  %85 = vmatprep.subr.mxu0 0.0
  %86 = vmatpush2.msra.mxu0 0.0
  %87 = vmatprep.subr.mxu0 0.0
  %88 = vmatpush2.msra.mxu0 0.0
  %89 = vmatprep.subr.mxu0 0.0
  %90 = vmatpush2.msra.mxu0 0.0
  %91 = vmatprep.subr.mxu0 0.0
  %92 = vmatpush2.msra.mxu0 0.0
  %93 = vmatprep.subr.mxu0 0.0
  %94 = vmatpush2.msra.mxu0 0.0
  %95 = vmatprep.subr.mxu0 0.0
  %96 = vmatpush2.msra.mxu0 0.0
  %97 = vmatprep.subr.mxu0 0.0
  %98 = vmatpush2.msra.mxu0 0.0
  %99 = vmatprep.subr.mxu0 0.0
  %100 = vmatpush2.msra.mxu0 0.0
  %101 = vmatprep.subr.mxu0 0.0
  %102 = vmatpush2.msra.mxu0 0.0
  %103 = vmatprep.subr.mxu0 0.0
  %104 = vmatpush2.msra.mxu0 0.0
  %105 = vmatprep.subr.mxu0 0.0
  %106 = vmatpush2.msra.mxu0 0.0
  %107 = vmatprep.subr.mxu0 0.0
  %108 = vmatpush2.msra.mxu0 0.0
  %109 = vmatprep.mubr.f32.mxu0 0.0
  %110 = vmatmul.mubr.f32.gmra.mxu0 %v40
  %v111 = vpop.f32.mrf.mxu0
  %v112 = vadd.f32 0.0, %v111
  %v113 = vpop.f32.mrf.mxu0
  %114 = vmatprep.mubr.f32.mxu0 0.0
  %115 = vmatmul.mubr.f32.gmra.mxu0 %v43
  %v116 = vpop.f32.mrf.mxu0
  %v117 = vadd.f32 0.0, %v116
  %v118 = vpop.f32.mrf.mxu0
  %119 = vdwg.mxu0
  %v120 = vadd.f32 %v30, %v112
  %v121 = vadd.f32 %v31, %v117
  %122 = vst.msk [vmem:[#allocation2] sm:$0xff] %vm38, %v120
  %123 = vst.msk [vmem:[#allocation2 + $0x8] sm:$0xff] %vm38, %v121
  // Predicated region
  $region30: #{bert_forward.14} parent=0 // pred_check
    %p124 = pneg %p23
  $region31: #{bert_forward.14} parent=0 // pred_check_branch
    %126 = sbr.rel (%p124) target = $region33
  $region32: #{bert_forward.14} parent=0 // pred_region
    %v127 = vld [vmem:[#allocation2] sm:$0xff]
    %v128 = vld [vmem:[#allocation2 + $0x8] sm:$0xff]
    %v129 = vld [vmem:[%s2] sm:$0x1]
    %v131 = vlaneseq
    %v132 = vshrl.u32 %v131, 7
    %v133 = vsub.s32 0, %v132
    %v134 = vrot.slane %v129, %v133
    %v136 = vadd.f32 %v127, %v134
    %v137 = vadd.f32 %v128, %v134
    %v138 = vld [vmem:[%s3] sm:$0xff]
    %v139 = vld [vmem:[%s3 + $0x8] sm:$0xff]
    %v140 = vadd.f32 %v136, %v138
    %v141 = vadd.f32 %v137, %v139
    %v142 = vsel %vm38, %v140, 0.0
    %143 = vadd.xlane.f32.xlu0 %v142
    %v144 = vpop.xlane.xlu0 %143
    %v145 = vsel %vm38, %v141, 0.0
    %146 = vadd.xlane.f32.xlu0 %v145
    %v147 = vpop.xlane.xlu0 %146
    %v148 = vrcp.pop 32.0
    %v149 = vmul.f32 %v144, %v148
    %v150 = vmul.f32 %v147, %v148
    %v151 = vsub.f32 %v140, %v149
    %v152 = vsub.f32 %v141, %v150
    %v153 = vmul.f32 %v151, %v151
    %v154 = vmul.f32 %v152, %v152
    %v155 = vsel %vm38, %v153, 0.0
    %156 = vadd.xlane.f32.xlu0 %v155
    %v157 = vpop.xlane.xlu0 %156
    %v158 = vsel %vm38, %v154, 0.0
    %159 = vadd.xlane.f32.xlu0 %v158
    %v160 = vpop.xlane.xlu0 %159
    %v161 = vmul.f32 %v157, %v148
    %v162 = vmul.f32 %v160, %v148
    %v163 = vadd.f32 %v161, 1e-05
    %v164 = vadd.f32 %v162, 1e-05
    %v165 = vrsqrt.pop %v163
    %v166 = vrsqrt.pop %v164
    %v167 = vmul.f32 %v151, %v165
    %v168 = vmul.f32 %v152, %v166
    %v169 = vld [vmem:[%s4] sm:$0x1]
    %v171 = vlaneseq
    %v172 = vshrl.u32 %v171, 7
    %v173 = vsub.s32 0, %v172
    %v174 = vrot.slane %v169, %v173
    %v176 = vmul.f32 %v167, %v174
    %v177 = vmul.f32 %v168, %v174
    %v178 = vld [vmem:[%s5] sm:$0x1]
    %v180 = vlaneseq
    %v181 = vshrl.u32 %v180, 7
    %v182 = vsub.s32 0, %v181
    %v183 = vrot.slane %v178, %v182
    %v185 = vadd.f32 %v176, %v183
    %v186 = vadd.f32 %v177, %v183
    %187 = vst.msk [vmem:[%s6] sm:$0xff] %vm38, %v185
    %188 = vst.msk [vmem:[%s6 + $0x8] sm:$0xff] %vm38, %v186
  $region33: #{bert_forward.14} parent=0 // pred_fallthru
    _
  // Predicated region
  $region34: #{bert_forward.14} parent=0 // pred_check
    _
  $region35: #{bert_forward.14} parent=0 // pred_check_branch
    %190 = sbr.rel (0) target = $region37
  $region36: #{bert_forward.14} parent=0 // pred_region
    _
  $region37: #{bert_forward.14} parent=0 // pred_fallthru
    _
  // Predicated region
  $region38: #{bert_forward.14} parent=0 // pred_check
    _
  $region39: #{bert_forward.14} parent=0 // pred_check_branch
    %192 = sbr.rel (0) target = $region41
  $region40: #{bert_forward.14} parent=0 // pred_region
    _
  $region41: #{bert_forward.14} parent=0 // pred_fallthru
    _

// kernel: bert_forward.15
$region0: #{bert_forward.15}
  #allocation0 [shape = 'u32[]', space=smem, size = 0x4, offset = 0x4, fixed_abs, tag = 'smem constant byte address 0x4 - core index']
  #allocation1 [shape = 'u32[144,128]{1,0:T(1,128)}', space=vmem, size = 0x12000, scoped, tag = 'internal scratch']
  #allocation2 [shape = 'f32[16,64]{1,0:T(8,128)}', space=vmem, size = 0x2000, scoped, tag = 'scratch operand']
  %s0 = inlined_call_operand.vmem [shape: f32[16,32], index: 0, kind: input, shape index: {}]
  %s1 = inlined_call_operand.vmem [shape: f32[32,64], index: 1, kind: input, shape index: {}]
  %s2 = inlined_call_operand.vmem [shape: f32[1,64], index: 2, kind: input, shape index: {}]
  %s3 = inlined_call_operand.vmem [shape: f32[16,64], index: 3, kind: output, shape index: {}]
  %s4 = sld [smem:[#allocation0]]
  $region30: #{bert_forward.15} parent=0
    _
  %s6 = ssub.s32 1, %s4
  %s7 = scalar_select 0, %s6, %s4
  // Predicated region
  $region2: #{bert_forward.15} parent=0 // pred_check
    _
  $region3: #{bert_forward.15} parent=0 // pred_check_branch
    %9 = sbr.rel (0) target = $region5
  $region4: #{bert_forward.15} parent=0 // pred_region
    _
  $region5: #{bert_forward.15} parent=0 // pred_fallthru
    _
  // Predicated region
  $region6: #{bert_forward.15} parent=0 // pred_check
    _
  $region7: #{bert_forward.15} parent=0 // pred_check_branch
    %11 = sbr.rel (0) target = $region9
  $region8: #{bert_forward.15} parent=0 // pred_region
    _
  $region9: #{bert_forward.15} parent=0 // pred_fallthru
    _
  // Predicated region
  $region10: #{bert_forward.15} parent=0 // pred_check
    _
  $region11: #{bert_forward.15} parent=0 // pred_check_branch
    %13 = sbr.rel (0) target = $region13
  $region12: #{bert_forward.15} parent=0 // pred_region
    _
  $region13: #{bert_forward.15} parent=0 // pred_fallthru
    _
  %p14 = scmp.eq.s32.totalorder 0, 0
  // Predicated region
  $region14: #{bert_forward.15} parent=0 // pred_check
    %p15 = pneg %p14
  $region15: #{bert_forward.15} parent=0 // pred_check_branch
    %17 = sbr.rel (%p15) target = $region17
  $region16: #{bert_forward.15} parent=0 // pred_region
    %vm18 = vcmask 523264
    %19 = vst.msk [vmem:[#allocation2] sm:$0xff] %vm18, 0.0
    %20 = vst.msk [vmem:[#allocation2 + $0x8] sm:$0xff] %vm18, 0.0
  $region17: #{bert_forward.15} parent=0 // pred_fallthru
    _
  %v21 = vld [vmem:[#allocation2] sm:$0xff]
  %v22 = vld [vmem:[#allocation2 + $0x8] sm:$0xff]
  %v23 = vld [vmem:[%s0] sm:$0xff]
  %v24 = vld [vmem:[%s0 + $0x8] sm:$0xff]
  %v25 = vld [vmem:[%s1] sm:$0xff]
  %v26 = vld [vmem:[%s1 + $0x8] sm:$0xff]
  %v27 = vld [vmem:[%s1 + $0x10] sm:$0xff]
  %v28 = vld [vmem:[%s1 + $0x18] sm:$0xff]
  %vm29 = vcmask 261120
  %v31 = vsel %vm29, %v23, 0
  %v34 = vsel %vm29, %v24, 0
  %36 = vmatprep.subr.mxu0 0.0
  %37 = vmatpush1.msra.mxu0 0.0
  %38 = vmatprep.subr.mxu0 0.0
  %39 = vmatpush1.msra.mxu0 0.0
  %40 = vmatprep.subr.mxu0 0.0
  %41 = vmatpush1.msra.mxu0 0.0
  %42 = vmatprep.subr.mxu0 0.0
  %43 = vmatpush1.msra.mxu0 0.0
  %44 = vmatprep.subr.mxu0 0.0
  %45 = vmatpush1.msra.mxu0 0.0
  %46 = vmatprep.subr.mxu0 0.0
  %47 = vmatpush1.msra.mxu0 0.0
  %48 = vmatprep.subr.mxu0 0.0
  %49 = vmatpush1.msra.mxu0 0.0
  %50 = vmatprep.subr.mxu0 0.0
  %51 = vmatpush1.msra.mxu0 0.0
  %52 = vmatprep.subr.mxu0 0.0
  %53 = vmatpush1.msra.mxu0 0.0
  %54 = vmatprep.subr.mxu0 0.0
  %55 = vmatpush1.msra.mxu0 0.0
  %56 = vmatprep.subr.mxu0 0.0
  %57 = vmatpush1.msra.mxu0 0.0
  %58 = vmatprep.subr.mxu0 0.0
  %59 = vmatpush1.msra.mxu0 0.0
  %60 = vmatprep.subr.mxu0 0.0
  %61 = vmatpush1.msra.mxu0 %v28
  %62 = vmatprep.subr.mxu0 0.0
  %63 = vmatpush1.msra.mxu0 %v27
  %64 = vmatprep.subr.mxu0 0.0
  %65 = vmatpush1.msra.mxu0 %v26
  %66 = vmatprep.subr.mxu0 0.0
  %67 = vmatpush1.msra.mxu0 %v25
  %68 = vmatprep.subr.mxu0 0.0
  %69 = vmatpush2.msra.mxu0 0.0
  %70 = vmatprep.subr.mxu0 0.0
  %71 = vmatpush2.msra.mxu0 0.0
  %72 = vmatprep.subr.mxu0 0.0
  %73 = vmatpush2.msra.mxu0 0.0
  %74 = vmatprep.subr.mxu0 0.0
  %75 = vmatpush2.msra.mxu0 0.0
  %76 = vmatprep.subr.mxu0 0.0
  %77 = vmatpush2.msra.mxu0 0.0
  %78 = vmatprep.subr.mxu0 0.0
  %79 = vmatpush2.msra.mxu0 0.0
  %80 = vmatprep.subr.mxu0 0.0
  %81 = vmatpush2.msra.mxu0 0.0
  %82 = vmatprep.subr.mxu0 0.0
  %83 = vmatpush2.msra.mxu0 0.0
  %84 = vmatprep.subr.mxu0 0.0
  %85 = vmatpush2.msra.mxu0 0.0
  %86 = vmatprep.subr.mxu0 0.0
  %87 = vmatpush2.msra.mxu0 0.0
  %88 = vmatprep.subr.mxu0 0.0
  %89 = vmatpush2.msra.mxu0 0.0
  %90 = vmatprep.subr.mxu0 0.0
  %91 = vmatpush2.msra.mxu0 0.0
  %92 = vmatprep.subr.mxu0 0.0
  %93 = vmatpush2.msra.mxu0 0.0
  %94 = vmatprep.subr.mxu0 0.0
  %95 = vmatpush2.msra.mxu0 0.0
  %96 = vmatprep.subr.mxu0 0.0
  %97 = vmatpush2.msra.mxu0 0.0
  %98 = vmatprep.subr.mxu0 0.0
  %99 = vmatpush2.msra.mxu0 0.0
  %100 = vmatprep.mubr.f32.mxu0 0.0
  %101 = vmatmul.mubr.f32.gmra.mxu0 %v31
  %v102 = vpop.f32.mrf.mxu0
  %v103 = vadd.f32 0.0, %v102
  %v104 = vpop.f32.mrf.mxu0
  %105 = vmatprep.mubr.f32.mxu0 0.0
  %106 = vmatmul.mubr.f32.gmra.mxu0 %v34
  %v107 = vpop.f32.mrf.mxu0
  %v108 = vadd.f32 0.0, %v107
  %v109 = vpop.f32.mrf.mxu0
  %110 = vdwg.mxu0
  %v111 = vadd.f32 %v21, %v103
  %v112 = vadd.f32 %v22, %v108
  %vm113 = vcmask 523264
  %114 = vst.msk [vmem:[#allocation2] sm:$0xff] %vm113, %v111
  %115 = vst.msk [vmem:[#allocation2 + $0x8] sm:$0xff] %vm113, %v112
  // Predicated region
  $region18: #{bert_forward.15} parent=0 // pred_check
    %p116 = pneg %p14
  $region19: #{bert_forward.15} parent=0 // pred_check_branch
    %118 = sbr.rel (%p116) target = $region21
  $region20: #{bert_forward.15} parent=0 // pred_region
    %v119 = vld [vmem:[#allocation2] sm:$0xff]
    %v120 = vld [vmem:[#allocation2 + $0x8] sm:$0xff]
    %v121 = vld [vmem:[%s2] sm:$0x1]
    %v123 = vlaneseq
    %v124 = vshrl.u32 %v123, 7
    %v125 = vsub.s32 0, %v124
    %v126 = vrot.slane %v121, %v125
    %v128 = vadd.f32 %v119, %v126
    %v129 = vadd.f32 %v120, %v126
    %v130 = vmax.f32 %v128, 0.0
    %v131 = vmax.f32 %v129, 0.0
    %132 = vst.msk [vmem:[%s3] sm:$0xff] %vm113, %v130
    %133 = vst.msk [vmem:[%s3 + $0x8] sm:$0xff] %vm113, %v131
  $region21: #{bert_forward.15} parent=0 // pred_fallthru
    _
  // Predicated region
  $region22: #{bert_forward.15} parent=0 // pred_check
    _
  $region23: #{bert_forward.15} parent=0 // pred_check_branch
    %135 = sbr.rel (0) target = $region25
  $region24: #{bert_forward.15} parent=0 // pred_region
    _
  $region25: #{bert_forward.15} parent=0 // pred_fallthru
    _
  // Predicated region
  $region26: #{bert_forward.15} parent=0 // pred_check
    _
  $region27: #{bert_forward.15} parent=0 // pred_check_branch
    %137 = sbr.rel (0) target = $region29
  $region28: #{bert_forward.15} parent=0 // pred_region
    _
  $region29: #{bert_forward.15} parent=0 // pred_fallthru
    _

// kernel: bert_forward.13
$region0: #{bert_forward.13}
  #allocation0 [shape = 'u32[]', space=smem, size = 0x4, offset = 0x4, fixed_abs, tag = 'smem constant byte address 0x4 - core index']
  #allocation1 [shape = 'u32[144,128]{1,0:T(1,128)}', space=vmem, size = 0x12000, scoped, tag = 'internal scratch']
  %s0 = inlined_call_operand.vmem [shape: f32[2,8,96], index: 0, kind: input, shape index: {}]
  %s1 = inlined_call_operand.vmem [shape: f32[2,8,32], index: 1, kind: output, shape index: {}]
  %s2 = sld [smem:[#allocation0]]
  $region37: #{bert_forward.13} parent=0
    _
  %s4 = ssub.s32 1, %s2
  %s5 = scalar_select 0, %s4, %s2
  loop: start=0, step=1, limit=4
  $region2: #{bert_forward.13} parent=0 // loop_pre_header
    _
  $region3: #{bert_forward.13} parent=0 // loop_header
    %s7 = sphi 0, %s11
    %p8 = scmp.ge.s32.totalorder %s7, 4
    %s17 = sphi 0, %s19
    %s20 = sphi 0, %s17
    %s21 = sphi 0, %s20
    %s37 = sphi 0, %s21
    %s43 = sphi 0, %s45
    %s46 = sphi 0, %s43
    %s47 = sphi 0, %s46
    %s63 = sphi 0, %s47
  $region4: #{bert_forward.13} parent=0 // loop_header_branch
    %10 = sbr.rel (%p8) target = $region8
  $region5: #{bert_forward.13} parent=0 // loop_body
    %s12 = ssub.s32 %s7, 1
    %s13 = ssub.s32 %s7, 2
    %s14 = sadd.s32 %s7, 1
    %s15 = ssub.s32 %s7, %s14
    %p16 = scmp.eq.s32.totalorder %s15, 0
    %s18 = sadd.s32 %s17, 1
    %s19 = scalar_select %p16, %s17, %s18
    %p22 = pneg %p16
    %p23 = scmp.eq.s32.totalorder %s7, 1
    %p24 = por %p22, %p23
    %p25 = scmp.ne.s32.totalorder %s17, %s20
    %p26 = scmp.eq.s32.totalorder %s7, 0
    %p27 = por %p25, %p26
    %p28 = scmp.ne.s32.totalorder %s17, %s20
    %p29 = scmp.eq.s32.totalorder %s12, 1
    %p30 = por %p28, %p29
    %p31 = scmp.ne.s32.totalorder %s20, %s21
    %p32 = scmp.eq.s32.totalorder %s12, 0
    %p33 = por %p31, %p32
    %p34 = scmp.ne.s32.totalorder %s20, %s21
    %p35 = scmp.eq.s32.totalorder %s13, 1
    %p36 = por %p34, %p35
    %p38 = scmp.ne.s32.totalorder %s21, %s37
    %p39 = scmp.eq.s32.totalorder %s13, 0
    %p40 = por %p38, %p39
    %s41 = ssub.s32 %s7, %s14
    %p42 = scmp.eq.s32.totalorder %s41, 0
    %s44 = sadd.s32 %s43, 1
    %s45 = scalar_select %p42, %s43, %s44
    %p48 = pneg %p42
    %p49 = scmp.eq.s32.totalorder %s7, 1
    %p50 = por %p48, %p49
    %p51 = scmp.ne.s32.totalorder %s43, %s46
    %p52 = scmp.eq.s32.totalorder %s7, 0
    %p53 = por %p51, %p52
    %p54 = scmp.ne.s32.totalorder %s43, %s46
    %p55 = scmp.eq.s32.totalorder %s12, 1
    %p56 = por %p54, %p55
    %p57 = scmp.ne.s32.totalorder %s46, %s47
    %p58 = scmp.eq.s32.totalorder %s12, 0
    %p59 = por %p57, %p58
    %p60 = scmp.ne.s32.totalorder %s46, %s47
    %p61 = scmp.eq.s32.totalorder %s13, 1
    %p62 = por %p60, %p61
    %p64 = scmp.ne.s32.totalorder %s47, %s63
    %p65 = scmp.eq.s32.totalorder %s13, 0
    %p66 = por %p64, %p65
    %p67 = scmp.le.s32.totalorder 1, %s7
    %p68 = scmp.lt.s32.totalorder %s7, 3
    %p69 = pnand %p67, %p68
    %p70 = pneg %p69
    // Predicated region
    $region9: #{bert_forward.13} parent=5 // pred_check
      _
    $region10: #{bert_forward.13} parent=5 // pred_check_branch
      %72 = sbr.rel (%p69) target = $region12
    $region11: #{bert_forward.13} parent=5 // pred_region
      %s73 = ssub.s32 %s7, 1
    $region12: #{bert_forward.13} parent=5 // pred_fallthru
      _
    %p74 = scmp.lt.s32.totalorder %s7, 2
    // Predicated region
    $region13: #{bert_forward.13} parent=5 // pred_check
      %p75 = pneg %p74
    $region14: #{bert_forward.13} parent=5 // pred_check_branch
      %77 = sbr.rel (%p75) target = $region16
    $region15: #{bert_forward.13} parent=5 // pred_region
      // Predicated region
      $region17: #{bert_forward.13} parent=15 // pred_check
        %p78 = pneg %p27
      $region18: #{bert_forward.13} parent=15 // pred_check_branch
        %80 = sbr.rel (%p78) target = $region20
      $region19: #{bert_forward.13} parent=15 // pred_region
        %p81 = scmp.lt.s32.totalorder %s7, 1
        %s82 = scalar_select %p81, %s7, 1
        %s83 = smul.addr %s82, 8
        %s84 = scalar_lea.vmem %s0, %s83
      $region20: #{bert_forward.13} parent=15 // pred_fallthru
        _
    $region16: #{bert_forward.13} parent=5 // pred_fallthru
      _
    %p85 = scmp.le.s32.totalorder 1, %s7
    %p86 = scmp.lt.s32.totalorder %s7, 3
    %p87 = pnand %p85, %p86
    %p88 = pneg %p87
    // Predicated region
    $region21: #{bert_forward.13} parent=5 // pred_check
      _
    $region22: #{bert_forward.13} parent=5 // pred_check_branch
      %90 = sbr.rel (%p87) target = $region24
    $region23: #{bert_forward.13} parent=5 // pred_region
      %s91 = ssub.s32 %s7, 1
      %p92 = scmp.lt.s32.totalorder %s12, 1
      %s93 = scalar_select %p92, %s12, 1
      %s94 = smul.addr %s93, 8
      %s95 = scalar_lea.vmem %s0, %s94
      %p96 = pneg %p33
      %p97 = pneg %p30
      %p98 = pneg %p59
      %p99 = pneg %p56
      %p100 = scmp.lt.s32.totalorder %s12, 1
      %s101 = scalar_select %p100, %s12, 1
      %s102 = smul.addr %s101, 8
      %s103 = scalar_lea.vmem %s1, %s102
      %p104 = scmp.lt.s32.totalorder %s12, 1
      %s105 = scalar_select %p104, %s12, 1
      %s106 = smul.addr %s105, 8
      %s107 = scalar_lea.vmem %s0, %s106
      %p108 = scmp.lt.s32.totalorder %s12, 1
      %s109 = scalar_select %p108, %s12, 1
      %s110 = smul.addr %s109, 8
      %s111 = scalar_lea.vmem %s1, %s110
      %v112 = vld [vmem:[%s107] sm:$0xff]
      %114 = vrot.lane.b32.xlu0 %v112, 96
      %v115 = vpop.permute.xlu0 %114
      %vm116 = vcmask 64512
      %v117 = vsel %vm116, %v112, 0
      %v119 = vsel %vm116, %v115, 0
      %121 = vmatprep.subr.mxu0 0.0
      %122 = vmatpush1.xpose.msra.mxu0 0.0
      %123 = vmatprep.subr.mxu0 0.0
      %124 = vmatpush1.xpose.msra.mxu0 0.0
      %125 = vmatprep.subr.mxu0 0.0
      %126 = vmatpush1.xpose.msra.mxu0 0.0
      %127 = vmatprep.subr.mxu0 0.0
      %128 = vmatpush1.xpose.msra.mxu0 0.0
      %129 = vmatprep.subr.mxu0 0.0
      %130 = vmatpush1.xpose.msra.mxu0 0.0
      %131 = vmatprep.subr.mxu0 0.0
      %132 = vmatpush1.xpose.msra.mxu0 0.0
      %133 = vmatprep.subr.mxu0 0.0
      %134 = vmatpush1.xpose.msra.mxu0 0.0
      %135 = vmatprep.subr.mxu0 0.0
      %136 = vmatpush1.xpose.msra.mxu0 0.0
      %137 = vmatprep.subr.mxu0 0.0
      %138 = vmatpush1.xpose.msra.mxu0 0.0
      %139 = vmatprep.subr.mxu0 0.0
      %140 = vmatpush1.xpose.msra.mxu0 0.0
      %141 = vmatprep.subr.mxu0 0.0
      %142 = vmatpush1.xpose.msra.mxu0 0.0
      %143 = vmatprep.subr.mxu0 0.0
      %144 = vmatpush1.xpose.msra.mxu0 0.0
      %145 = vmatprep.subr.mxu0 0.0
      %146 = vmatpush1.xpose.msra.mxu0 0.0
      %147 = vmatprep.subr.mxu0 0.0
      %148 = vmatpush1.xpose.msra.mxu0 0.0
      %149 = vmatprep.subr.mxu0 0.0
      %150 = vmatpush1.xpose.msra.mxu0 0.0
      %151 = vmatprep.subr.mxu0 0.0
      %152 = vmatpush1.xpose.msra.mxu0 %v119
      %153 = vmatprep.subr.mxu0 0.0
      %154 = vmatpush2.xpose.msra.mxu0 0.0
      %155 = vmatprep.subr.mxu0 0.0
      %156 = vmatpush2.xpose.msra.mxu0 0.0
      %157 = vmatprep.subr.mxu0 0.0
      %158 = vmatpush2.xpose.msra.mxu0 0.0
      %159 = vmatprep.subr.mxu0 0.0
      %160 = vmatpush2.xpose.msra.mxu0 0.0
      %161 = vmatprep.subr.mxu0 0.0
      %162 = vmatpush2.xpose.msra.mxu0 0.0
      %163 = vmatprep.subr.mxu0 0.0
      %164 = vmatpush2.xpose.msra.mxu0 0.0
      %165 = vmatprep.subr.mxu0 0.0
      %166 = vmatpush2.xpose.msra.mxu0 0.0
      %167 = vmatprep.subr.mxu0 0.0
      %168 = vmatpush2.xpose.msra.mxu0 0.0
      %169 = vmatprep.subr.mxu0 0.0
      %170 = vmatpush2.xpose.msra.mxu0 0.0
      %171 = vmatprep.subr.mxu0 0.0
      %172 = vmatpush2.xpose.msra.mxu0 0.0
      %173 = vmatprep.subr.mxu0 0.0
      %174 = vmatpush2.xpose.msra.mxu0 0.0
      %175 = vmatprep.subr.mxu0 0.0
      %176 = vmatpush2.xpose.msra.mxu0 0.0
      %177 = vmatprep.subr.mxu0 0.0
      %178 = vmatpush2.xpose.msra.mxu0 0.0
      %179 = vmatprep.subr.mxu0 0.0
      %180 = vmatpush2.xpose.msra.mxu0 0.0
      %181 = vmatprep.subr.mxu0 0.0
      %182 = vmatpush2.xpose.msra.mxu0 0.0
      %183 = vmatprep.subr.mxu0 0.0
      %184 = vmatpush2.xpose.msra.mxu0 0.0
      %185 = vmatprep.mubr.f32.mxu0 0.0
      %186 = vmatmul.mubr.f32.gmra.mxu0 %v117
      %v187 = vpop.f32.mrf.mxu0
      %v188 = vadd.f32 0.0, %v187
      %v189 = vpop.f32.mrf.mxu0
      %190 = vdwg.mxu0
      %v191 = vmul.f32 %v188, 0.35355338
      %v192 = vsel %vm116, %v191, -inf
      %193 = vmax.xlane.f32.xlu0 %v192
      %v194 = vpop.xlane.xlu0 %193
      %v195 = vsub.f32 %v191, %v194
      %v196 = vmul.f32 %v195, 1.442695
      %v197 = vpow.pop %v196
      %v198 = vsel %vm116, %v197, 0.0
      %199 = vadd.xlane.f32.xlu0 %v198
      %v200 = vpop.xlane.xlu0 %199
      %v201 = vrcp.pop %v200
      %v202 = vmul.f32 %v197, %v201
      %203 = vrot.lane.b32.xlu0 %v112, 64
      %v204 = vpop.permute.xlu0 %203
      %v207 = vsel %vm116, %v202, 0
      %209 = vmatprep.subr.mxu0 0.0
      %210 = vmatpush1.msra.mxu0 0.0
      %211 = vmatprep.subr.mxu0 0.0
      %212 = vmatpush1.msra.mxu0 0.0
      %213 = vmatprep.subr.mxu0 0.0
      %214 = vmatpush1.msra.mxu0 0.0
      %215 = vmatprep.subr.mxu0 0.0
      %216 = vmatpush1.msra.mxu0 0.0
      %217 = vmatprep.subr.mxu0 0.0
      %218 = vmatpush1.msra.mxu0 0.0
      %219 = vmatprep.subr.mxu0 0.0
      %220 = vmatpush1.msra.mxu0 0.0
      %221 = vmatprep.subr.mxu0 0.0
      %222 = vmatpush1.msra.mxu0 0.0
      %223 = vmatprep.subr.mxu0 0.0
      %224 = vmatpush1.msra.mxu0 0.0
      %225 = vmatprep.subr.mxu0 0.0
      %226 = vmatpush1.msra.mxu0 0.0
      %227 = vmatprep.subr.mxu0 0.0
      %228 = vmatpush1.msra.mxu0 0.0
      %229 = vmatprep.subr.mxu0 0.0
      %230 = vmatpush1.msra.mxu0 0.0
      %231 = vmatprep.subr.mxu0 0.0
      %232 = vmatpush1.msra.mxu0 0.0
      %233 = vmatprep.subr.mxu0 0.0
      %234 = vmatpush1.msra.mxu0 0.0
      %235 = vmatprep.subr.mxu0 0.0
      %236 = vmatpush1.msra.mxu0 0.0
      %237 = vmatprep.subr.mxu0 0.0
      %238 = vmatpush1.msra.mxu0 0.0
      %239 = vmatprep.subr.mxu0 0.0
      %240 = vmatpush1.msra.mxu0 %v204
      %241 = vmatprep.subr.mxu0 0.0
      %242 = vmatpush2.msra.mxu0 0.0
      %243 = vmatprep.subr.mxu0 0.0
      %244 = vmatpush2.msra.mxu0 0.0
      %245 = vmatprep.subr.mxu0 0.0
      %246 = vmatpush2.msra.mxu0 0.0
      %247 = vmatprep.subr.mxu0 0.0
      %248 = vmatpush2.msra.mxu0 0.0
      %249 = vmatprep.subr.mxu0 0.0
      %250 = vmatpush2.msra.mxu0 0.0
      %251 = vmatprep.subr.mxu0 0.0
      %252 = vmatpush2.msra.mxu0 0.0
      %253 = vmatprep.subr.mxu0 0.0
      %254 = vmatpush2.msra.mxu0 0.0
      %255 = vmatprep.subr.mxu0 0.0
      %256 = vmatpush2.msra.mxu0 0.0
      %257 = vmatprep.subr.mxu0 0.0
      %258 = vmatpush2.msra.mxu0 0.0
      %259 = vmatprep.subr.mxu0 0.0
      %260 = vmatpush2.msra.mxu0 0.0
      %261 = vmatprep.subr.mxu0 0.0
      %262 = vmatpush2.msra.mxu0 0.0
      %263 = vmatprep.subr.mxu0 0.0
      %264 = vmatpush2.msra.mxu0 0.0
      %265 = vmatprep.subr.mxu0 0.0
      %266 = vmatpush2.msra.mxu0 0.0
      %267 = vmatprep.subr.mxu0 0.0
      %268 = vmatpush2.msra.mxu0 0.0
      %269 = vmatprep.subr.mxu0 0.0
      %270 = vmatpush2.msra.mxu0 0.0
      %271 = vmatprep.subr.mxu0 0.0
      %272 = vmatpush2.msra.mxu0 0.0
      %273 = vmatprep.mubr.f32.mxu0 0.0
      %274 = vmatmul.mubr.f32.gmra.mxu0 %v207
      %v275 = vpop.f32.mrf.mxu0
      %v276 = vadd.f32 0.0, %v275
      %v277 = vpop.f32.mrf.mxu0
      %278 = vdwg.mxu0
      %279 = vst.msk [vmem:[%s111] sm:$0xff] %vm116, %v276
      %280 = vrot.lane.b32.xlu0 %v112, 120
      %v281 = vpop.permute.xlu0 %280
      %282 = vrot.lane.b32.xlu0 %v112, 88
      %v283 = vpop.permute.xlu0 %282
      %v284 = vsel %vm116, %v281, 0
      %v286 = vsel %vm116, %v283, 0
      %288 = vmatprep.subr.mxu0 0.0
      %289 = vmatpush1.xpose.msra.mxu0 0.0
      %290 = vmatprep.subr.mxu0 0.0
      %291 = vmatpush1.xpose.msra.mxu0 0.0
      %292 = vmatprep.subr.mxu0 0.0
      %293 = vmatpush1.xpose.msra.mxu0 0.0
      %294 = vmatprep.subr.mxu0 0.0
      %295 = vmatpush1.xpose.msra.mxu0 0.0
      %296 = vmatprep.subr.mxu0 0.0
      %297 = vmatpush1.xpose.msra.mxu0 0.0
      %298 = vmatprep.subr.mxu0 0.0
      %299 = vmatpush1.xpose.msra.mxu0 0.0
      %300 = vmatprep.subr.mxu0 0.0
      %301 = vmatpush1.xpose.msra.mxu0 0.0
      %302 = vmatprep.subr.mxu0 0.0
      %303 = vmatpush1.xpose.msra.mxu0 0.0
      %304 = vmatprep.subr.mxu0 0.0
      %305 = vmatpush1.xpose.msra.mxu0 0.0
      %306 = vmatprep.subr.mxu0 0.0
      %307 = vmatpush1.xpose.msra.mxu0 0.0
      %308 = vmatprep.subr.mxu0 0.0
      %309 = vmatpush1.xpose.msra.mxu0 0.0
      %310 = vmatprep.subr.mxu0 0.0
      %311 = vmatpush1.xpose.msra.mxu0 0.0
      %312 = vmatprep.subr.mxu0 0.0
      %313 = vmatpush1.xpose.msra.mxu0 0.0
      %314 = vmatprep.subr.mxu0 0.0
      %315 = vmatpush1.xpose.msra.mxu0 0.0
      %316 = vmatprep.subr.mxu0 0.0
      %317 = vmatpush1.xpose.msra.mxu0 0.0
      %318 = vmatprep.subr.mxu0 0.0
      %319 = vmatpush1.xpose.msra.mxu0 %v286
      %320 = vmatprep.subr.mxu0 0.0
      %321 = vmatpush2.xpose.msra.mxu0 0.0
      %322 = vmatprep.subr.mxu0 0.0
      %323 = vmatpush2.xpose.msra.mxu0 0.0
      %324 = vmatprep.subr.mxu0 0.0
      %325 = vmatpush2.xpose.msra.mxu0 0.0
      %326 = vmatprep.subr.mxu0 0.0
      %327 = vmatpush2.xpose.msra.mxu0 0.0
      %328 = vmatprep.subr.mxu0 0.0
      %329 = vmatpush2.xpose.msra.mxu0 0.0
      %330 = vmatprep.subr.mxu0 0.0
      %331 = vmatpush2.xpose.msra.mxu0 0.0
      %332 = vmatprep.subr.mxu0 0.0
      %333 = vmatpush2.xpose.msra.mxu0 0.0
      %334 = vmatprep.subr.mxu0 0.0
      %335 = vmatpush2.xpose.msra.mxu0 0.0
      %336 = vmatprep.subr.mxu0 0.0
      %337 = vmatpush2.xpose.msra.mxu0 0.0
      %338 = vmatprep.subr.mxu0 0.0
      %339 = vmatpush2.xpose.msra.mxu0 0.0
      %340 = vmatprep.subr.mxu0 0.0
      %341 = vmatpush2.xpose.msra.mxu0 0.0
      %342 = vmatprep.subr.mxu0 0.0
      %343 = vmatpush2.xpose.msra.mxu0 0.0
      %344 = vmatprep.subr.mxu0 0.0
      %345 = vmatpush2.xpose.msra.mxu0 0.0
      %346 = vmatprep.subr.mxu0 0.0
      %347 = vmatpush2.xpose.msra.mxu0 0.0
      %348 = vmatprep.subr.mxu0 0.0
      %349 = vmatpush2.xpose.msra.mxu0 0.0
      %350 = vmatprep.subr.mxu0 0.0
      %351 = vmatpush2.xpose.msra.mxu0 0.0
      %352 = vmatprep.mubr.f32.mxu0 0.0
      %353 = vmatmul.mubr.f32.gmra.mxu0 %v284
      %v354 = vpop.f32.mrf.mxu0
      %v355 = vadd.f32 0.0, %v354
      %v356 = vpop.f32.mrf.mxu0
      %357 = vdwg.mxu0
      %v358 = vmul.f32 %v355, 0.35355338
      %v359 = vsel %vm116, %v358, -inf
      %360 = vmax.xlane.f32.xlu0 %v359
      %v361 = vpop.xlane.xlu0 %360
      %v362 = vsub.f32 %v358, %v361
      %v363 = vmul.f32 %v362, 1.442695
      %v364 = vpow.pop %v363
      %v365 = vsel %vm116, %v364, 0.0
      %366 = vadd.xlane.f32.xlu0 %v365
      %v367 = vpop.xlane.xlu0 %366
      %v368 = vrcp.pop %v367
      %v369 = vmul.f32 %v364, %v368
      %370 = vrot.lane.b32.xlu0 %v112, 56
      %v371 = vpop.permute.xlu0 %370
      %v374 = vsel %vm116, %v369, 0
      %376 = vmatprep.subr.mxu0 0.0
      %377 = vmatpush1.msra.mxu0 0.0
      %378 = vmatprep.subr.mxu0 0.0
      %379 = vmatpush1.msra.mxu0 0.0
      %380 = vmatprep.subr.mxu0 0.0
      %381 = vmatpush1.msra.mxu0 0.0
      %382 = vmatprep.subr.mxu0 0.0
      %383 = vmatpush1.msra.mxu0 0.0
      %384 = vmatprep.subr.mxu0 0.0
      %385 = vmatpush1.msra.mxu0 0.0
      %386 = vmatprep.subr.mxu0 0.0
      %387 = vmatpush1.msra.mxu0 0.0
      %388 = vmatprep.subr.mxu0 0.0
      %389 = vmatpush1.msra.mxu0 0.0
      %390 = vmatprep.subr.mxu0 0.0
      %391 = vmatpush1.msra.mxu0 0.0
      %392 = vmatprep.subr.mxu0 0.0
      %393 = vmatpush1.msra.mxu0 0.0
      %394 = vmatprep.subr.mxu0 0.0
      %395 = vmatpush1.msra.mxu0 0.0
      %396 = vmatprep.subr.mxu0 0.0
      %397 = vmatpush1.msra.mxu0 0.0
      %398 = vmatprep.subr.mxu0 0.0
      %399 = vmatpush1.msra.mxu0 0.0
      %400 = vmatprep.subr.mxu0 0.0
      %401 = vmatpush1.msra.mxu0 0.0
      %402 = vmatprep.subr.mxu0 0.0
      %403 = vmatpush1.msra.mxu0 0.0
      %404 = vmatprep.subr.mxu0 0.0
      %405 = vmatpush1.msra.mxu0 0.0
      %406 = vmatprep.subr.mxu0 0.0
      %407 = vmatpush1.msra.mxu0 %v371
      %408 = vmatprep.subr.mxu0 0.0
      %409 = vmatpush2.msra.mxu0 0.0
      %410 = vmatprep.subr.mxu0 0.0
      %411 = vmatpush2.msra.mxu0 0.0
      %412 = vmatprep.subr.mxu0 0.0
      %413 = vmatpush2.msra.mxu0 0.0
      %414 = vmatprep.subr.mxu0 0.0
      %415 = vmatpush2.msra.mxu0 0.0
      %416 = vmatprep.subr.mxu0 0.0
      %417 = vmatpush2.msra.mxu0 0.0
      %418 = vmatprep.subr.mxu0 0.0
      %419 = vmatpush2.msra.mxu0 0.0
      %420 = vmatprep.subr.mxu0 0.0
      %421 = vmatpush2.msra.mxu0 0.0
      %422 = vmatprep.subr.mxu0 0.0
      %423 = vmatpush2.msra.mxu0 0.0
      %424 = vmatprep.subr.mxu0 0.0
      %425 = vmatpush2.msra.mxu0 0.0
      %426 = vmatprep.subr.mxu0 0.0
      %427 = vmatpush2.msra.mxu0 0.0
      %428 = vmatprep.subr.mxu0 0.0
      %429 = vmatpush2.msra.mxu0 0.0
      %430 = vmatprep.subr.mxu0 0.0
      %431 = vmatpush2.msra.mxu0 0.0
      %432 = vmatprep.subr.mxu0 0.0
      %433 = vmatpush2.msra.mxu0 0.0
      %434 = vmatprep.subr.mxu0 0.0
      %435 = vmatpush2.msra.mxu0 0.0
      %436 = vmatprep.subr.mxu0 0.0
      %437 = vmatpush2.msra.mxu0 0.0
      %438 = vmatprep.subr.mxu0 0.0
      %439 = vmatpush2.msra.mxu0 0.0
      %440 = vmatprep.mubr.f32.mxu0 0.0
      %441 = vmatmul.mubr.f32.gmra.mxu0 %v374
      %v442 = vpop.f32.mrf.mxu0
      %v443 = vadd.f32 0.0, %v442
      %v444 = vpop.f32.mrf.mxu0
      %445 = vdwg.mxu0
      %447 = vrot.lane.b32.xlu0 %v443, 8
      %v448 = vpop.permute.xlu0 %447
      %vm450 = vcmask 130112
      %451 = vst.msk [vmem:[%s111] sm:$0xff] %vm450, %v448
      %452 = vrot.lane.b32.xlu0 %v112, 112
      %v453 = vpop.permute.xlu0 %452
      %454 = vrot.lane.b32.xlu0 %v112, 80
      %v455 = vpop.permute.xlu0 %454
      %v456 = vsel %vm116, %v453, 0
      %v458 = vsel %vm116, %v455, 0
      %460 = vmatprep.subr.mxu0 0.0
      %461 = vmatpush1.xpose.msra.mxu0 0.0
      %462 = vmatprep.subr.mxu0 0.0
      %463 = vmatpush1.xpose.msra.mxu0 0.0
      %464 = vmatprep.subr.mxu0 0.0
      %465 = vmatpush1.xpose.msra.mxu0 0.0
      %466 = vmatprep.subr.mxu0 0.0
      %467 = vmatpush1.xpose.msra.mxu0 0.0
      %468 = vmatprep.subr.mxu0 0.0
      %469 = vmatpush1.xpose.msra.mxu0 0.0
      %470 = vmatprep.subr.mxu0 0.0
      %471 = vmatpush1.xpose.msra.mxu0 0.0
      %472 = vmatprep.subr.mxu0 0.0
      %473 = vmatpush1.xpose.msra.mxu0 0.0
      %474 = vmatprep.subr.mxu0 0.0
      %475 = vmatpush1.xpose.msra.mxu0 0.0
      %476 = vmatprep.subr.mxu0 0.0
      %477 = vmatpush1.xpose.msra.mxu0 0.0
      %478 = vmatprep.subr.mxu0 0.0
      %479 = vmatpush1.xpose.msra.mxu0 0.0
      %480 = vmatprep.subr.mxu0 0.0
      %481 = vmatpush1.xpose.msra.mxu0 0.0
      %482 = vmatprep.subr.mxu0 0.0
      %483 = vmatpush1.xpose.msra.mxu0 0.0
      %484 = vmatprep.subr.mxu0 0.0
      %485 = vmatpush1.xpose.msra.mxu0 0.0
      %486 = vmatprep.subr.mxu0 0.0
      %487 = vmatpush1.xpose.msra.mxu0 0.0
      %488 = vmatprep.subr.mxu0 0.0
      %489 = vmatpush1.xpose.msra.mxu0 0.0
      %490 = vmatprep.subr.mxu0 0.0
      %491 = vmatpush1.xpose.msra.mxu0 %v458
      %492 = vmatprep.subr.mxu0 0.0
      %493 = vmatpush2.xpose.msra.mxu0 0.0
      %494 = vmatprep.subr.mxu0 0.0
      %495 = vmatpush2.xpose.msra.mxu0 0.0
      %496 = vmatprep.subr.mxu0 0.0
      %497 = vmatpush2.xpose.msra.mxu0 0.0
      %498 = vmatprep.subr.mxu0 0.0
      %499 = vmatpush2.xpose.msra.mxu0 0.0
      %500 = vmatprep.subr.mxu0 0.0
      %501 = vmatpush2.xpose.msra.mxu0 0.0
      %502 = vmatprep.subr.mxu0 0.0
      %503 = vmatpush2.xpose.msra.mxu0 0.0
      %504 = vmatprep.subr.mxu0 0.0
      %505 = vmatpush2.xpose.msra.mxu0 0.0
      %506 = vmatprep.subr.mxu0 0.0
      %507 = vmatpush2.xpose.msra.mxu0 0.0
      %508 = vmatprep.subr.mxu0 0.0
      %509 = vmatpush2.xpose.msra.mxu0 0.0
      %510 = vmatprep.subr.mxu0 0.0
      %511 = vmatpush2.xpose.msra.mxu0 0.0
      %512 = vmatprep.subr.mxu0 0.0
      %513 = vmatpush2.xpose.msra.mxu0 0.0
      %514 = vmatprep.subr.mxu0 0.0
      %515 = vmatpush2.xpose.msra.mxu0 0.0
      %516 = vmatprep.subr.mxu0 0.0
      %517 = vmatpush2.xpose.msra.mxu0 0.0
      %518 = vmatprep.subr.mxu0 0.0
      %519 = vmatpush2.xpose.msra.mxu0 0.0
      %520 = vmatprep.subr.mxu0 0.0
      %521 = vmatpush2.xpose.msra.mxu0 0.0
      %522 = vmatprep.subr.mxu0 0.0
      %523 = vmatpush2.xpose.msra.mxu0 0.0
      %524 = vmatprep.mubr.f32.mxu0 0.0
      %525 = vmatmul.mubr.f32.gmra.mxu0 %v456
      %v526 = vpop.f32.mrf.mxu0
      %v527 = vadd.f32 0.0, %v526
      %v528 = vpop.f32.mrf.mxu0
      %529 = vdwg.mxu0
      %v530 = vmul.f32 %v527, 0.35355338
      %v531 = vsel %vm116, %v530, -inf
      %532 = vmax.xlane.f32.xlu0 %v531
      %v533 = vpop.xlane.xlu0 %532
      %v534 = vsub.f32 %v530, %v533
      %v535 = vmul.f32 %v534, 1.442695
      %v536 = vpow.pop %v535
      %v537 = vsel %vm116, %v536, 0.0
      %538 = vadd.xlane.f32.xlu0 %v537
      %v539 = vpop.xlane.xlu0 %538
      %v540 = vrcp.pop %v539
      %v541 = vmul.f32 %v536, %v540
      %542 = vrot.lane.b32.xlu0 %v112, 48
      %v543 = vpop.permute.xlu0 %542
      %v546 = vsel %vm116, %v541, 0
      %548 = vmatprep.subr.mxu0 0.0
      %549 = vmatpush1.msra.mxu0 0.0
      %550 = vmatprep.subr.mxu0 0.0
      %551 = vmatpush1.msra.mxu0 0.0
      %552 = vmatprep.subr.mxu0 0.0
      %553 = vmatpush1.msra.mxu0 0.0
      %554 = vmatprep.subr.mxu0 0.0
      %555 = vmatpush1.msra.mxu0 0.0
      %556 = vmatprep.subr.mxu0 0.0
      %557 = vmatpush1.msra.mxu0 0.0
      %558 = vmatprep.subr.mxu0 0.0
      %559 = vmatpush1.msra.mxu0 0.0
      %560 = vmatprep.subr.mxu0 0.0
      %561 = vmatpush1.msra.mxu0 0.0
      %562 = vmatprep.subr.mxu0 0.0
      %563 = vmatpush1.msra.mxu0 0.0
      %564 = vmatprep.subr.mxu0 0.0
      %565 = vmatpush1.msra.mxu0 0.0
      %566 = vmatprep.subr.mxu0 0.0
      %567 = vmatpush1.msra.mxu0 0.0
      %568 = vmatprep.subr.mxu0 0.0
      %569 = vmatpush1.msra.mxu0 0.0
      %570 = vmatprep.subr.mxu0 0.0
      %571 = vmatpush1.msra.mxu0 0.0
      %572 = vmatprep.subr.mxu0 0.0
      %573 = vmatpush1.msra.mxu0 0.0
      %574 = vmatprep.subr.mxu0 0.0
      %575 = vmatpush1.msra.mxu0 0.0
      %576 = vmatprep.subr.mxu0 0.0
      %577 = vmatpush1.msra.mxu0 0.0
      %578 = vmatprep.subr.mxu0 0.0
      %579 = vmatpush1.msra.mxu0 %v543
      %580 = vmatprep.subr.mxu0 0.0
      %581 = vmatpush2.msra.mxu0 0.0
      %582 = vmatprep.subr.mxu0 0.0
      %583 = vmatpush2.msra.mxu0 0.0
      %584 = vmatprep.subr.mxu0 0.0
      %585 = vmatpush2.msra.mxu0 0.0
      %586 = vmatprep.subr.mxu0 0.0
      %587 = vmatpush2.msra.mxu0 0.0
      %588 = vmatprep.subr.mxu0 0.0
      %589 = vmatpush2.msra.mxu0 0.0
      %590 = vmatprep.subr.mxu0 0.0
      %591 = vmatpush2.msra.mxu0 0.0
      %592 = vmatprep.subr.mxu0 0.0
      %593 = vmatpush2.msra.mxu0 0.0
      %594 = vmatprep.subr.mxu0 0.0
      %595 = vmatpush2.msra.mxu0 0.0
      %596 = vmatprep.subr.mxu0 0.0
      %597 = vmatpush2.msra.mxu0 0.0
      %598 = vmatprep.subr.mxu0 0.0
      %599 = vmatpush2.msra.mxu0 0.0
      %600 = vmatprep.subr.mxu0 0.0
      %601 = vmatpush2.msra.mxu0 0.0
      %602 = vmatprep.subr.mxu0 0.0
      %603 = vmatpush2.msra.mxu0 0.0
      %604 = vmatprep.subr.mxu0 0.0
      %605 = vmatpush2.msra.mxu0 0.0
      %606 = vmatprep.subr.mxu0 0.0
      %607 = vmatpush2.msra.mxu0 0.0
      %608 = vmatprep.subr.mxu0 0.0
      %609 = vmatpush2.msra.mxu0 0.0
      %610 = vmatprep.subr.mxu0 0.0
      %611 = vmatpush2.msra.mxu0 0.0
      %612 = vmatprep.mubr.f32.mxu0 0.0
      %613 = vmatmul.mubr.f32.gmra.mxu0 %v546
      %v614 = vpop.f32.mrf.mxu0
      %v615 = vadd.f32 0.0, %v614
      %v616 = vpop.f32.mrf.mxu0
      %617 = vdwg.mxu0
      %619 = vrot.lane.b32.xlu0 %v615, 16
      %v620 = vpop.permute.xlu0 %619
      %vm622 = vcmask 195712
      %623 = vst.msk [vmem:[%s111] sm:$0xff] %vm622, %v620
      %624 = vrot.lane.b32.xlu0 %v112, 104
      %v625 = vpop.permute.xlu0 %624
      %626 = vrot.lane.b32.xlu0 %v112, 72
      %v627 = vpop.permute.xlu0 %626
      %v628 = vsel %vm116, %v625, 0
      %v630 = vsel %vm116, %v627, 0
      %632 = vmatprep.subr.mxu0 0.0
      %633 = vmatpush1.xpose.msra.mxu0 0.0
      %634 = vmatprep.subr.mxu0 0.0
      %635 = vmatpush1.xpose.msra.mxu0 0.0
      %636 = vmatprep.subr.mxu0 0.0
      %637 = vmatpush1.xpose.msra.mxu0 0.0
      %638 = vmatprep.subr.mxu0 0.0
      %639 = vmatpush1.xpose.msra.mxu0 0.0
      %640 = vmatprep.subr.mxu0 0.0
      %641 = vmatpush1.xpose.msra.mxu0 0.0
      %642 = vmatprep.subr.mxu0 0.0
      %643 = vmatpush1.xpose.msra.mxu0 0.0
      %644 = vmatprep.subr.mxu0 0.0
      %645 = vmatpush1.xpose.msra.mxu0 0.0
      %646 = vmatprep.subr.mxu0 0.0
      %647 = vmatpush1.xpose.msra.mxu0 0.0
      %648 = vmatprep.subr.mxu0 0.0
      %649 = vmatpush1.xpose.msra.mxu0 0.0
      %650 = vmatprep.subr.mxu0 0.0
      %651 = vmatpush1.xpose.msra.mxu0 0.0
      %652 = vmatprep.subr.mxu0 0.0
      %653 = vmatpush1.xpose.msra.mxu0 0.0
      %654 = vmatprep.subr.mxu0 0.0
      %655 = vmatpush1.xpose.msra.mxu0 0.0
      %656 = vmatprep.subr.mxu0 0.0
      %657 = vmatpush1.xpose.msra.mxu0 0.0
      %658 = vmatprep.subr.mxu0 0.0
      %659 = vmatpush1.xpose.msra.mxu0 0.0
      %660 = vmatprep.subr.mxu0 0.0
      %661 = vmatpush1.xpose.msra.mxu0 0.0
      %662 = vmatprep.subr.mxu0 0.0
      %663 = vmatpush1.xpose.msra.mxu0 %v630
      %664 = vmatprep.subr.mxu0 0.0
      %665 = vmatpush2.xpose.msra.mxu0 0.0
      %666 = vmatprep.subr.mxu0 0.0
      %667 = vmatpush2.xpose.msra.mxu0 0.0
      %668 = vmatprep.subr.mxu0 0.0
      %669 = vmatpush2.xpose.msra.mxu0 0.0
      %670 = vmatprep.subr.mxu0 0.0
      %671 = vmatpush2.xpose.msra.mxu0 0.0
      %672 = vmatprep.subr.mxu0 0.0
      %673 = vmatpush2.xpose.msra.mxu0 0.0
      %674 = vmatprep.subr.mxu0 0.0
      %675 = vmatpush2.xpose.msra.mxu0 0.0
      %676 = vmatprep.subr.mxu0 0.0
      %677 = vmatpush2.xpose.msra.mxu0 0.0
      %678 = vmatprep.subr.mxu0 0.0
      %679 = vmatpush2.xpose.msra.mxu0 0.0
      %680 = vmatprep.subr.mxu0 0.0
      %681 = vmatpush2.xpose.msra.mxu0 0.0
      %682 = vmatprep.subr.mxu0 0.0
      %683 = vmatpush2.xpose.msra.mxu0 0.0
      %684 = vmatprep.subr.mxu0 0.0
      %685 = vmatpush2.xpose.msra.mxu0 0.0
      %686 = vmatprep.subr.mxu0 0.0
      %687 = vmatpush2.xpose.msra.mxu0 0.0
      %688 = vmatprep.subr.mxu0 0.0
      %689 = vmatpush2.xpose.msra.mxu0 0.0
      %690 = vmatprep.subr.mxu0 0.0
      %691 = vmatpush2.xpose.msra.mxu0 0.0
      %692 = vmatprep.subr.mxu0 0.0
      %693 = vmatpush2.xpose.msra.mxu0 0.0
      %694 = vmatprep.subr.mxu0 0.0
      %695 = vmatpush2.xpose.msra.mxu0 0.0
      %696 = vmatprep.mubr.f32.mxu0 0.0
      %697 = vmatmul.mubr.f32.gmra.mxu0 %v628
      %v698 = vpop.f32.mrf.mxu0
      %v699 = vadd.f32 0.0, %v698
      %v700 = vpop.f32.mrf.mxu0
      %701 = vdwg.mxu0
      %v702 = vmul.f32 %v699, 0.35355338
      %v703 = vsel %vm116, %v702, -inf
      %704 = vmax.xlane.f32.xlu0 %v703
      %v705 = vpop.xlane.xlu0 %704
      %v706 = vsub.f32 %v702, %v705
      %v707 = vmul.f32 %v706, 1.442695
      %v708 = vpow.pop %v707
      %v709 = vsel %vm116, %v708, 0.0
      %710 = vadd.xlane.f32.xlu0 %v709
      %v711 = vpop.xlane.xlu0 %710
      %v712 = vrcp.pop %v711
      %v713 = vmul.f32 %v708, %v712
      %714 = vrot.lane.b32.xlu0 %v112, 40
      %v715 = vpop.permute.xlu0 %714
      %v718 = vsel %vm116, %v713, 0
      %720 = vmatprep.subr.mxu0 0.0
      %721 = vmatpush1.msra.mxu0 0.0
      %722 = vmatprep.subr.mxu0 0.0
      %723 = vmatpush1.msra.mxu0 0.0
      %724 = vmatprep.subr.mxu0 0.0
      %725 = vmatpush1.msra.mxu0 0.0
      %726 = vmatprep.subr.mxu0 0.0
      %727 = vmatpush1.msra.mxu0 0.0
      %728 = vmatprep.subr.mxu0 0.0
      %729 = vmatpush1.msra.mxu0 0.0
      %730 = vmatprep.subr.mxu0 0.0
      %731 = vmatpush1.msra.mxu0 0.0
      %732 = vmatprep.subr.mxu0 0.0
      %733 = vmatpush1.msra.mxu0 0.0
      %734 = vmatprep.subr.mxu0 0.0
      %735 = vmatpush1.msra.mxu0 0.0
      %736 = vmatprep.subr.mxu0 0.0
      %737 = vmatpush1.msra.mxu0 0.0
      %738 = vmatprep.subr.mxu0 0.0
      %739 = vmatpush1.msra.mxu0 0.0
      %740 = vmatprep.subr.mxu0 0.0
      %741 = vmatpush1.msra.mxu0 0.0
      %742 = vmatprep.subr.mxu0 0.0
      %743 = vmatpush1.msra.mxu0 0.0
      %744 = vmatprep.subr.mxu0 0.0
      %745 = vmatpush1.msra.mxu0 0.0
      %746 = vmatprep.subr.mxu0 0.0
      %747 = vmatpush1.msra.mxu0 0.0
      %748 = vmatprep.subr.mxu0 0.0
      %749 = vmatpush1.msra.mxu0 0.0
      %750 = vmatprep.subr.mxu0 0.0
      %751 = vmatpush1.msra.mxu0 %v715
      %752 = vmatprep.subr.mxu0 0.0
      %753 = vmatpush2.msra.mxu0 0.0
      %754 = vmatprep.subr.mxu0 0.0
      %755 = vmatpush2.msra.mxu0 0.0
      %756 = vmatprep.subr.mxu0 0.0
      %757 = vmatpush2.msra.mxu0 0.0
      %758 = vmatprep.subr.mxu0 0.0
      %759 = vmatpush2.msra.mxu0 0.0
      %760 = vmatprep.subr.mxu0 0.0
      %761 = vmatpush2.msra.mxu0 0.0
      %762 = vmatprep.subr.mxu0 0.0
      %763 = vmatpush2.msra.mxu0 0.0
      %764 = vmatprep.subr.mxu0 0.0
      %765 = vmatpush2.msra.mxu0 0.0
      %766 = vmatprep.subr.mxu0 0.0
      %767 = vmatpush2.msra.mxu0 0.0
      %768 = vmatprep.subr.mxu0 0.0
      %769 = vmatpush2.msra.mxu0 0.0
      %770 = vmatprep.subr.mxu0 0.0
      %771 = vmatpush2.msra.mxu0 0.0
      %772 = vmatprep.subr.mxu0 0.0
      %773 = vmatpush2.msra.mxu0 0.0
      %774 = vmatprep.subr.mxu0 0.0
      %775 = vmatpush2.msra.mxu0 0.0
      %776 = vmatprep.subr.mxu0 0.0
      %777 = vmatpush2.msra.mxu0 0.0
      %778 = vmatprep.subr.mxu0 0.0
      %779 = vmatpush2.msra.mxu0 0.0
      %780 = vmatprep.subr.mxu0 0.0
      %781 = vmatpush2.msra.mxu0 0.0
      %782 = vmatprep.subr.mxu0 0.0
      %783 = vmatpush2.msra.mxu0 0.0
      %784 = vmatprep.mubr.f32.mxu0 0.0
      %785 = vmatmul.mubr.f32.gmra.mxu0 %v718
      %v786 = vpop.f32.mrf.mxu0
      %v787 = vadd.f32 0.0, %v786
      %v788 = vpop.f32.mrf.mxu0
      %789 = vdwg.mxu0
      %791 = vrot.lane.b32.xlu0 %v787, 24
      %v792 = vpop.permute.xlu0 %791
      %vm794 = vcmask 261312
      %795 = vst.msk [vmem:[%s111] sm:$0xff] %vm794, %v792
      %p796 = scmp.lt.s32.totalorder %s12, 1
      %s797 = scalar_select %p796, %s12, 1
      %s798 = smul.addr %s797, 8
      %s799 = scalar_lea.vmem %s1, %s798
      // Predicated region
      $region25: #{bert_forward.13} parent=23 // pred_check
        %p800 = pneg %p56
      $region26: #{bert_forward.13} parent=23 // pred_check_branch
        %802 = sbr.rel (%p800) target = $region28
      $region27: #{bert_forward.13} parent=23 // pred_region
        _
      $region28: #{bert_forward.13} parent=23 // pred_fallthru
        _
    $region24: #{bert_forward.13} parent=5 // pred_fallthru
      _
    %p803 = scmp.le.s32.totalorder 2, %s7
    // Predicated region
    $region29: #{bert_forward.13} parent=5 // pred_check
      %p804 = pneg %p803
    $region30: #{bert_forward.13} parent=5 // pred_check_branch
      %806 = sbr.rel (%p804) target = $region32
    $region31: #{bert_forward.13} parent=5 // pred_region
      %s807 = ssub.s32 %s7, 2
      // Predicated region
      $region33: #{bert_forward.13} parent=31 // pred_check
        %p808 = pneg %p62
      $region34: #{bert_forward.13} parent=31 // pred_check_branch
        %810 = sbr.rel (%p808) target = $region36
      $region35: #{bert_forward.13} parent=31 // pred_region
        %p811 = scmp.lt.s32.totalorder %s13, 1
        %s812 = scalar_select %p811, %s13, 1
        %s813 = smul.addr %s812, 8
        %s814 = scalar_lea.vmem %s1, %s813
      $region36: #{bert_forward.13} parent=31 // pred_fallthru
        _
    $region32: #{bert_forward.13} parent=5 // pred_fallthru
      _
  $region6: #{bert_forward.13} parent=0 // loop_footer
    %s11 = sadd.s32 1, %s7
  $region7: #{bert_forward.13} parent=0 // loop_footer_branch
    %6 = sbr.rel target = $region3
  $region8: #{bert_forward.13} parent=0 // loop_exit
    _

// kernel: bert_forward.23
$region0: #{bert_forward.23}
  #allocation0 [shape = 'u32[]', space=smem, size = 0x4, offset = 0x4, fixed_abs, tag = 'smem constant byte address 0x4 - core index']
  #allocation1 [shape = 'u32[144,128]{1,0:T(1,128)}', space=vmem, size = 0x12000, scoped, tag = 'internal scratch']
  #allocation2 [shape = 'f32[16,64]{1,0:T(8,128)}', space=vmem, size = 0x2000, scoped, tag = 'scratch operand']
  %s0 = inlined_call_operand.vmem [shape: f32[16,32], index: 0, kind: input, shape index: {}]
  %s1 = inlined_call_operand.vmem [shape: f32[32,64], index: 1, kind: input, shape index: {}]
  %s2 = inlined_call_operand.vmem [shape: f32[1,64], index: 2, kind: input, shape index: {}]
  %s3 = inlined_call_operand.hbm [shape: f32[16,64], index: 3, kind: output, shape index: {}]
  %s4 = sld [smem:[#allocation0]]
  $region30: #{bert_forward.23} parent=0
    _
  %s6 = ssub.s32 1, %s4
  %s7 = scalar_select 0, %s6, %s4
  $region1: #{bert_forward.23} parent=0
    #allocation3 [shape = 'u8[8192]{0}', space=vmem, size = 0x2000, scoped, tag = 'output window, operand 0, single buffered']
    #allocation4 [shape = 's32[1]{0}', space=sflag, size = 0x4, scoped, tag = 'scoped memory for bert_forward.23']
    %8 = vsyncpa [#allocation4], 0
    // Predicated region
    $region2: #{bert_forward.23} parent=1 // pred_check
      _
    $region3: #{bert_forward.23} parent=1 // pred_check_branch
      %10 = sbr.rel (0) target = $region5
    $region4: #{bert_forward.23} parent=1 // pred_region
      _
    $region5: #{bert_forward.23} parent=1 // pred_fallthru
      _
    // Predicated region
    $region6: #{bert_forward.23} parent=1 // pred_check
      _
    $region7: #{bert_forward.23} parent=1 // pred_check_branch
      %12 = sbr.rel (0) target = $region9
    $region8: #{bert_forward.23} parent=1 // pred_region
      _
    $region9: #{bert_forward.23} parent=1 // pred_fallthru
      _
    // Predicated region
    $region10: #{bert_forward.23} parent=1 // pred_check
      _
    $region11: #{bert_forward.23} parent=1 // pred_check_branch
      %14 = sbr.rel (0) target = $region13
    $region12: #{bert_forward.23} parent=1 // pred_region
      _
    $region13: #{bert_forward.23} parent=1 // pred_fallthru
      _
    %p15 = scmp.eq.s32.totalorder 0, 0
    // Predicated region
    $region14: #{bert_forward.23} parent=1 // pred_check
      %p16 = pneg %p15
    $region15: #{bert_forward.23} parent=1 // pred_check_branch
      %18 = sbr.rel (%p16) target = $region17
    $region16: #{bert_forward.23} parent=1 // pred_region
      %vm19 = vcmask 523264
      %20 = vst.msk [vmem:[#allocation2] sm:$0xff] %vm19, 0.0
      %21 = vst.msk [vmem:[#allocation2 + $0x8] sm:$0xff] %vm19, 0.0
    $region17: #{bert_forward.23} parent=1 // pred_fallthru
      _
    %v22 = vld [vmem:[#allocation2] sm:$0xff]
    %v23 = vld [vmem:[#allocation2 + $0x8] sm:$0xff]
    %v24 = vld [vmem:[%s0] sm:$0xff]
    %v25 = vld [vmem:[%s0 + $0x8] sm:$0xff]
    %v26 = vld [vmem:[%s1] sm:$0xff]
    %v27 = vld [vmem:[%s1 + $0x8] sm:$0xff]
    %v28 = vld [vmem:[%s1 + $0x10] sm:$0xff]
    %v29 = vld [vmem:[%s1 + $0x18] sm:$0xff]
    %vm30 = vcmask 261120
    %v32 = vsel %vm30, %v24, 0
    %v35 = vsel %vm30, %v25, 0
    %37 = vmatprep.subr.mxu0 0.0
    %38 = vmatpush1.msra.mxu0 0.0
    %39 = vmatprep.subr.mxu0 0.0
    %40 = vmatpush1.msra.mxu0 0.0
    %41 = vmatprep.subr.mxu0 0.0
    %42 = vmatpush1.msra.mxu0 0.0
    %43 = vmatprep.subr.mxu0 0.0
    %44 = vmatpush1.msra.mxu0 0.0
    %45 = vmatprep.subr.mxu0 0.0
    %46 = vmatpush1.msra.mxu0 0.0
    %47 = vmatprep.subr.mxu0 0.0
    %48 = vmatpush1.msra.mxu0 0.0
    %49 = vmatprep.subr.mxu0 0.0
    %50 = vmatpush1.msra.mxu0 0.0
    %51 = vmatprep.subr.mxu0 0.0
    %52 = vmatpush1.msra.mxu0 0.0
    %53 = vmatprep.subr.mxu0 0.0
    %54 = vmatpush1.msra.mxu0 0.0
    %55 = vmatprep.subr.mxu0 0.0
    %56 = vmatpush1.msra.mxu0 0.0
    %57 = vmatprep.subr.mxu0 0.0
    %58 = vmatpush1.msra.mxu0 0.0
    %59 = vmatprep.subr.mxu0 0.0
    %60 = vmatpush1.msra.mxu0 0.0
    %61 = vmatprep.subr.mxu0 0.0
    %62 = vmatpush1.msra.mxu0 %v29
    %63 = vmatprep.subr.mxu0 0.0
    %64 = vmatpush1.msra.mxu0 %v28
    %65 = vmatprep.subr.mxu0 0.0
    %66 = vmatpush1.msra.mxu0 %v27
    %67 = vmatprep.subr.mxu0 0.0
    %68 = vmatpush1.msra.mxu0 %v26
    %69 = vmatprep.subr.mxu0 0.0
    %70 = vmatpush2.msra.mxu0 0.0
    %71 = vmatprep.subr.mxu0 0.0
    %72 = vmatpush2.msra.mxu0 0.0
    %73 = vmatprep.subr.mxu0 0.0
    %74 = vmatpush2.msra.mxu0 0.0
    %75 = vmatprep.subr.mxu0 0.0
    %76 = vmatpush2.msra.mxu0 0.0
    %77 = vmatprep.subr.mxu0 0.0
    %78 = vmatpush2.msra.mxu0 0.0
    %79 = vmatprep.subr.mxu0 0.0
    %80 = vmatpush2.msra.mxu0 0.0
    %81 = vmatprep.subr.mxu0 0.0
    %82 = vmatpush2.msra.mxu0 0.0
    %83 = vmatprep.subr.mxu0 0.0
    %84 = vmatpush2.msra.mxu0 0.0
    %85 = vmatprep.subr.mxu0 0.0
    %86 = vmatpush2.msra.mxu0 0.0
    %87 = vmatprep.subr.mxu0 0.0
    %88 = vmatpush2.msra.mxu0 0.0
    %89 = vmatprep.subr.mxu0 0.0
    %90 = vmatpush2.msra.mxu0 0.0
    %91 = vmatprep.subr.mxu0 0.0
    %92 = vmatpush2.msra.mxu0 0.0
    %93 = vmatprep.subr.mxu0 0.0
    %94 = vmatpush2.msra.mxu0 0.0
    %95 = vmatprep.subr.mxu0 0.0
    %96 = vmatpush2.msra.mxu0 0.0
    %97 = vmatprep.subr.mxu0 0.0
    %98 = vmatpush2.msra.mxu0 0.0
    %99 = vmatprep.subr.mxu0 0.0
    %100 = vmatpush2.msra.mxu0 0.0
    %101 = vmatprep.mubr.f32.mxu0 0.0
    %102 = vmatmul.mubr.f32.gmra.mxu0 %v32
    %v103 = vpop.f32.mrf.mxu0
    %v104 = vadd.f32 0.0, %v103
    %v105 = vpop.f32.mrf.mxu0
    %106 = vmatprep.mubr.f32.mxu0 0.0
    %107 = vmatmul.mubr.f32.gmra.mxu0 %v35
    %v108 = vpop.f32.mrf.mxu0
    %v109 = vadd.f32 0.0, %v108
    %v110 = vpop.f32.mrf.mxu0
    %111 = vdwg.mxu0
    %v112 = vadd.f32 %v22, %v104
    %v113 = vadd.f32 %v23, %v109
    %vm114 = vcmask 523264
    %115 = vst.msk [vmem:[#allocation2] sm:$0xff] %vm114, %v112
    %116 = vst.msk [vmem:[#allocation2 + $0x8] sm:$0xff] %vm114, %v113
    // Predicated region
    $region18: #{bert_forward.23} parent=1 // pred_check
      %p117 = pneg %p15
    $region19: #{bert_forward.23} parent=1 // pred_check_branch
      %119 = sbr.rel (%p117) target = $region21
    $region20: #{bert_forward.23} parent=1 // pred_region
      %v120 = vld [vmem:[#allocation2] sm:$0xff]
      %v121 = vld [vmem:[#allocation2 + $0x8] sm:$0xff]
      %v122 = vld [vmem:[%s2] sm:$0x1]
      %v124 = vlaneseq
      %v125 = vshrl.u32 %v124, 7
      %v126 = vsub.s32 0, %v125
      %v127 = vrot.slane %v122, %v126
      %v129 = vadd.f32 %v120, %v127
      %v130 = vadd.f32 %v121, %v127
      %131 = vst.msk [vmem:[#allocation3] sm:$0xff] %vm114, %v129
      %132 = vst.msk [vmem:[#allocation3 + $0x8] sm:$0xff] %vm114, %v130
    $region21: #{bert_forward.23} parent=1 // pred_fallthru
      _
    // Predicated region
    $region22: #{bert_forward.23} parent=1 // pred_check
      _
    $region23: #{bert_forward.23} parent=1 // pred_check_branch
      %134 = sbr.rel (0) target = $region25
    $region24: #{bert_forward.23} parent=1 // pred_region
      %s136 = ssub.s32 256, 256
      %137 = vsyncadd [#allocation4], %s136
      %s138 = sshll.u32 [#allocation3], 4
      %s139 = int_to_ptr.vmem [resolvable:$true] %s138
      %144 = dma.vmem_to_hbm [thread:$0]  %s139, 256, %s3, [#allocation4], 128, 128, 8
    $region25: #{bert_forward.23} parent=1 // pred_fallthru
      _
    // Predicated region
    $region26: #{bert_forward.23} parent=1 // pred_check
      _
    $region27: #{bert_forward.23} parent=1 // pred_check_branch
      %146 = sbr.rel (0) target = $region29
    $region28: #{bert_forward.23} parent=1 // pred_region
      %147 = dma.done [#allocation4], 256
    $region29: #{bert_forward.23} parent=1 // pred_fallthru
      _
    %148 = vsyncpa [#allocation4], 1

// kernel: bert_forward.16
$region0: #{bert_forward.16}
  #allocation0 [shape = 'u32[]', space=smem, size = 0x4, offset = 0x4, fixed_abs, tag = 'smem constant byte address 0x4 - core index']
  #allocation1 [shape = 'u32[144,128]{1,0:T(1,128)}', space=vmem, size = 0x12000, scoped, tag = 'internal scratch']
  #allocation2 [shape = 'f32[16,32]{1,0:T(8,128)}', space=vmem, size = 0x2000, scoped, tag = 'scratch operand']
  %s0 = inlined_call_operand.vmem [shape: f32[16,64], index: 0, kind: input, shape index: {}]
  %s1 = inlined_call_operand.vmem [shape: f32[64,32], index: 1, kind: input, shape index: {}]
  %s2 = inlined_call_operand.vmem [shape: f32[1,32], index: 2, kind: input, shape index: {}]
  %s3 = inlined_call_operand.vmem [shape: f32[16,32], index: 3, kind: input, shape index: {}]
  %s4 = inlined_call_operand.vmem [shape: f32[1,32], index: 4, kind: input, shape index: {}]
  %s5 = inlined_call_operand.vmem [shape: f32[1,32], index: 5, kind: input, shape index: {}]
  %s6 = inlined_call_operand.vmem [shape: f32[16,32], index: 6, kind: output, shape index: {}]
  %s7 = sld [smem:[#allocation0]]
  $region42: #{bert_forward.16} parent=0
    _
  %s9 = ssub.s32 1, %s7
  %s10 = scalar_select 0, %s9, %s7
  // Predicated region
  $region2: #{bert_forward.16} parent=0 // pred_check
    _
  $region3: #{bert_forward.16} parent=0 // pred_check_branch
    %12 = sbr.rel (0) target = $region5
  $region4: #{bert_forward.16} parent=0 // pred_region
    _
  $region5: #{bert_forward.16} parent=0 // pred_fallthru
    _
  // Predicated region
  $region6: #{bert_forward.16} parent=0 // pred_check
    _
  $region7: #{bert_forward.16} parent=0 // pred_check_branch
    %14 = sbr.rel (0) target = $region9
  $region8: #{bert_forward.16} parent=0 // pred_region
    _
  $region9: #{bert_forward.16} parent=0 // pred_fallthru
    _
  // Predicated region
  $region10: #{bert_forward.16} parent=0 // pred_check
    _
  $region11: #{bert_forward.16} parent=0 // pred_check_branch
    %16 = sbr.rel (0) target = $region13
  $region12: #{bert_forward.16} parent=0 // pred_region
    _
  $region13: #{bert_forward.16} parent=0 // pred_fallthru
    _
  // Predicated region
  $region14: #{bert_forward.16} parent=0 // pred_check
    _
  $region15: #{bert_forward.16} parent=0 // pred_check_branch
    %18 = sbr.rel (0) target = $region17
  $region16: #{bert_forward.16} parent=0 // pred_region
    _
  $region17: #{bert_forward.16} parent=0 // pred_fallthru
    _
  // Predicated region
  $region18: #{bert_forward.16} parent=0 // pred_check
    _
  $region19: #{bert_forward.16} parent=0 // pred_check_branch
    %20 = sbr.rel (0) target = $region21
  $region20: #{bert_forward.16} parent=0 // pred_region
    _
  $region21: #{bert_forward.16} parent=0 // pred_fallthru
    _
  // Predicated region
  $region22: #{bert_forward.16} parent=0 // pred_check
    _
  $region23: #{bert_forward.16} parent=0 // pred_check_branch
    %22 = sbr.rel (0) target = $region25
  $region24: #{bert_forward.16} parent=0 // pred_region
    _
  $region25: #{bert_forward.16} parent=0 // pred_fallthru
    _
  %p23 = scmp.eq.s32.totalorder 0, 0
  // Predicated region
  $region26: #{bert_forward.16} parent=0 // pred_check
    %p24 = pneg %p23
  $region27: #{bert_forward.16} parent=0 // pred_check_branch
    %26 = sbr.rel (%p24) target = $region29
  $region28: #{bert_forward.16} parent=0 // pred_region
    %vm27 = vcmask 261120
    %28 = vst.msk [vmem:[#allocation2] sm:$0xff] %vm27, 0.0
    %29 = vst.msk [vmem:[#allocation2 + $0x8] sm:$0xff] %vm27, 0.0
  $region29: #{bert_forward.16} parent=0 // pred_fallthru
    _
  %v30 = vld [vmem:[#allocation2] sm:$0xff]
  %v31 = vld [vmem:[#allocation2 + $0x8] sm:$0xff]
  %v32 = vld [vmem:[%s0] sm:$0xff]
  %v33 = vld [vmem:[%s0 + $0x8] sm:$0xff]
  %v34 = vld [vmem:[%s1] sm:$0xff]
  %v35 = vld [vmem:[%s1 + $0x8] sm:$0xff]
  %v36 = vld [vmem:[%s1 + $0x10] sm:$0xff]
  %v37 = vld [vmem:[%s1 + $0x18] sm:$0xff]
  %v38 = vld [vmem:[%s1 + $0x20] sm:$0xff]
  %v39 = vld [vmem:[%s1 + $0x28] sm:$0xff]
  %v40 = vld [vmem:[%s1 + $0x30] sm:$0xff]
  %v41 = vld [vmem:[%s1 + $0x38] sm:$0xff]
  %vm42 = vcmask 523264
  %v44 = vsel %vm42, %v32, 0
  %v47 = vsel %vm42, %v33, 0
  %49 = vmatprep.subr.mxu0 0.0
  %50 = vmatpush1.msra.mxu0 0.0
  %51 = vmatprep.subr.mxu0 0.0
  %52 = vmatpush1.msra.mxu0 0.0
  %53 = vmatprep.subr.mxu0 0.0
  %54 = vmatpush1.msra.mxu0 0.0
  %55 = vmatprep.subr.mxu0 0.0
  %56 = vmatpush1.msra.mxu0 0.0
  %57 = vmatprep.subr.mxu0 0.0
  %58 = vmatpush1.msra.mxu0 0.0
  %59 = vmatprep.subr.mxu0 0.0
  %60 = vmatpush1.msra.mxu0 0.0
  %61 = vmatprep.subr.mxu0 0.0
  %62 = vmatpush1.msra.mxu0 0.0
  %63 = vmatprep.subr.mxu0 0.0
  %64 = vmatpush1.msra.mxu0 0.0
  %65 = vmatprep.subr.mxu0 0.0
  %66 = vmatpush1.msra.mxu0 %v41
  %67 = vmatprep.subr.mxu0 0.0
  %68 = vmatpush1.msra.mxu0 %v40
  %69 = vmatprep.subr.mxu0 0.0
  %70 = vmatpush1.msra.mxu0 %v39
  %71 = vmatprep.subr.mxu0 0.0
  %72 = vmatpush1.msra.mxu0 %v38
  %73 = vmatprep.subr.mxu0 0.0
  %74 = vmatpush1.msra.mxu0 %v37
  %75 = vmatprep.subr.mxu0 0.0
  %76 = vmatpush1.msra.mxu0 %v36
  %77 = vmatprep.subr.mxu0 0.0
  %78 = vmatpush1.msra.mxu0 %v35
  %79 = vmatprep.subr.mxu0 0.0
  %80 = vmatpush1.msra.mxu0 %v34
  %81 = vmatprep.subr.mxu0 0.0
  %82 = vmatpush2.msra.mxu0 0.0
  %83 = vmatprep.subr.mxu0 0.0
  %84 = vmatpush2.msra.mxu0 0.0
  %85 = vmatprep.subr.mxu0 0.0
  %86 = vmatpush2.msra.mxu0 0.0
  %87 = vmatprep.subr.mxu0 0.0
  %88 = vmatpush2.msra.mxu0 0.0
  %89 = vmatprep.subr.mxu0 0.0
  %90 = vmatpush2.msra.mxu0 0.0
  %91 = vmatprep.subr.mxu0 0.0
  %92 = vmatpush2.msra.mxu0 0.0
  %93 = vmatprep.subr.mxu0 0.0
  %94 = vmatpush2.msra.mxu0 0.0
  %95 = vmatprep.subr.mxu0 0.0
  %96 = vmatpush2.msra.mxu0 0.0
  %97 = vmatprep.subr.mxu0 0.0
  %98 = vmatpush2.msra.mxu0 0.0
  %99 = vmatprep.subr.mxu0 0.0
  %100 = vmatpush2.msra.mxu0 0.0
  %101 = vmatprep.subr.mxu0 0.0
  %102 = vmatpush2.msra.mxu0 0.0
  %103 = vmatprep.subr.mxu0 0.0
  %104 = vmatpush2.msra.mxu0 0.0
  %105 = vmatprep.subr.mxu0 0.0
  %106 = vmatpush2.msra.mxu0 0.0
  %107 = vmatprep.subr.mxu0 0.0
  %108 = vmatpush2.msra.mxu0 0.0
  %109 = vmatprep.subr.mxu0 0.0
  %110 = vmatpush2.msra.mxu0 0.0
  %111 = vmatprep.subr.mxu0 0.0
  %112 = vmatpush2.msra.mxu0 0.0
  %113 = vmatprep.mubr.f32.mxu0 0.0
  %114 = vmatmul.mubr.f32.gmra.mxu0 %v44
  %v115 = vpop.f32.mrf.mxu0
  %v116 = vadd.f32 0.0, %v115
  %v117 = vpop.f32.mrf.mxu0
  %118 = vmatprep.mubr.f32.mxu0 0.0
  %119 = vmatmul.mubr.f32.gmra.mxu0 %v47
  %v120 = vpop.f32.mrf.mxu0
  %v121 = vadd.f32 0.0, %v120
  %v122 = vpop.f32.mrf.mxu0
  %123 = vdwg.mxu0
  %v124 = vadd.f32 %v30, %v116
  %v125 = vadd.f32 %v31, %v121
  %vm126 = vcmask 261120
  %127 = vst.msk [vmem:[#allocation2] sm:$0xff] %vm126, %v124
  %128 = vst.msk [vmem:[#allocation2 + $0x8] sm:$0xff] %vm126, %v125
  // Predicated region
  $region30: #{bert_forward.16} parent=0 // pred_check
    %p129 = pneg %p23
  $region31: #{bert_forward.16} parent=0 // pred_check_branch
    %131 = sbr.rel (%p129) target = $region33
  $region32: #{bert_forward.16} parent=0 // pred_region
    %v132 = vld [vmem:[#allocation2] sm:$0xff]
    %v133 = vld [vmem:[#allocation2 + $0x8] sm:$0xff]
    %v134 = vld [vmem:[%s2] sm:$0x1]
    %v136 = vlaneseq
    %v137 = vshrl.u32 %v136, 7
    %v138 = vsub.s32 0, %v137
    %v139 = vrot.slane %v134, %v138
    %v141 = vadd.f32 %v132, %v139
    %v142 = vadd.f32 %v133, %v139
    %v143 = vld [vmem:[%s3] sm:$0xff]
    %v144 = vld [vmem:[%s3 + $0x8] sm:$0xff]
    %v145 = vadd.f32 %v141, %v143
    %v146 = vadd.f32 %v142, %v144
    %v147 = vsel %vm126, %v145, 0.0
    %148 = vadd.xlane.f32.xlu0 %v147
    %v149 = vpop.xlane.xlu0 %148
    %v150 = vsel %vm126, %v146, 0.0
    %151 = vadd.xlane.f32.xlu0 %v150
    %v152 = vpop.xlane.xlu0 %151
    %v153 = vrcp.pop 32.0
    %v154 = vmul.f32 %v149, %v153
    %v155 = vmul.f32 %v152, %v153
    %v156 = vsub.f32 %v145, %v154
    %v157 = vsub.f32 %v146, %v155
    %v158 = vmul.f32 %v156, %v156
    %v159 = vmul.f32 %v157, %v157
    %v160 = vsel %vm126, %v158, 0.0
    %161 = vadd.xlane.f32.xlu0 %v160
    %v162 = vpop.xlane.xlu0 %161
    %v163 = vsel %vm126, %v159, 0.0
    %164 = vadd.xlane.f32.xlu0 %v163
    %v165 = vpop.xlane.xlu0 %164
    %v166 = vmul.f32 %v162, %v153
    %v167 = vmul.f32 %v165, %v153
    %v168 = vadd.f32 %v166, 1e-05
    %v169 = vadd.f32 %v167, 1e-05
    %v170 = vrsqrt.pop %v168
    %v171 = vrsqrt.pop %v169
    %v172 = vmul.f32 %v156, %v170
    %v173 = vmul.f32 %v157, %v171
    %v174 = vld [vmem:[%s4] sm:$0x1]
    %v176 = vlaneseq
    %v177 = vshrl.u32 %v176, 7
    %v178 = vsub.s32 0, %v177
    %v179 = vrot.slane %v174, %v178
    %v181 = vmul.f32 %v172, %v179
    %v182 = vmul.f32 %v173, %v179
    %v183 = vld [vmem:[%s5] sm:$0x1]
    %v185 = vlaneseq
    %v186 = vshrl.u32 %v185, 7
    %v187 = vsub.s32 0, %v186
    %v188 = vrot.slane %v183, %v187
    %v190 = vadd.f32 %v181, %v188
    %v191 = vadd.f32 %v182, %v188
    %192 = vst.msk [vmem:[%s6] sm:$0xff] %vm126, %v190
    %193 = vst.msk [vmem:[%s6 + $0x8] sm:$0xff] %vm126, %v191
  $region33: #{bert_forward.16} parent=0 // pred_fallthru
    _
  // Predicated region
  $region34: #{bert_forward.16} parent=0 // pred_check
    _
  $region35: #{bert_forward.16} parent=0 // pred_check_branch
    %195 = sbr.rel (0) target = $region37
  $region36: #{bert_forward.16} parent=0 // pred_region
    _
  $region37: #{bert_forward.16} parent=0 // pred_fallthru
    _
  // Predicated region
  $region38: #{bert_forward.16} parent=0 // pred_check
    _
  $region39: #{bert_forward.16} parent=0 // pred_check_branch
    %197 = sbr.rel (0) target = $region41
  $region40: #{bert_forward.16} parent=0 // pred_region
    _
  $region41: #{bert_forward.16} parent=0 // pred_fallthru
    _

// kernel: bert_forward.22
$region0: #{bert_forward.22}
  #allocation0 [shape = 'u32[]', space=smem, size = 0x4, offset = 0x4, fixed_abs, tag = 'smem constant byte address 0x4 - core index']
  #allocation1 [shape = 'u32[144,128]{1,0:T(1,128)}', space=vmem, size = 0x12000, scoped, tag = 'internal scratch']
  #allocation2 [shape = 'f32[16,32]{1,0:T(8,128)}', space=vmem, size = 0x2000, scoped, tag = 'scratch operand']
  %s0 = inlined_call_operand.vmem [shape: f32[16,32], index: 0, kind: input, shape index: {}]
  %s1 = inlined_call_operand.vmem [shape: f32[32,32], index: 1, kind: input, shape index: {}]
  %s2 = inlined_call_operand.vmem [shape: f32[1,32], index: 2, kind: input, shape index: {}]
  %s3 = inlined_call_operand.vmem [shape: f32[1,32], index: 3, kind: input, shape index: {}]
  %s4 = inlined_call_operand.vmem [shape: f32[1,32], index: 4, kind: input, shape index: {}]
  %s5 = inlined_call_operand.vmem [shape: f32[16,32], index: 5, kind: output, shape index: {}]
  %s6 = sld [smem:[#allocation0]]
  $region38: #{bert_forward.22} parent=0
    _
  %s8 = ssub.s32 1, %s6
  %s9 = scalar_select 0, %s8, %s6
  // Predicated region
  $region2: #{bert_forward.22} parent=0 // pred_check
    _
  $region3: #{bert_forward.22} parent=0 // pred_check_branch
    %11 = sbr.rel (0) target = $region5
  $region4: #{bert_forward.22} parent=0 // pred_region
    _
  $region5: #{bert_forward.22} parent=0 // pred_fallthru
    _
  // Predicated region
  $region6: #{bert_forward.22} parent=0 // pred_check
    _
  $region7: #{bert_forward.22} parent=0 // pred_check_branch
    %13 = sbr.rel (0) target = $region9
  $region8: #{bert_forward.22} parent=0 // pred_region
    _
  $region9: #{bert_forward.22} parent=0 // pred_fallthru
    _
  // Predicated region
  $region10: #{bert_forward.22} parent=0 // pred_check
    _
  $region11: #{bert_forward.22} parent=0 // pred_check_branch
    %15 = sbr.rel (0) target = $region13
  $region12: #{bert_forward.22} parent=0 // pred_region
    _
  $region13: #{bert_forward.22} parent=0 // pred_fallthru
    _
  // Predicated region
  $region14: #{bert_forward.22} parent=0 // pred_check
    _
  $region15: #{bert_forward.22} parent=0 // pred_check_branch
    %17 = sbr.rel (0) target = $region17
  $region16: #{bert_forward.22} parent=0 // pred_region
    _
  $region17: #{bert_forward.22} parent=0 // pred_fallthru
    _
  // Predicated region
  $region18: #{bert_forward.22} parent=0 // pred_check
    _
  $region19: #{bert_forward.22} parent=0 // pred_check_branch
    %19 = sbr.rel (0) target = $region21
  $region20: #{bert_forward.22} parent=0 // pred_region
    _
  $region21: #{bert_forward.22} parent=0 // pred_fallthru
    _
  %p20 = scmp.eq.s32.totalorder 0, 0
  // Predicated region
  $region22: #{bert_forward.22} parent=0 // pred_check
    %p21 = pneg %p20
  $region23: #{bert_forward.22} parent=0 // pred_check_branch
    %23 = sbr.rel (%p21) target = $region25
  $region24: #{bert_forward.22} parent=0 // pred_region
    %vm24 = vcmask 261120
    %25 = vst.msk [vmem:[#allocation2] sm:$0xff] %vm24, 0.0
    %26 = vst.msk [vmem:[#allocation2 + $0x8] sm:$0xff] %vm24, 0.0
  $region25: #{bert_forward.22} parent=0 // pred_fallthru
    _
  %v27 = vld [vmem:[#allocation2] sm:$0xff]
  %v28 = vld [vmem:[#allocation2 + $0x8] sm:$0xff]
  %v29 = vld [vmem:[%s0] sm:$0xff]
  %v30 = vld [vmem:[%s0 + $0x8] sm:$0xff]
  %v31 = vld [vmem:[%s1] sm:$0xff]
  %v32 = vld [vmem:[%s1 + $0x8] sm:$0xff]
  %v33 = vld [vmem:[%s1 + $0x10] sm:$0xff]
  %v34 = vld [vmem:[%s1 + $0x18] sm:$0xff]
  %vm35 = vcmask 261120
  %v37 = vsel %vm35, %v29, 0
  %v40 = vsel %vm35, %v30, 0
  %42 = vmatprep.subr.mxu0 0.0
  %43 = vmatpush1.msra.mxu0 0.0
  %44 = vmatprep.subr.mxu0 0.0
  %45 = vmatpush1.msra.mxu0 0.0
  %46 = vmatprep.subr.mxu0 0.0
  %47 = vmatpush1.msra.mxu0 0.0
  %48 = vmatprep.subr.mxu0 0.0
  %49 = vmatpush1.msra.mxu0 0.0
  %50 = vmatprep.subr.mxu0 0.0
  %51 = vmatpush1.msra.mxu0 0.0
  %52 = vmatprep.subr.mxu0 0.0
  %53 = vmatpush1.msra.mxu0 0.0
  %54 = vmatprep.subr.mxu0 0.0
  %55 = vmatpush1.msra.mxu0 0.0
  %56 = vmatprep.subr.mxu0 0.0
  %57 = vmatpush1.msra.mxu0 0.0
  %58 = vmatprep.subr.mxu0 0.0
  %59 = vmatpush1.msra.mxu0 0.0
  %60 = vmatprep.subr.mxu0 0.0
  %61 = vmatpush1.msra.mxu0 0.0
  %62 = vmatprep.subr.mxu0 0.0
  %63 = vmatpush1.msra.mxu0 0.0
  %64 = vmatprep.subr.mxu0 0.0
  %65 = vmatpush1.msra.mxu0 0.0
  %66 = vmatprep.subr.mxu0 0.0
  %67 = vmatpush1.msra.mxu0 %v34
  %68 = vmatprep.subr.mxu0 0.0
  %69 = vmatpush1.msra.mxu0 %v33
  %70 = vmatprep.subr.mxu0 0.0
  %71 = vmatpush1.msra.mxu0 %v32
  %72 = vmatprep.subr.mxu0 0.0
  %73 = vmatpush1.msra.mxu0 %v31
  %74 = vmatprep.subr.mxu0 0.0
  %75 = vmatpush2.msra.mxu0 0.0
  %76 = vmatprep.subr.mxu0 0.0
  %77 = vmatpush2.msra.mxu0 0.0
  %78 = vmatprep.subr.mxu0 0.0
  %79 = vmatpush2.msra.mxu0 0.0
  %80 = vmatprep.subr.mxu0 0.0
  %81 = vmatpush2.msra.mxu0 0.0
  %82 = vmatprep.subr.mxu0 0.0
  %83 = vmatpush2.msra.mxu0 0.0
  %84 = vmatprep.subr.mxu0 0.0
  %85 = vmatpush2.msra.mxu0 0.0
  %86 = vmatprep.subr.mxu0 0.0
  %87 = vmatpush2.msra.mxu0 0.0
  %88 = vmatprep.subr.mxu0 0.0
  %89 = vmatpush2.msra.mxu0 0.0
  %90 = vmatprep.subr.mxu0 0.0
  %91 = vmatpush2.msra.mxu0 0.0
  %92 = vmatprep.subr.mxu0 0.0
  %93 = vmatpush2.msra.mxu0 0.0
  %94 = vmatprep.subr.mxu0 0.0
  %95 = vmatpush2.msra.mxu0 0.0
  %96 = vmatprep.subr.mxu0 0.0
  %97 = vmatpush2.msra.mxu0 0.0
  %98 = vmatprep.subr.mxu0 0.0
  %99 = vmatpush2.msra.mxu0 0.0
  %100 = vmatprep.subr.mxu0 0.0
  %101 = vmatpush2.msra.mxu0 0.0
  %102 = vmatprep.subr.mxu0 0.0
  %103 = vmatpush2.msra.mxu0 0.0
  %104 = vmatprep.subr.mxu0 0.0
  %105 = vmatpush2.msra.mxu0 0.0
  %106 = vmatprep.mubr.f32.mxu0 0.0
  %107 = vmatmul.mubr.f32.gmra.mxu0 %v37
  %v108 = vpop.f32.mrf.mxu0
  %v109 = vadd.f32 0.0, %v108
  %v110 = vpop.f32.mrf.mxu0
  %111 = vmatprep.mubr.f32.mxu0 0.0
  %112 = vmatmul.mubr.f32.gmra.mxu0 %v40
  %v113 = vpop.f32.mrf.mxu0
  %v114 = vadd.f32 0.0, %v113
  %v115 = vpop.f32.mrf.mxu0
  %116 = vdwg.mxu0
  %v117 = vadd.f32 %v27, %v109
  %v118 = vadd.f32 %v28, %v114
  %119 = vst.msk [vmem:[#allocation2] sm:$0xff] %vm35, %v117
  %120 = vst.msk [vmem:[#allocation2 + $0x8] sm:$0xff] %vm35, %v118
  // Predicated region
  $region26: #{bert_forward.22} parent=0 // pred_check
    %p121 = pneg %p20
  $region27: #{bert_forward.22} parent=0 // pred_check_branch
    %123 = sbr.rel (%p121) target = $region29
  $region28: #{bert_forward.22} parent=0 // pred_region
    %v124 = vld [vmem:[#allocation2] sm:$0xff]
    %v125 = vld [vmem:[#allocation2 + $0x8] sm:$0xff]
    %v126 = vld [vmem:[%s2] sm:$0x1]
    %v128 = vlaneseq
    %v129 = vshrl.u32 %v128, 7
    %v130 = vsub.s32 0, %v129
    %v131 = vrot.slane %v126, %v130
    %v133 = vadd.f32 %v124, %v131
    %v134 = vadd.f32 %v125, %v131
    %v135 = vmul.f32 %v133, 0.5
    %v136 = vmul.f32 %v134, 0.5
    %v137 = vmul.f32 %v133, 0.70710677
    %v138 = vmul.f32 %v134, 0.70710677
    %vm139 = vcmp.ge.f32.partialorder %v137, 0.0
    %vm140 = vcmp.ge.f32.partialorder %v138, 0.0
    %v141 = vsel %vm139, 1.0, -1.0
    %v142 = vsel %vm140, 1.0, -1.0
    %v143 = vand.u32 2147483647, %v137
    %v144 = vand.u32 2147483647, %v138
    %v145 = vmul.f32 %v143, 0.3275911
    %v146 = vmul.f32 %v144, 0.3275911
    %v147 = vadd.f32 %v145, 1.0
    %v148 = vadd.f32 %v146, 1.0
    %v149 = vrcp.pop %v147
    %v150 = vmul.f32 1.0, %v149
    %v151 = vrcp.pop %v148
    %v152 = vmul.f32 1.0, %v151
    %v153 = vmul.f32 %v150, 1.0614054
    %v154 = vmul.f32 %v152, 1.0614054
    %v155 = vadd.f32 %v153, -1.4531521
    %v156 = vadd.f32 %v154, -1.4531521
    %v157 = vmul.f32 %v155, %v150
    %v158 = vmul.f32 %v156, %v152
    %v159 = vadd.f32 %v157, 1.4214138
    %v160 = vadd.f32 %v158, 1.4214138
    %v161 = vmul.f32 %v159, %v150
    %v162 = vmul.f32 %v160, %v152
    %v163 = vadd.f32 %v161, -0.28449672
    %v164 = vadd.f32 %v162, -0.28449672
    %v165 = vmul.f32 %v163, %v150
    %v166 = vmul.f32 %v164, %v152
    %v167 = vadd.f32 %v165, 0.2548296
    %v168 = vadd.f32 %v166, 0.2548296
    %v169 = vmul.f32 %v167, %v150
    %v170 = vmul.f32 %v168, %v152
    %v171 = vsub.f32 0.0, %v143
    %v172 = vsub.f32 0.0, %v144
    %v173 = vmul.f32 %v171, %v143
    %v174 = vmul.f32 %v172, %v144
    %v175 = vmul.f32 %v173, 1.442695
    %v176 = vpow.pop %v175
    %v177 = vmul.f32 %v174, 1.442695
    %v178 = vpow.pop %v177
    %v179 = vmul.f32 %v169, %v176
    %v180 = vmul.f32 %v170, %v178
    %v181 = vsub.f32 1.0, %v179
    %v182 = vsub.f32 1.0, %v180
    %v183 = vmul.f32 %v141, %v181
    %v184 = vmul.f32 %v142, %v182
    %v185 = vadd.f32 %v183, 1.0
    %v186 = vadd.f32 %v184, 1.0
    %v187 = vmul.f32 %v135, %v185
    %v188 = vmul.f32 %v136, %v186
    %v189 = vsel %vm35, %v187, 0.0
    %190 = vadd.xlane.f32.xlu0 %v189
    %v191 = vpop.xlane.xlu0 %190
    %v192 = vsel %vm35, %v188, 0.0
    %193 = vadd.xlane.f32.xlu0 %v192
    %v194 = vpop.xlane.xlu0 %193
    %v195 = vrcp.pop 32.0
    %v196 = vmul.f32 %v191, %v195
    %v197 = vmul.f32 %v194, %v195
    %v198 = vsub.f32 %v187, %v196
    %v199 = vsub.f32 %v188, %v197
    %v200 = vmul.f32 %v198, %v198
    %v201 = vmul.f32 %v199, %v199
    %v202 = vsel %vm35, %v200, 0.0
    %203 = vadd.xlane.f32.xlu0 %v202
    %v204 = vpop.xlane.xlu0 %203
    %v205 = vsel %vm35, %v201, 0.0
    %206 = vadd.xlane.f32.xlu0 %v205
    %v207 = vpop.xlane.xlu0 %206
    %v208 = vmul.f32 %v204, %v195
    %v209 = vmul.f32 %v207, %v195
    %v210 = vadd.f32 %v208, 1e-05
    %v211 = vadd.f32 %v209, 1e-05
    %v212 = vrsqrt.pop %v210
    %v213 = vrsqrt.pop %v211
    %v214 = vmul.f32 %v198, %v212
    %v215 = vmul.f32 %v199, %v213
    %v216 = vld [vmem:[%s3] sm:$0x1]
    %v218 = vlaneseq
    %v219 = vshrl.u32 %v218, 7
    %v220 = vsub.s32 0, %v219
    %v221 = vrot.slane %v216, %v220
    %v223 = vmul.f32 %v214, %v221
    %v224 = vmul.f32 %v215, %v221
    %v225 = vld [vmem:[%s4] sm:$0x1]
    %v227 = vlaneseq
    %v228 = vshrl.u32 %v227, 7
    %v229 = vsub.s32 0, %v228
    %v230 = vrot.slane %v225, %v229
    %v232 = vadd.f32 %v223, %v230
    %v233 = vadd.f32 %v224, %v230
    %234 = vst.msk [vmem:[%s5] sm:$0xff] %vm35, %v232
    %235 = vst.msk [vmem:[%s5 + $0x8] sm:$0xff] %vm35, %v233
  $region29: #{bert_forward.22} parent=0 // pred_fallthru
    _
  // Predicated region
  $region30: #{bert_forward.22} parent=0 // pred_check
    _
  $region31: #{bert_forward.22} parent=0 // pred_check_branch
    %237 = sbr.rel (0) target = $region33
  $region32: #{bert_forward.22} parent=0 // pred_region
    _
  $region33: #{bert_forward.22} parent=0 // pred_fallthru
    _
  // Predicated region
  $region34: #{bert_forward.22} parent=0 // pred_check
    _
  $region35: #{bert_forward.22} parent=0 // pred_check_branch
    %239 = sbr.rel (0) target = $region37
  $region36: #{bert_forward.22} parent=0 // pred_region
    _
  $region37: #{bert_forward.22} parent=0 // pred_fallthru
    _

</llo_original>
